<compile_context>
chip_gen: v7x
topology: tpu7x:2x2x1
jax: 0.10.0
libtpu: 0.0.40
codegen_flags: <defaults>
</compile_context>

<pallas_src>
import functools
import math

import jax
import jax.numpy as jnp
from jax.experimental import pallas as pl
from jax.experimental.pallas import tpu as pltpu


# ----------------------------------------------------------------------------
# In-kernel helpers
# ----------------------------------------------------------------------------
def _layernorm(x, gamma, beta, eps=1e-5):
    # Single-pass LayerNorm: one sweep computes sum and sum-of-squares.
    # Matches nn.LayerNorm (biased variance, eps=1e-5).
    d = x.shape[-1]
    s1 = jnp.sum(x, axis=-1, keepdims=True)
    s2 = jnp.sum(x * x, axis=-1, keepdims=True)
    mu = s1 * (1.0 / d)
    var = s2 * (1.0 / d) - mu * mu
    return (x - mu) * jax.lax.rsqrt(var + eps) * gamma + beta


def _gelu_exact(x):
    # nn.GELU default (erf-based, exact) to preserve PyTorch semantics.
    return 0.5 * x * (1.0 + jax.lax.erf(x * 0.7071067811865476))


# ----------------------------------------------------------------------------
# Fused ViT kernel: patch-embed + PE (layer 0), encoder blocks, head (last)
# ----------------------------------------------------------------------------
def vit_fused_kernel(
    patches_ref, wmap_ref, bmap_ref, cls_ref, pe_ref,
    ln1g_ref, ln1b_ref, wqkv_ref, bqkv_ref,
    ln2g_ref, ln2b_ref, w1_ref, b1_ref, w2_ref, b2_ref,
    wout_ref, bout_ref,
    out_ref,
    tok_ref,
    *, n_heads, b_tile, seq_t,
):
    layer = pl.program_id(1)
    n_layers = pl.num_programs(1)
    T = seq_t
    H = n_heads
    P = T - 1                                   # patches per sequence

    # ---- layer 0: patch embedding + class token + positional encoding -----
    @pl.when(layer == 0)
    def _embed():
        wm = wmap_ref[...]
        # (B_TILE*P, PD) @ (PD, D): batch folded into the GEMM M dim.
        ptok = (jnp.dot(patches_ref[...].astype(wm.dtype), wm,
                        preferred_element_type=jnp.float32) + bmap_ref[...])
        pe_all = pe_ref[...]
        cls_row = cls_ref[...] + pe_all[0:1, :]            # (1, D)
        pe_rest = pe_all[1:, :]                            # (P, D)
        parts = []
        for b in range(b_tile):                            # static, small
            parts.append(cls_row)
            parts.append(ptok[b * P:(b + 1) * P, :] + pe_rest)
        tok_ref[...] = jnp.concatenate(parts, axis=0)      # (B_TILE*T, D)

    # ---- one encoder block (tokens stay resident in VMEM scratch) ---------
    x = tok_ref[...]                                       # (M, D), M=B_TILE*T
    M, D = x.shape
    dh = D // H
    scale = 1.0 / math.sqrt(dh)

    h1 = _layernorm(x, ln1g_ref[0], ln1b_ref[0])
    wqkv = wqkv_ref[0]                                     # (D, 3D) fused QKV
    qkv = (jnp.dot(h1.astype(wqkv.dtype), wqkv,
                   preferred_element_type=jnp.float32) + bqkv_ref[0])   # (M, 3D)

    res_parts = []
    for b in range(b_tile):                                # static loop
        r0 = b * T
        qkv_b = qkv[r0:r0 + T, :]                          # (T, 3D)
        # Head-batched q/k/v: (H, T, dh) built from lane slices of the fused
        # projection (head h owns columns h*dh:(h+1)*dh, PyTorch layout).
        q = jnp.stack([qkv_b[:, h * dh:(h + 1) * dh] for h in range(H)], axis=0)
        k = jnp.stack([qkv_b[:, D + h * dh:D + (h + 1) * dh]
                       for h in range(H)], axis=0)
        v = jnp.stack([qkv_b[:, 2 * D + h * dh:2 * D + (h + 1) * dh]
                       for h in range(H)], axis=0)

        s = jnp.einsum('htd,hsd->hts', q, k,
                       preferred_element_type=jnp.float32) * scale
        s = s - jnp.max(s, axis=-1, keepdims=True)
        pr = jnp.exp(s)
        pr = pr * pl.reciprocal(jnp.sum(pr, axis=-1, keepdims=True), approx=True)
        o = jnp.einsum('hts,hsd->htd', pr, v,
                       preferred_element_type=jnp.float32)  # (H, T, dh)

        attn = jnp.concatenate([o[h] for h in range(H)], axis=-1)   # (T, D)
        res_parts.append(x[r0:r0 + T, :] + attn)

    res = jnp.concatenate(res_parts, axis=0)               # (M, D), kept in vregs

    h2 = _layernorm(res, ln2g_ref[0], ln2b_ref[0])
    w1 = w1_ref[0]
    w2 = w2_ref[0]
    mlp = (jnp.dot(h2.astype(w1.dtype), w1,
                   preferred_element_type=jnp.float32) + b1_ref[0])
    mlp = _gelu_exact(mlp)
    mlp = (jnp.dot(mlp.astype(w2.dtype), w2,
                   preferred_element_type=jnp.float32) + b2_ref[0])
    tok_new = res + mlp
    tok_ref[...] = tok_new

    # ---- last layer: regression head on the class tokens ------------------
    @pl.when(layer == n_layers - 1)
    def _head():
        wout = wout_ref[...]
        cls_mat = jnp.concatenate(
            [tok_new[b * T:b * T + 1, :] for b in range(b_tile)], axis=0)
        y = (jnp.dot(cls_mat.astype(wout.dtype), wout,
                     preferred_element_type=jnp.float32) + bout_ref[...])
        for b in range(b_tile):
            out_ref[b] = y[b:b + 1, :]


# ----------------------------------------------------------------------------
# Glue (pure JAX): patchify, positional encoding, parameter setup
# ----------------------------------------------------------------------------
def patchify_jax(image_list, n_patches):
    # Mirrors torch unfold/permute/reshape exactly.
    n, s, c, h, w = image_list.shape
    assert h == w
    ps = h // n_patches
    x = image_list.reshape(n * s, c, n_patches, ps, n_patches, ps)
    x = jnp.transpose(x, (0, 2, 4, 1, 3, 5))        # (n*s, np, np, c, ps, ps)
    x = x.reshape(n * s, n_patches * n_patches, c * ps * ps)
    return x.reshape(n, s * n_patches * n_patches, c * ps * ps)


def get_positional_encoding(seq_len, hidden_d):
    position = jnp.arange(seq_len, dtype=jnp.float32)[:, None]
    div_term = jnp.exp(
        jnp.arange(0, hidden_d, 2, dtype=jnp.float32)
        * (-math.log(10000.0) / hidden_d)
    )
    pe = jnp.zeros((seq_len, hidden_d), dtype=jnp.float32)
    pe = pe.at[:, 0::2].set(jnp.sin(position * div_term))
    pe = pe.at[:, 1::2].set(jnp.cos(position * div_term))
    return pe


def init_params(key, patch_dim, hidden_d, n_blocks, n_heads, mlp_ratio, out_d,
                param_dtype=jnp.float32):
    """param_dtype controls the streaming dtype of the large matmul weights
    (jnp.bfloat16 halves HBM weight traffic; float32 preserves exact PyTorch
    numerics).  LayerNorm params / biases always stay float32."""
    keys = iter(jax.random.split(key, 64 + 16 * n_blocks))
    D = hidden_d

    def lin(din, dout):
        w = 0.02 * jax.random.normal(next(keys), (din, dout), jnp.float32)
        b = 0.02 * jax.random.normal(next(keys), (1, dout), jnp.float32)
        return w, b

    params = {}
    w_map, b_map = lin(patch_dim, D)
    params["w_map"] = w_map.astype(param_dtype)
    params["b_map"] = b_map
    params["class_token"] = jax.random.normal(next(keys), (1, 1, D), jnp.float32)

    ln1_g, ln1_b, ln2_g, ln2_b = [], [], [], []
    wqkv, bqkv, w1s, b1s, w2s, b2s = [], [], [], [], [], []
    for _ in range(n_blocks):
        ln1_g.append(jnp.ones((1, D), jnp.float32))
        ln1_b.append(jnp.zeros((1, D), jnp.float32))
        ln2_g.append(jnp.ones((1, D), jnp.float32))
        ln2_b.append(jnp.zeros((1, D), jnp.float32))
        wq, bq = lin(D, D)
        wk, bk = lin(D, D)
        wv, bv = lin(D, D)
        # Fused QKV weight (D, 3D): columns [Wq | Wk | Wv]; within each block,
        # head h owns columns h*dh:(h+1)*dh (same layout PyTorch's .view uses).
        wqkv.append(jnp.concatenate([wq, wk, wv], axis=1))
        bqkv.append(jnp.concatenate([bq, bk, bv], axis=1))
        w1, b1 = lin(D, mlp_ratio * D)
        w2, b2 = lin(mlp_ratio * D, D)
        w1s.append(w1); b1s.append(b1); w2s.append(w2); b2s.append(b2)

    # Stack per-layer weights along a leading n_blocks axis (layer-streamed).
    params["ln1_g_s"] = jnp.stack(ln1_g)                       # (L, 1, D)
    params["ln1_b_s"] = jnp.stack(ln1_b)
    params["ln2_g_s"] = jnp.stack(ln2_g)
    params["ln2_b_s"] = jnp.stack(ln2_b)
    params["wqkv_s"] = jnp.stack(wqkv).astype(param_dtype)     # (L, D, 3D)
    params["bqkv_s"] = jnp.stack(bqkv)                         # (L, 1, 3D)
    params["w1_s"] = jnp.stack(w1s).astype(param_dtype)        # (L, D, 4D)
    params["b1_s"] = jnp.stack(b1s)
    params["w2_s"] = jnp.stack(w2s).astype(param_dtype)        # (L, 4D, D)
    params["b2_s"] = jnp.stack(b2s)

    w_out, b_out = lin(D, out_d)
    params["w_out"] = w_out.astype(param_dtype)
    params["b_out"] = b_out
    return params


# ----------------------------------------------------------------------------
# Forward pass: one fused pallas_call for the entire network
# ----------------------------------------------------------------------------
def vit_forward(image_list, params, n_patches, n_heads, b_tile=None):
    D = params["class_token"].shape[-1]
    out_d = params["w_out"].shape[-1]
    n_blocks = params["ln1_g_s"].shape[0]
    H = n_heads
    mlp_d = params["w1_s"].shape[-1]

    patches = patchify_jax(image_list, n_patches)                # (N, P, PD)
    N, P, PD = patches.shape
    T = P + 1

    if b_tile is None:
        # Batch-tile so every GEMM's M dim (= b_tile * T) approaches ~256 rows
        # (fills the v6e/v7x MXU; >=128 already covers v5e), while dividing N.
        # For very large N prefer keeping >=2 tiles so both v7x TCs get work.
        target = max(1, 256 // T)
        b_tile = max(d for d in range(1, N + 1) if N % d == 0 and d <= target)
    assert N % b_tile == 0
    n_tiles = N // b_tile

    patches2d = patches.reshape(N * P, PD)                       # lane-dense 2D
    pe = get_positional_encoding(T, D)                           # (T, D)
    cls2d = params["class_token"].reshape(1, D)

    kern = functools.partial(vit_fused_kernel, n_heads=n_heads,
                             b_tile=b_tile, seq_t=T)

    # Advisory cost estimate for XLA scheduling around the fused call.
    flops = (2 * N * P * PD * D
             + n_blocks * N * (2 * T * D * 3 * D + 4 * T * T * D
                               + 4 * T * D * mlp_d)
             + 2 * N * D * out_d)
    transcendentals = n_blocks * N * (H * T * T + T * mlp_d)
    wbytes = 4 * (PD * D + n_blocks * (3 * D * D + 2 * D * mlp_d) + D * out_d)
    bytes_accessed = 4 * (N * P * PD + N * out_d + N * T * D) + n_tiles * wbytes

    # Explicit VMEM budget: double-buffered operand blocks + token scratch +
    # in-flight temporaries, with headroom, capped well below v7x's 64 MiB.
    block_bytes = 4 * (b_tile * P * PD + PD * D + 2 * D + T * D
                       + 4 * D + 3 * D * D + 3 * D + 2 * D * mlp_d + mlp_d + D
                       + D * out_d + out_d + b_tile * out_d)
    scratch_bytes = 4 * b_tile * T * D
    temp_bytes = 4 * (b_tile * T * (3 * D + mlp_d) + b_tile * H * T * T)
    vmem_limit = int(min(max(4 * block_bytes + scratch_bytes + 2 * temp_bytes,
                             32 * 2 ** 20), 48 * 2 ** 20))

    out = pl.pallas_call(
        kern,
        out_shape=jax.ShapeDtypeStruct((N, 1, out_d), jnp.float32),
        grid=(n_tiles, n_blocks),
        in_specs=[
            pl.BlockSpec((b_tile * P, PD), lambda i, l: (i, 0)),         # patches
            pl.BlockSpec((PD, D), lambda i, l: (0, 0)),                  # w_map
            pl.BlockSpec((1, D), lambda i, l: (0, 0)),                   # b_map
            pl.BlockSpec((1, D), lambda i, l: (0, 0)),                   # class tok
            pl.BlockSpec((T, D), lambda i, l: (0, 0)),                   # pos enc
            pl.BlockSpec((1, 1, D), lambda i, l: (l, 0, 0)),             # ln1_g
            pl.BlockSpec((1, 1, D), lambda i, l: (l, 0, 0)),             # ln1_b
            pl.BlockSpec((1, D, 3 * D), lambda i, l: (l, 0, 0)),         # wqkv
            pl.BlockSpec((1, 1, 3 * D), lambda i, l: (l, 0, 0)),         # bqkv
            pl.BlockSpec((1, 1, D), lambda i, l: (l, 0, 0)),             # ln2_g
            pl.BlockSpec((1, 1, D), lambda i, l: (l, 0, 0)),             # ln2_b
            pl.BlockSpec((1, D, mlp_d), lambda i, l: (l, 0, 0)),         # w1
            pl.BlockSpec((1, 1, mlp_d), lambda i, l: (l, 0, 0)),         # b1
            pl.BlockSpec((1, mlp_d, D), lambda i, l: (l, 0, 0)),         # w2
            pl.BlockSpec((1, 1, D), lambda i, l: (l, 0, 0)),             # b2
            pl.BlockSpec((D, out_d), lambda i, l: (0, 0)),               # w_out
            pl.BlockSpec((1, out_d), lambda i, l: (0, 0)),               # b_out
        ],
        out_specs=pl.BlockSpec((b_tile, 1, out_d), lambda i, l: (i, 0, 0)),
        scratch_shapes=[pltpu.VMEM((b_tile * T, D), jnp.float32)],       # tokens
        compiler_params=pltpu.CompilerParams(
            dimension_semantics=("parallel", "arbitrary"),
            vmem_limit_bytes=vmem_limit),
        cost_estimate=pl.CostEstimate(flops=flops,
                                      transcendentals=transcendentals,
                                      bytes_accessed=bytes_accessed),
    )(
        patches2d,
        params["w_map"], params["b_map"], cls2d, pe,
        params["ln1_g_s"], params["ln1_b_s"],
        params["wqkv_s"], params["bqkv_s"],
        params["ln2_g_s"], params["ln2_b_s"],
        params["w1_s"], params["b1_s"], params["w2_s"], params["b2_s"],
        params["w_out"], params["b_out"],
    )
    return out[:, 0, :]                                          # (N, out_d)


# ----------------------------------------------------------------------------
if __name__ == "__main__":
    # Small configuration consistent with the module:
    #   chw = (4, 16, 16), n_patches = 4 -> patch_size 4x4, patch_dim = 64
    #   hidden_d = 32, n_heads = 2, n_blocks = 2, mlp_ratio = 4, out_d = 1
    N, S, C, Himg, Wimg = 2, 2, 4, 16, 16
    n_patches, n_blocks, hidden_d, n_heads, mlp_ratio, out_d = 4, 2, 32, 2, 4, 1
    patch_dim = C * (Himg // n_patches) * (Wimg // n_patches)

    key = jax.random.PRNGKey(0)
    k_img, k_par = jax.random.split(key)
    image_list = jax.random.normal(k_img, (N, S, C, Himg, Wimg), jnp.float32)
    # param_dtype=jnp.float32 for PyTorch-forward parity; use jnp.bfloat16 to
    # halve HBM weight-streaming bytes at larger configs.
    params = init_params(k_par, patch_dim, hidden_d, n_blocks, n_heads,
                         mlp_ratio, out_d, param_dtype=jnp.float32)

    fwd = jax.jit(functools.partial(vit_forward, n_patches=n_patches,
                                    n_heads=n_heads))
    out = fwd(image_list, params)
    out = jax.block_until_ready(out)
    assert out.shape == (N, out_d), out.shape
    print("KERNEL_OK")
</pallas_src>

<mosaic_0001>
module attributes {stable_mosaic.version = 11 : i64} {
  func.func @vit_fused_kernel(%arg0: i32, %arg1: i32, %arg2: memref<64x64xf32, #tpu.memory_space<vmem>>, %arg3: memref<64x32xf32, #tpu.memory_space<vmem>>, %arg4: memref<1x32xf32, #tpu.memory_space<vmem>>, %arg5: memref<1x32xf32, #tpu.memory_space<vmem>>, %arg6: memref<33x32xf32, #tpu.memory_space<vmem>>, %arg7: memref<1x1x32xf32, #tpu.memory_space<vmem>>, %arg8: memref<1x1x32xf32, #tpu.memory_space<vmem>>, %arg9: memref<1x32x96xf32, #tpu.memory_space<vmem>>, %arg10: memref<1x1x96xf32, #tpu.memory_space<vmem>>, %arg11: memref<1x1x32xf32, #tpu.memory_space<vmem>>, %arg12: memref<1x1x32xf32, #tpu.memory_space<vmem>>, %arg13: memref<1x32x128xf32, #tpu.memory_space<vmem>>, %arg14: memref<1x1x128xf32, #tpu.memory_space<vmem>>, %arg15: memref<1x128x32xf32, #tpu.memory_space<vmem>>, %arg16: memref<1x1x32xf32, #tpu.memory_space<vmem>>, %arg17: memref<32x1xf32, #tpu.memory_space<vmem>>, %arg18: memref<1x1xf32, #tpu.memory_space<vmem>>, %arg19: memref<2x1x1xf32, #tpu.memory_space<vmem>>, %arg20: memref<66x32xf32, #tpu.memory_space<vmem>>) attributes {dimension_semantics = [#tpu.dimension_semantics<parallel>, #tpu.dimension_semantics<arbitrary>], iteration_bounds = array<i64: 1, 2>, scalar_prefetch = 0 : i64, scratch_operands = 1 : i64, tpu.core_type = #tpu.core_type<tc>, window_params = [{transform_indices = @transform_0, window_bounds = array<i64: 64, 64>}, {pipeline_mode = #tpu.pipeline_mode<synchronous>, transform_indices = @transform_1, window_bounds = array<i64: 64, 32>}, {pipeline_mode = #tpu.pipeline_mode<synchronous>, transform_indices = @transform_2, window_bounds = array<i64: 1, 32>}, {pipeline_mode = #tpu.pipeline_mode<synchronous>, transform_indices = @transform_3, window_bounds = array<i64: 1, 32>}, {pipeline_mode = #tpu.pipeline_mode<synchronous>, transform_indices = @transform_4, window_bounds = array<i64: 33, 32>}, {transform_indices = @transform_5, window_bounds = array<i64: 1, 1, 32>}, {transform_indices = @transform_6, window_bounds = array<i64: 1, 1, 32>}, {transform_indices = @transform_7, window_bounds = array<i64: 1, 32, 96>}, {transform_indices = @transform_8, window_bounds = array<i64: 1, 1, 96>}, {transform_indices = @transform_9, window_bounds = array<i64: 1, 1, 32>}, {transform_indices = @transform_10, window_bounds = array<i64: 1, 1, 32>}, {transform_indices = @transform_11, window_bounds = array<i64: 1, 32, 128>}, {transform_indices = @transform_12, window_bounds = array<i64: 1, 1, 128>}, {transform_indices = @transform_13, window_bounds = array<i64: 1, 128, 32>}, {transform_indices = @transform_14, window_bounds = array<i64: 1, 1, 32>}, {pipeline_mode = #tpu.pipeline_mode<synchronous>, transform_indices = @transform_15, window_bounds = array<i64: 32, 1>}, {pipeline_mode = #tpu.pipeline_mode<synchronous>, transform_indices = @transform_16, window_bounds = array<i64: 1, 1>}, {transform_indices = @transform_17, window_bounds = array<i64: 2, 1, 1>}]} {
    %c0_i32 = arith.constant 0 : i32
    %0 = arith.cmpi eq, %arg1, %c0_i32 : i32
    %1 = arith.extui %0 : i1 to i32
    %c0_i32_0 = arith.constant 0 : i32
    %2 = arith.cmpi ne, %1, %c0_i32_0 : i32
    scf.if %2 {
      %c0_60 = arith.constant 0 : index
      %c0_61 = arith.constant 0 : index
      %165 = vector.load %arg3[%c0_60, %c0_61] : memref<64x32xf32, #tpu.memory_space<vmem>>, vector<64x32xf32>
      %c0_62 = arith.constant 0 : index
      %c0_63 = arith.constant 0 : index
      %166 = vector.load %arg2[%c0_62, %c0_63] : memref<64x64xf32, #tpu.memory_space<vmem>>, vector<64x64xf32>
      %cst_64 = arith.constant dense<0.000000e+00> : vector<64x32xf32>
      %167 = tpu.matmul %166, %165, %cst_64 {dimension_numbers = #tpu.dot_dimension_numbers<[1], [0], [0], [1], [0, 0, 1, 1], [], []>} : vector<64x64xf32>, vector<64x32xf32>, vector<64x32xf32> -> vector<64x32xf32>
      %c0_65 = arith.constant 0 : index
      %c0_66 = arith.constant 0 : index
      %168 = vector.load %arg4[%c0_65, %c0_66] : memref<1x32xf32, #tpu.memory_space<vmem>>, vector<1x32xf32>
      %169 = vector.broadcast %168 : vector<1x32xf32> to vector<64x32xf32>
      %170 = arith.addf %167, %169 : vector<64x32xf32>
      %c0_67 = arith.constant 0 : index
      %c0_68 = arith.constant 0 : index
      %171 = vector.load %arg6[%c0_67, %c0_68] : memref<33x32xf32, #tpu.memory_space<vmem>>, vector<33x32xf32>
      %c0_69 = arith.constant 0 : index
      %c0_70 = arith.constant 0 : index
      %172 = vector.load %arg5[%c0_69, %c0_70] : memref<1x32xf32, #tpu.memory_space<vmem>>, vector<1x32xf32>
      %173 = vector.extract_strided_slice %171 {offsets = [0, 0], sizes = [1, 32], strides = [1, 1]} : vector<33x32xf32> to vector<1x32xf32>
      %174 = arith.addf %172, %173 : vector<1x32xf32>
      %175 = vector.extract_strided_slice %171 {offsets = [1, 0], sizes = [32, 32], strides = [1, 1]} : vector<33x32xf32> to vector<32x32xf32>
      %176 = vector.extract_strided_slice %170 {offsets = [0, 0], sizes = [32, 32], strides = [1, 1]} : vector<64x32xf32> to vector<32x32xf32>
      %177 = arith.addf %176, %175 : vector<32x32xf32>
      %178 = vector.extract_strided_slice %170 {offsets = [32, 0], sizes = [32, 32], strides = [1, 1]} : vector<64x32xf32> to vector<32x32xf32>
      %179 = arith.addf %178, %175 : vector<32x32xf32>
      %180 = tpu.concatenate %174, %177, %174, %179 in 0 : vector<1x32xf32>, vector<32x32xf32>, vector<1x32xf32>, vector<32x32xf32> -> vector<66x32xf32>
      %c0_71 = arith.constant 0 : index
      %c0_72 = arith.constant 0 : index
      %181 = vector.load %arg20[%c0_71, %c0_72] : memref<66x32xf32, #tpu.memory_space<vmem>>, vector<66x32xf32>
      tpu.vector_store %arg20[%c0_71, %c0_72], %180 {strides = array<i32>} : memref<66x32xf32, #tpu.memory_space<vmem>>, vector<66x32xf32>,
    } else {
    }
    %c0 = arith.constant 0 : index
    %c0_1 = arith.constant 0 : index
    %3 = vector.load %arg20[%c0, %c0_1] : memref<66x32xf32, #tpu.memory_space<vmem>>, vector<66x32xf32>
    %c0_2 = arith.constant 0 : index
    %c0_3 = arith.constant 0 : index
    %c0_4 = arith.constant 0 : index
    %4 = vector.load %arg7[%c0_2, %c0_3, %c0_4] : memref<1x1x32xf32, #tpu.memory_space<vmem>>, vector<1x1x32xf32>
    %5 = vector.shape_cast %4 : vector<1x1x32xf32> to vector<1x32xf32>
    %c0_5 = arith.constant 0 : index
    %c0_6 = arith.constant 0 : index
    %c0_7 = arith.constant 0 : index
    %6 = vector.load %arg8[%c0_5, %c0_6, %c0_7] : memref<1x1x32xf32, #tpu.memory_space<vmem>>, vector<1x1x32xf32>
    %7 = vector.shape_cast %6 : vector<1x1x32xf32> to vector<1x32xf32>
    %cst = arith.constant dense<0.000000e+00> : vector<66xf32>
    %8 = vector.multi_reduction <add>, %3, %cst [1] : vector<66x32xf32> to vector<66xf32>
    %9 = vector.shape_cast %8 : vector<66xf32> to vector<66x1xf32>
    %10 = arith.mulf %3, %3 : vector<66x32xf32>
    %cst_8 = arith.constant dense<0.000000e+00> : vector<66xf32>
    %11 = vector.multi_reduction <add>, %10, %cst_8 [1] : vector<66x32xf32> to vector<66xf32>
    %12 = vector.shape_cast %11 : vector<66xf32> to vector<66x1xf32>
    %cst_9 = arith.constant 3.125000e-02 : f32
    %13 = vector.broadcast %cst_9 : f32 to vector<66x1xf32>
    %14 = arith.mulf %9, %13 : vector<66x1xf32>
    %cst_10 = arith.constant 3.125000e-02 : f32
    %15 = vector.broadcast %cst_10 : f32 to vector<66x1xf32>
    %16 = arith.mulf %12, %15 : vector<66x1xf32>
    %17 = arith.mulf %14, %14 : vector<66x1xf32>
    %18 = arith.subf %16, %17 : vector<66x1xf32>
    %19 = vector.broadcast %14 : vector<66x1xf32> to vector<66x32xf32>
    %20 = arith.subf %3, %19 : vector<66x32xf32>
    %cst_11 = arith.constant 9.99999974E-6 : f32
    %21 = vector.broadcast %cst_11 : f32 to vector<66x1xf32>
    %22 = arith.addf %18, %21 : vector<66x1xf32>
    %23 = math.rsqrt %22 : vector<66x1xf32>
    %24 = vector.broadcast %23 : vector<66x1xf32> to vector<66x32xf32>
    %25 = arith.mulf %20, %24 : vector<66x32xf32>
    %26 = vector.broadcast %5 : vector<1x32xf32> to vector<66x32xf32>
    %27 = arith.mulf %25, %26 : vector<66x32xf32>
    %28 = vector.broadcast %7 : vector<1x32xf32> to vector<66x32xf32>
    %29 = arith.addf %27, %28 : vector<66x32xf32>
    %c0_12 = arith.constant 0 : index
    %c0_13 = arith.constant 0 : index
    %c0_14 = arith.constant 0 : index
    %30 = vector.load %arg9[%c0_12, %c0_13, %c0_14] : memref<1x32x96xf32, #tpu.memory_space<vmem>>, vector<1x32x96xf32>
    %31 = vector.shape_cast %30 : vector<1x32x96xf32> to vector<32x96xf32>
    %cst_15 = arith.constant dense<0.000000e+00> : vector<66x96xf32>
    %32 = tpu.matmul %29, %31, %cst_15 {dimension_numbers = #tpu.dot_dimension_numbers<[1], [0], [0], [1], [0, 0, 1, 1], [], []>} : vector<66x32xf32>, vector<32x96xf32>, vector<66x96xf32> -> vector<66x96xf32>
    %c0_16 = arith.constant 0 : index
    %c0_17 = arith.constant 0 : index
    %c0_18 = arith.constant 0 : index
    %33 = vector.load %arg10[%c0_16, %c0_17, %c0_18] : memref<1x1x96xf32, #tpu.memory_space<vmem>>, vector<1x1x96xf32>
    %34 = vector.shape_cast %33 : vector<1x1x96xf32> to vector<1x96xf32>
    %35 = vector.broadcast %34 : vector<1x96xf32> to vector<66x96xf32>
    %36 = arith.addf %32, %35 : vector<66x96xf32>
    %37 = vector.extract_strided_slice %36 {offsets = [0, 0], sizes = [33, 96], strides = [1, 1]} : vector<66x96xf32> to vector<33x96xf32>
    %38 = vector.extract_strided_slice %37 {offsets = [0, 0], sizes = [33, 16], strides = [1, 1]} : vector<33x96xf32> to vector<33x16xf32>
    %39 = vector.extract_strided_slice %37 {offsets = [0, 16], sizes = [33, 16], strides = [1, 1]} : vector<33x96xf32> to vector<33x16xf32>
    %40 = vector.shape_cast %38 : vector<33x16xf32> to vector<1x33x16xf32>
    %41 = vector.shape_cast %39 : vector<33x16xf32> to vector<1x33x16xf32>
    %42 = tpu.concatenate %40, %41 in 0 : vector<1x33x16xf32>, vector<1x33x16xf32> -> vector<2x33x16xf32>
    %43 = vector.extract_strided_slice %37 {offsets = [0, 32], sizes = [33, 16], strides = [1, 1]} : vector<33x96xf32> to vector<33x16xf32>
    %44 = vector.extract_strided_slice %37 {offsets = [0, 48], sizes = [33, 16], strides = [1, 1]} : vector<33x96xf32> to vector<33x16xf32>
    %45 = vector.shape_cast %43 : vector<33x16xf32> to vector<1x33x16xf32>
    %46 = vector.shape_cast %44 : vector<33x16xf32> to vector<1x33x16xf32>
    %47 = tpu.concatenate %45, %46 in 0 : vector<1x33x16xf32>, vector<1x33x16xf32> -> vector<2x33x16xf32>
    %48 = vector.extract_strided_slice %37 {offsets = [0, 64], sizes = [33, 16], strides = [1, 1]} : vector<33x96xf32> to vector<33x16xf32>
    %49 = vector.extract_strided_slice %37 {offsets = [0, 80], sizes = [33, 16], strides = [1, 1]} : vector<33x96xf32> to vector<33x16xf32>
    %50 = vector.shape_cast %48 : vector<33x16xf32> to vector<1x33x16xf32>
    %51 = vector.shape_cast %49 : vector<33x16xf32> to vector<1x33x16xf32>
    %52 = tpu.concatenate %50, %51 in 0 : vector<1x33x16xf32>, vector<1x33x16xf32> -> vector<2x33x16xf32>
    "tpu.trace_start"() <{level = 10 : i32, message = "htd,hsd->hts"}> : () -> ()
    %cst_19 = arith.constant dense<0.000000e+00> : vector<2x33x33xf32>
    %53 = tpu.matmul %42, %47, %cst_19 {dimension_numbers = #tpu.dot_dimension_numbers<[2], [2], [1], [1], [0, 0, 0, 1, 1, 1], [0], [0]>} : vector<2x33x16xf32>, vector<2x33x16xf32>, vector<2x33x33xf32> -> vector<2x33x33xf32>
    "tpu.trace_stop"() : () -> ()
    %cst_20 = arith.constant 2.500000e-01 : f32
    %54 = vector.broadcast %cst_20 : f32 to vector<2x33x33xf32>
    %55 = arith.mulf %53, %54 : vector<2x33x33xf32>
    %cst_21 = arith.constant dense<0xFF800000> : vector<2x33xf32>
    %56 = vector.multi_reduction <maximumf>, %55, %cst_21 [2] : vector<2x33x33xf32> to vector<2x33xf32>
    %57 = vector.shape_cast %56 : vector<2x33xf32> to vector<2x33x1xf32>
    %58 = vector.broadcast %57 : vector<2x33x1xf32> to vector<2x33x33xf32>
    %59 = arith.subf %55, %58 : vector<2x33x33xf32>
    %60 = math.exp %59 : vector<2x33x33xf32>
    %cst_22 = arith.constant dense<0.000000e+00> : vector<2x33xf32>
    %61 = vector.multi_reduction <add>, %60, %cst_22 [2] : vector<2x33x33xf32> to vector<2x33xf32>
    %62 = vector.shape_cast %61 : vector<2x33xf32> to vector<2x33x1xf32>
    %63 = tpu.reciprocal %62 {approx = true} : vector<2x33x1xf32> -> vector<2x33x1xf32>
    %64 = vector.broadcast %63 : vector<2x33x1xf32> to vector<2x33x33xf32>
    %65 = arith.mulf %60, %64 : vector<2x33x33xf32>
    "tpu.trace_start"() <{level = 10 : i32, message = "hts,hsd->htd"}> : () -> ()
    %cst_23 = arith.constant dense<0.000000e+00> : vector<2x33x16xf32>
    %66 = tpu.matmul %65, %52, %cst_23 {dimension_numbers = #tpu.dot_dimension_numbers<[2], [1], [1], [2], [0, 0, 0, 1, 1, 2], [0], [0]>} : vector<2x33x33xf32>, vector<2x33x16xf32>, vector<2x33x16xf32> -> vector<2x33x16xf32>
    "tpu.trace_stop"() : () -> ()
    %67 = vector.extract_strided_slice %66 {offsets = [0, 0, 0], sizes = [1, 33, 16], strides = [1, 1, 1]} : vector<2x33x16xf32> to vector<1x33x16xf32>
    %68 = vector.shape_cast %67 : vector<1x33x16xf32> to vector<33x16xf32>
    %69 = vector.extract_strided_slice %66 {offsets = [1, 0, 0], sizes = [1, 33, 16], strides = [1, 1, 1]} : vector<2x33x16xf32> to vector<1x33x16xf32>
    %70 = vector.shape_cast %69 : vector<1x33x16xf32> to vector<33x16xf32>
    %71 = tpu.concatenate %68, %70 in 1 : vector<33x16xf32>, vector<33x16xf32> -> vector<33x32xf32>
    %72 = vector.extract_strided_slice %3 {offsets = [0, 0], sizes = [33, 32], strides = [1, 1]} : vector<66x32xf32> to vector<33x32xf32>
    %73 = arith.addf %72, %71 : vector<33x32xf32>
    %74 = vector.extract_strided_slice %36 {offsets = [33, 0], sizes = [33, 96], strides = [1, 1]} : vector<66x96xf32> to vector<33x96xf32>
    %75 = vector.extract_strided_slice %74 {offsets = [0, 0], sizes = [33, 16], strides = [1, 1]} : vector<33x96xf32> to vector<33x16xf32>
    %76 = vector.extract_strided_slice %74 {offsets = [0, 16], sizes = [33, 16], strides = [1, 1]} : vector<33x96xf32> to vector<33x16xf32>
    %77 = vector.shape_cast %75 : vector<33x16xf32> to vector<1x33x16xf32>
    %78 = vector.shape_cast %76 : vector<33x16xf32> to vector<1x33x16xf32>
    %79 = tpu.concatenate %77, %78 in 0 : vector<1x33x16xf32>, vector<1x33x16xf32> -> vector<2x33x16xf32>
    %80 = vector.extract_strided_slice %74 {offsets = [0, 32], sizes = [33, 16], strides = [1, 1]} : vector<33x96xf32> to vector<33x16xf32>
    %81 = vector.extract_strided_slice %74 {offsets = [0, 48], sizes = [33, 16], strides = [1, 1]} : vector<33x96xf32> to vector<33x16xf32>
    %82 = vector.shape_cast %80 : vector<33x16xf32> to vector<1x33x16xf32>
    %83 = vector.shape_cast %81 : vector<33x16xf32> to vector<1x33x16xf32>
    %84 = tpu.concatenate %82, %83 in 0 : vector<1x33x16xf32>, vector<1x33x16xf32> -> vector<2x33x16xf32>
    %85 = vector.extract_strided_slice %74 {offsets = [0, 64], sizes = [33, 16], strides = [1, 1]} : vector<33x96xf32> to vector<33x16xf32>
    %86 = vector.extract_strided_slice %74 {offsets = [0, 80], sizes = [33, 16], strides = [1, 1]} : vector<33x96xf32> to vector<33x16xf32>
    %87 = vector.shape_cast %85 : vector<33x16xf32> to vector<1x33x16xf32>
    %88 = vector.shape_cast %86 : vector<33x16xf32> to vector<1x33x16xf32>
    %89 = tpu.concatenate %87, %88 in 0 : vector<1x33x16xf32>, vector<1x33x16xf32> -> vector<2x33x16xf32>
    "tpu.trace_start"() <{level = 10 : i32, message = "htd,hsd->hts"}> : () -> ()
    %cst_24 = arith.constant dense<0.000000e+00> : vector<2x33x33xf32>
    %90 = tpu.matmul %79, %84, %cst_24 {dimension_numbers = #tpu.dot_dimension_numbers<[2], [2], [1], [1], [0, 0, 0, 1, 1, 1], [0], [0]>} : vector<2x33x16xf32>, vector<2x33x16xf32>, vector<2x33x33xf32> -> vector<2x33x33xf32>
    "tpu.trace_stop"() : () -> ()
    %cst_25 = arith.constant 2.500000e-01 : f32
    %91 = vector.broadcast %cst_25 : f32 to vector<2x33x33xf32>
    %92 = arith.mulf %90, %91 : vector<2x33x33xf32>
    %cst_26 = arith.constant dense<0xFF800000> : vector<2x33xf32>
    %93 = vector.multi_reduction <maximumf>, %92, %cst_26 [2] : vector<2x33x33xf32> to vector<2x33xf32>
    %94 = vector.shape_cast %93 : vector<2x33xf32> to vector<2x33x1xf32>
    %95 = vector.broadcast %94 : vector<2x33x1xf32> to vector<2x33x33xf32>
    %96 = arith.subf %92, %95 : vector<2x33x33xf32>
    %97 = math.exp %96 : vector<2x33x33xf32>
    %cst_27 = arith.constant dense<0.000000e+00> : vector<2x33xf32>
    %98 = vector.multi_reduction <add>, %97, %cst_27 [2] : vector<2x33x33xf32> to vector<2x33xf32>
    %99 = vector.shape_cast %98 : vector<2x33xf32> to vector<2x33x1xf32>
    %100 = tpu.reciprocal %99 {approx = true} : vector<2x33x1xf32> -> vector<2x33x1xf32>
    %101 = vector.broadcast %100 : vector<2x33x1xf32> to vector<2x33x33xf32>
    %102 = arith.mulf %97, %101 : vector<2x33x33xf32>
    "tpu.trace_start"() <{level = 10 : i32, message = "hts,hsd->htd"}> : () -> ()
    %cst_28 = arith.constant dense<0.000000e+00> : vector<2x33x16xf32>
    %103 = tpu.matmul %102, %89, %cst_28 {dimension_numbers = #tpu.dot_dimension_numbers<[2], [1], [1], [2], [0, 0, 0, 1, 1, 2], [0], [0]>} : vector<2x33x33xf32>, vector<2x33x16xf32>, vector<2x33x16xf32> -> vector<2x33x16xf32>
    "tpu.trace_stop"() : () -> ()
    %104 = vector.extract_strided_slice %103 {offsets = [0, 0, 0], sizes = [1, 33, 16], strides = [1, 1, 1]} : vector<2x33x16xf32> to vector<1x33x16xf32>
    %105 = vector.shape_cast %104 : vector<1x33x16xf32> to vector<33x16xf32>
    %106 = vector.extract_strided_slice %103 {offsets = [1, 0, 0], sizes = [1, 33, 16], strides = [1, 1, 1]} : vector<2x33x16xf32> to vector<1x33x16xf32>
    %107 = vector.shape_cast %106 : vector<1x33x16xf32> to vector<33x16xf32>
    %108 = tpu.concatenate %105, %107 in 1 : vector<33x16xf32>, vector<33x16xf32> -> vector<33x32xf32>
    %109 = vector.extract_strided_slice %3 {offsets = [33, 0], sizes = [33, 32], strides = [1, 1]} : vector<66x32xf32> to vector<33x32xf32>
    %110 = arith.addf %109, %108 : vector<33x32xf32>
    %111 = tpu.concatenate %73, %110 in 0 : vector<33x32xf32>, vector<33x32xf32> -> vector<66x32xf32>
    %c0_29 = arith.constant 0 : index
    %c0_30 = arith.constant 0 : index
    %c0_31 = arith.constant 0 : index
    %112 = vector.load %arg11[%c0_29, %c0_30, %c0_31] : memref<1x1x32xf32, #tpu.memory_space<vmem>>, vector<1x1x32xf32>
    %113 = vector.shape_cast %112 : vector<1x1x32xf32> to vector<1x32xf32>
    %c0_32 = arith.constant 0 : index
    %c0_33 = arith.constant 0 : index
    %c0_34 = arith.constant 0 : index
    %114 = vector.load %arg12[%c0_32, %c0_33, %c0_34] : memref<1x1x32xf32, #tpu.memory_space<vmem>>, vector<1x1x32xf32>
    %115 = vector.shape_cast %114 : vector<1x1x32xf32> to vector<1x32xf32>
    %cst_35 = arith.constant dense<0.000000e+00> : vector<66xf32>
    %116 = vector.multi_reduction <add>, %111, %cst_35 [1] : vector<66x32xf32> to vector<66xf32>
    %117 = vector.shape_cast %116 : vector<66xf32> to vector<66x1xf32>
    %118 = arith.mulf %111, %111 : vector<66x32xf32>
    %cst_36 = arith.constant dense<0.000000e+00> : vector<66xf32>
    %119 = vector.multi_reduction <add>, %118, %cst_36 [1] : vector<66x32xf32> to vector<66xf32>
    %120 = vector.shape_cast %119 : vector<66xf32> to vector<66x1xf32>
    %cst_37 = arith.constant 3.125000e-02 : f32
    %121 = vector.broadcast %cst_37 : f32 to vector<66x1xf32>
    %122 = arith.mulf %117, %121 : vector<66x1xf32>
    %cst_38 = arith.constant 3.125000e-02 : f32
    %123 = vector.broadcast %cst_38 : f32 to vector<66x1xf32>
    %124 = arith.mulf %120, %123 : vector<66x1xf32>
    %125 = arith.mulf %122, %122 : vector<66x1xf32>
    %126 = arith.subf %124, %125 : vector<66x1xf32>
    %127 = vector.broadcast %122 : vector<66x1xf32> to vector<66x32xf32>
    %128 = arith.subf %111, %127 : vector<66x32xf32>
    %cst_39 = arith.constant 9.99999974E-6 : f32
    %129 = vector.broadcast %cst_39 : f32 to vector<66x1xf32>
    %130 = arith.addf %126, %129 : vector<66x1xf32>
    %131 = math.rsqrt %130 : vector<66x1xf32>
    %132 = vector.broadcast %131 : vector<66x1xf32> to vector<66x32xf32>
    %133 = arith.mulf %128, %132 : vector<66x32xf32>
    %134 = vector.broadcast %113 : vector<1x32xf32> to vector<66x32xf32>
    %135 = arith.mulf %133, %134 : vector<66x32xf32>
    %136 = vector.broadcast %115 : vector<1x32xf32> to vector<66x32xf32>
    %137 = arith.addf %135, %136 : vector<66x32xf32>
    %c0_40 = arith.constant 0 : index
    %c0_41 = arith.constant 0 : index
    %c0_42 = arith.constant 0 : index
    %138 = vector.load %arg13[%c0_40, %c0_41, %c0_42] : memref<1x32x128xf32, #tpu.memory_space<vmem>>, vector<1x32x128xf32>
    %139 = vector.shape_cast %138 : vector<1x32x128xf32> to vector<32x128xf32>
    %c0_43 = arith.constant 0 : index
    %c0_44 = arith.constant 0 : index
    %c0_45 = arith.constant 0 : index
    %140 = vector.load %arg15[%c0_43, %c0_44, %c0_45] : memref<1x128x32xf32, #tpu.memory_space<vmem>>, vector<1x128x32xf32>
    %141 = vector.shape_cast %140 : vector<1x128x32xf32> to vector<128x32xf32>
    %cst_46 = arith.constant dense<0.000000e+00> : vector<66x128xf32>
    %142 = tpu.matmul %137, %139, %cst_46 {dimension_numbers = #tpu.dot_dimension_numbers<[1], [0], [0], [1], [0, 0, 1, 1], [], []>} : vector<66x32xf32>, vector<32x128xf32>, vector<66x128xf32> -> vector<66x128xf32>
    %c0_47 = arith.constant 0 : index
    %c0_48 = arith.constant 0 : index
    %c0_49 = arith.constant 0 : index
    %143 = vector.load %arg14[%c0_47, %c0_48, %c0_49] : memref<1x1x128xf32, #tpu.memory_space<vmem>>, vector<1x1x128xf32>
    %144 = vector.shape_cast %143 : vector<1x1x128xf32> to vector<1x128xf32>
    %145 = vector.broadcast %144 : vector<1x128xf32> to vector<66x128xf32>
    %146 = arith.addf %142, %145 : vector<66x128xf32>
    %cst_50 = arith.constant 5.000000e-01 : f32
    %147 = vector.broadcast %cst_50 : f32 to vector<66x128xf32>
    %148 = arith.mulf %147, %146 : vector<66x128xf32>
    %cst_51 = arith.constant 0.707106769 : f32
    %149 = vector.broadcast %cst_51 : f32 to vector<66x128xf32>
    %150 = arith.mulf %146, %149 : vector<66x128xf32>
    %151 = math.erf %150 : vector<66x128xf32>
    %cst_52 = arith.constant 1.000000e+00 : f32
    %152 = vector.broadcast %cst_52 : f32 to vector<66x128xf32>
    %153 = arith.addf %152, %151 : vector<66x128xf32>
    %154 = arith.mulf %148, %153 : vector<66x128xf32>
    %cst_53 = arith.constant dense<0.000000e+00> : vector<66x32xf32>
    %155 = tpu.matmul %154, %141, %cst_53 {dimension_numbers = #tpu.dot_dimension_numbers<[1], [0], [0], [1], [0, 0, 1, 1], [], []>} : vector<66x128xf32>, vector<128x32xf32>, vector<66x32xf32> -> vector<66x32xf32>
    %c0_54 = arith.constant 0 : index
    %c0_55 = arith.constant 0 : index
    %c0_56 = arith.constant 0 : index
    %156 = vector.load %arg16[%c0_54, %c0_55, %c0_56] : memref<1x1x32xf32, #tpu.memory_space<vmem>>, vector<1x1x32xf32>
    %157 = vector.shape_cast %156 : vector<1x1x32xf32> to vector<1x32xf32>
    %158 = vector.broadcast %157 : vector<1x32xf32> to vector<66x32xf32>
    %159 = arith.addf %155, %158 : vector<66x32xf32>
    %160 = arith.addf %111, %159 : vector<66x32xf32>
    %c0_57 = arith.constant 0 : index
    %c0_58 = arith.constant 0 : index
    %161 = vector.load %arg20[%c0_57, %c0_58] : memref<66x32xf32, #tpu.memory_space<vmem>>, vector<66x32xf32>
    tpu.vector_store %arg20[%c0_57, %c0_58], %160 {strides = array<i32>} : memref<66x32xf32, #tpu.memory_space<vmem>>, vector<66x32xf32>,
    %c1_i32 = arith.constant 1 : i32
    %162 = arith.cmpi eq, %arg1, %c1_i32 : i32
    %163 = arith.extui %162 : i1 to i32
    %c0_i32_59 = arith.constant 0 : i32
    %164 = arith.cmpi ne, %163, %c0_i32_59 : i32
    scf.if %164 {
      %c0_60 = arith.constant 0 : index
      %c0_61 = arith.constant 0 : index
      %165 = vector.load %arg17[%c0_60, %c0_61] : memref<32x1xf32, #tpu.memory_space<vmem>>, vector<32x1xf32>
      %166 = vector.extract_strided_slice %160 {offsets = [0, 0], sizes = [1, 32], strides = [1, 1]} : vector<66x32xf32> to vector<1x32xf32>
      %167 = vector.extract_strided_slice %160 {offsets = [33, 0], sizes = [1, 32], strides = [1, 1]} : vector<66x32xf32> to vector<1x32xf32>
      %168 = tpu.concatenate %166, %167 in 0 : vector<1x32xf32>, vector<1x32xf32> -> vector<2x32xf32>
      %cst_62 = arith.constant dense<0.000000e+00> : vector<2x1xf32>
      %169 = tpu.matmul %168, %165, %cst_62 {dimension_numbers = #tpu.dot_dimension_numbers<[1], [0], [0], [1], [0, 0, 1, 1], [], []>} : vector<2x32xf32>, vector<32x1xf32>, vector<2x1xf32> -> vector<2x1xf32>
      %c0_63 = arith.constant 0 : index
      %c0_64 = arith.constant 0 : index
      %170 = vector.load %arg18[%c0_63, %c0_64] : memref<1x1xf32, #tpu.memory_space<vmem>>, vector<1x1xf32>
      %171 = vector.broadcast %170 : vector<1x1xf32> to vector<2x1xf32>
      %172 = arith.addf %169, %171 : vector<2x1xf32>
      %173 = vector.extract_strided_slice %172 {offsets = [0, 0], sizes = [1, 1], strides = [1, 1]} : vector<2x1xf32> to vector<1x1xf32>
      %c0_65 = arith.constant 0 : index
      %c0_66 = arith.constant 0 : index
      %c0_67 = arith.constant 0 : index
      %174 = vector.load %arg19[%c0_65, %c0_66, %c0_67] : memref<2x1x1xf32, #tpu.memory_space<vmem>>, vector<1x1x1xf32>
      %175 = vector.shape_cast %174 : vector<1x1x1xf32> to vector<1x1xf32>
      %176 = vector.shape_cast %173 : vector<1x1xf32> to vector<1x1x1xf32>
      tpu.vector_store %arg19[%c0_65, %c0_66, %c0_67], %176 {strides = array<i32>} : memref<2x1x1xf32, #tpu.memory_space<vmem>>, vector<1x1x1xf32>,
      %177 = vector.extract_strided_slice %172 {offsets = [1, 0], sizes = [1, 1], strides = [1, 1]} : vector<2x1xf32> to vector<1x1xf32>
      %c1 = arith.constant 1 : index
      %c0_68 = arith.constant 0 : index
      %c0_69 = arith.constant 0 : index
      %178 = vector.load %arg19[%c1, %c0_68, %c0_69] : memref<2x1x1xf32, #tpu.memory_space<vmem>>, vector<1x1x1xf32>
      %179 = vector.shape_cast %178 : vector<1x1x1xf32> to vector<1x1xf32>
      %180 = vector.shape_cast %177 : vector<1x1xf32> to vector<1x1x1xf32>
      tpu.vector_store %arg19[%c1, %c0_68, %c0_69], %180 {strides = array<i32>} : memref<2x1x1xf32, #tpu.memory_space<vmem>>, vector<1x1x1xf32>,
    } else {
    }
    return
  }
  func.func @transform_0(%arg0: i32, %arg1: i32) -> (i32, i32) {
    %c0_i32 = arith.constant 0 : i32
    %c0_i32_0 = arith.constant 0 : i32
    return %arg0, %c0_i32 : i32, i32
  }
  func.func @transform_1(%arg0: i32, %arg1: i32) -> (i32, i32) {
    %c0_i32 = arith.constant 0 : i32
    %c0_i32_0 = arith.constant 0 : i32
    %c0_i32_1 = arith.constant 0 : i32
    return %c0_i32, %c0_i32_0 : i32, i32
  }
  func.func @transform_2(%arg0: i32, %arg1: i32) -> (i32, i32) {
    %c0_i32 = arith.constant 0 : i32
    %c0_i32_0 = arith.constant 0 : i32
    %c0_i32_1 = arith.constant 0 : i32
    return %c0_i32, %c0_i32_0 : i32, i32
  }
  func.func @transform_3(%arg0: i32, %arg1: i32) -> (i32, i32) {
    %c0_i32 = arith.constant 0 : i32
    %c0_i32_0 = arith.constant 0 : i32
    %c0_i32_1 = arith.constant 0 : i32
    return %c0_i32, %c0_i32_0 : i32, i32
  }
  func.func @transform_4(%arg0: i32, %arg1: i32) -> (i32, i32) {
    %c0_i32 = arith.constant 0 : i32
    %c0_i32_0 = arith.constant 0 : i32
    %c0_i32_1 = arith.constant 0 : i32
    return %c0_i32, %c0_i32_0 : i32, i32
  }
  func.func @transform_5(%arg0: i32, %arg1: i32) -> (i32, i32, i32) {
    %c0_i32 = arith.constant 0 : i32
    %c0_i32_0 = arith.constant 0 : i32
    %c0_i32_1 = arith.constant 0 : i32
    return %arg1, %c0_i32, %c0_i32_0 : i32, i32, i32
  }
  func.func @transform_6(%arg0: i32, %arg1: i32) -> (i32, i32, i32) {
    %c0_i32 = arith.constant 0 : i32
    %c0_i32_0 = arith.constant 0 : i32
    %c0_i32_1 = arith.constant 0 : i32
    return %arg1, %c0_i32, %c0_i32_0 : i32, i32, i32
  }
  func.func @transform_7(%arg0: i32, %arg1: i32) -> (i32, i32, i32) {
    %c0_i32 = arith.constant 0 : i32
    %c0_i32_0 = arith.constant 0 : i32
    %c0_i32_1 = arith.constant 0 : i32
    return %arg1, %c0_i32, %c0_i32_0 : i32, i32, i32
  }
  func.func @transform_8(%arg0: i32, %arg1: i32) -> (i32, i32, i32) {
    %c0_i32 = arith.constant 0 : i32
    %c0_i32_0 = arith.constant 0 : i32
    %c0_i32_1 = arith.constant 0 : i32
    return %arg1, %c0_i32, %c0_i32_0 : i32, i32, i32
  }
  func.func @transform_9(%arg0: i32, %arg1: i32) -> (i32, i32, i32) {
    %c0_i32 = arith.constant 0 : i32
    %c0_i32_0 = arith.constant 0 : i32
    %c0_i32_1 = arith.constant 0 : i32
    return %arg1, %c0_i32, %c0_i32_0 : i32, i32, i32
  }
  func.func @transform_10(%arg0: i32, %arg1: i32) -> (i32, i32, i32) {
    %c0_i32 = arith.constant 0 : i32
    %c0_i32_0 = arith.constant 0 : i32
    %c0_i32_1 = arith.constant 0 : i32
    return %arg1, %c0_i32, %c0_i32_0 : i32, i32, i32
  }
  func.func @transform_11(%arg0: i32, %arg1: i32) -> (i32, i32, i32) {
    %c0_i32 = arith.constant 0 : i32
    %c0_i32_0 = arith.constant 0 : i32
    %c0_i32_1 = arith.constant 0 : i32
    return %arg1, %c0_i32, %c0_i32_0 : i32, i32, i32
  }
  func.func @transform_12(%arg0: i32, %arg1: i32) -> (i32, i32, i32) {
    %c0_i32 = arith.constant 0 : i32
    %c0_i32_0 = arith.constant 0 : i32
    %c0_i32_1 = arith.constant 0 : i32
    return %arg1, %c0_i32, %c0_i32_0 : i32, i32, i32
  }
  func.func @transform_13(%arg0: i32, %arg1: i32) -> (i32, i32, i32) {
    %c0_i32 = arith.constant 0 : i32
    %c0_i32_0 = arith.constant 0 : i32
    %c0_i32_1 = arith.constant 0 : i32
    return %arg1, %c0_i32, %c0_i32_0 : i32, i32, i32
  }
  func.func @transform_14(%arg0: i32, %arg1: i32) -> (i32, i32, i32) {
    %c0_i32 = arith.constant 0 : i32
    %c0_i32_0 = arith.constant 0 : i32
    %c0_i32_1 = arith.constant 0 : i32
    return %arg1, %c0_i32, %c0_i32_0 : i32, i32, i32
  }
  func.func @transform_15(%arg0: i32, %arg1: i32) -> (i32, i32) {
    %c0_i32 = arith.constant 0 : i32
    %c0_i32_0 = arith.constant 0 : i32
    %c0_i32_1 = arith.constant 0 : i32
    return %c0_i32, %c0_i32_0 : i32, i32
  }
  func.func @transform_16(%arg0: i32, %arg1: i32) -> (i32, i32) {
    %c0_i32 = arith.constant 0 : i32
    %c0_i32_0 = arith.constant 0 : i32
    %c0_i32_1 = arith.constant 0 : i32
    return %c0_i32, %c0_i32_0 : i32, i32
  }
  func.func @transform_17(%arg0: i32, %arg1: i32) -> (i32, i32, i32) {
    %c0_i32 = arith.constant 0 : i32
    %c0_i32_0 = arith.constant 0 : i32
    %c0_i32_1 = arith.constant 0 : i32
    return %arg0, %c0_i32, %c0_i32_0 : i32, i32, i32
  }
}

</mosaic_0001>

<llo_original>
// kernel: vit_forward.1
$region0: #{vit_forward.1}
  #allocation0 [shape = 'u32[]', space=smem, size = 0x4, offset = 0x4, fixed_abs, tag = 'smem constant byte address 0x4 - core index']
  #allocation1 [shape = 'u32[144,128]{1,0:T(1,128)}', space=vmem, size = 0x12000, scoped, tag = 'internal scratch']
  #allocation2 [shape = 'f32[66,32]{1,0:T(8,128)}', space=vmem, size = 0x9000, scoped, tag = 'scratch operand']
  #allocation3 [shape = 'f32[1,1]{1,0:T(1,128)S(1)}', space=vmem, size = 0x200, scoped, tag = 'scoped memory for vit_forward.1']
  %s0 = inlined_call_operand.vmem [shape: f32[64,64], index: 0, kind: input, shape index: {}]
  %s1 = inlined_call_operand.vmem [shape: f32[64,32], index: 1, kind: input, shape index: {}]
  %s2 = inlined_call_operand.vmem [shape: f32[1,32], index: 2, kind: input, shape index: {}]
  %s3 = inlined_call_operand.vmem [shape: f32[1,32], index: 3, kind: input, shape index: {}]
  %s4 = inlined_call_operand.vmem [shape: f32[33,32], index: 4, kind: input, shape index: {}]
  %s5 = inlined_call_operand.vmem [shape: f32[2,1,32], index: 5, kind: input, shape index: {}]
  %s6 = inlined_call_operand.vmem [shape: f32[2,1,32], index: 6, kind: input, shape index: {}]
  %s7 = inlined_call_operand.vmem [shape: f32[2,32,96], index: 7, kind: input, shape index: {}]
  %s8 = inlined_call_operand.vmem [shape: f32[2,1,96], index: 8, kind: input, shape index: {}]
  %s9 = inlined_call_operand.vmem [shape: f32[2,1,32], index: 9, kind: input, shape index: {}]
  %s10 = inlined_call_operand.vmem [shape: f32[2,1,32], index: 10, kind: input, shape index: {}]
  %s11 = inlined_call_operand.vmem [shape: f32[2,32,128], index: 11, kind: input, shape index: {}]
  %s12 = inlined_call_operand.vmem [shape: f32[2,1,128], index: 12, kind: input, shape index: {}]
  %s13 = inlined_call_operand.vmem [shape: f32[2,128,32], index: 13, kind: input, shape index: {}]
  %s14 = inlined_call_operand.vmem [shape: f32[2,1,32], index: 14, kind: input, shape index: {}]
  %s15 = inlined_call_operand.vmem [shape: f32[32,1], index: 15, kind: input, shape index: {}]
  %s16 = inlined_call_operand.<no memory space> [shape: f32[1,1], index: 16, kind: input, shape index: {}]
  %s17 = inlined_call_operand.vmem [shape: f32[2,1,1], index: 17, kind: output, shape index: {}]
  %s18 = sld [smem:[#allocation0]]
  $region109: #{vit_forward.1} parent=0
    _
  %s20 = ssub.s32 1, %s18
  %s21 = scalar_select 0, %s20, %s18
  %v22 = vstv %s16
  %23 = vst [vmem:[#allocation3] sm:$0x1] %v22
  loop: start=0, step=1, limit=4
  $region2: #{vit_forward.1} parent=0 // loop_pre_header
    _
  $region3: #{vit_forward.1} parent=0 // loop_header
    %s25 = sphi 0, %s29
    %p26 = scmp.ge.s32.totalorder %s25, 4
    %s32 = sphi 0, %s44
    %s33 = sphi 0, %s40
    %s34 = sphi 0, %s32
    %s35 = sphi 0, %s33
    %s36 = sphi 0, %s34
    %s37 = sphi 0, %s35
    %s47 = sphi 0, %s49
    %s50 = sphi 0, %s47
    %s51 = sphi 0, %s50
    %s67 = sphi 0, %s51
    %s71 = sphi 0, %s71
    %s73 = sphi 0, %s71
    %s74 = sphi 0, %s73
    %s88 = sphi 0, %s74
    %s92 = sphi 0, %s92
    %s94 = sphi 0, %s92
    %s95 = sphi 0, %s94
    %s109 = sphi 0, %s95
    %s113 = sphi 0, %s113
    %s115 = sphi 0, %s113
    %s116 = sphi 0, %s115
    %s130 = sphi 0, %s116
    %s134 = sphi 0, %s134
    %s136 = sphi 0, %s134
    %s137 = sphi 0, %s136
    %s151 = sphi 0, %s137
    %s157 = sphi 0, %s159
    %s160 = sphi 0, %s157
    %s161 = sphi 0, %s160
    %s177 = sphi 0, %s161
    %s183 = sphi 0, %s185
    %s186 = sphi 0, %s183
    %s187 = sphi 0, %s186
    %s203 = sphi 0, %s187
    %s209 = sphi 0, %s211
    %s212 = sphi 0, %s209
    %s213 = sphi 0, %s212
    %s229 = sphi 0, %s213
    %s235 = sphi 0, %s237
    %s238 = sphi 0, %s235
    %s239 = sphi 0, %s238
    %s255 = sphi 0, %s239
    %s261 = sphi 0, %s263
    %s264 = sphi 0, %s261
    %s265 = sphi 0, %s264
    %s281 = sphi 0, %s265
    %s287 = sphi 0, %s289
    %s290 = sphi 0, %s287
    %s291 = sphi 0, %s290
    %s307 = sphi 0, %s291
    %s313 = sphi 0, %s315
    %s316 = sphi 0, %s313
    %s317 = sphi 0, %s316
    %s333 = sphi 0, %s317
    %s339 = sphi 0, %s341
    %s342 = sphi 0, %s339
    %s343 = sphi 0, %s342
    %s359 = sphi 0, %s343
    %s365 = sphi 0, %s367
    %s368 = sphi 0, %s365
    %s369 = sphi 0, %s368
    %s385 = sphi 0, %s369
    %s391 = sphi 0, %s393
    %s394 = sphi 0, %s391
    %s395 = sphi 0, %s394
    %s411 = sphi 0, %s395
    %s415 = sphi 0, %s415
    %s417 = sphi 0, %s415
    %s418 = sphi 0, %s417
    %s432 = sphi 0, %s418
    %s436 = sphi 0, %s436
    %s438 = sphi 0, %s436
    %s439 = sphi 0, %s438
    %s453 = sphi 0, %s439
    %s459 = sphi 0, %s461
    %s462 = sphi 0, %s459
    %s463 = sphi 0, %s462
    %s479 = sphi 0, %s463
  $region4: #{vit_forward.1} parent=0 // loop_header_branch
    %28 = sbr.rel (%p26) target = $region8
  $region5: #{vit_forward.1} parent=0 // loop_body
    %s30 = ssub.s32 %s25, 1
    %s31 = ssub.s32 %s25, 2
    %s38 = sadd.s32 1, %s33
    %p39 = scmp.ge.s32.totalorder %s38, 2
    %s40 = scalar_select %p39, 0, %s38
    %s41 = sadd.s32 1, %s32
    %s42 = scalar_select %p39, %s41, %s32
    %p43 = scmp.ge.s32.totalorder %s42, 1
    %s44 = scalar_select %p43, 0, %s42
    %s45 = ssub.s32 %s32, %s44
    %p46 = scmp.eq.s32.totalorder %s45, 0
    %s48 = sadd.s32 %s47, 1
    %s49 = scalar_select %p46, %s47, %s48
    %p52 = pneg %p46
    %p53 = scmp.eq.s32.totalorder %s25, 1
    %p54 = por %p52, %p53
    %p55 = scmp.ne.s32.totalorder %s47, %s50
    %p56 = scmp.eq.s32.totalorder %s25, 0
    %p57 = por %p55, %p56
    %p58 = scmp.ne.s32.totalorder %s47, %s50
    %p59 = scmp.eq.s32.totalorder %s30, 1
    %p60 = por %p58, %p59
    %p61 = scmp.ne.s32.totalorder %s50, %s51
    %p62 = scmp.eq.s32.totalorder %s30, 0
    %p63 = por %p61, %p62
    %p64 = scmp.ne.s32.totalorder %s50, %s51
    %p65 = scmp.eq.s32.totalorder %s31, 1
    %p66 = por %p64, %p65
    %p68 = scmp.ne.s32.totalorder %s51, %s67
    %p69 = scmp.eq.s32.totalorder %s31, 0
    %p70 = por %p68, %p69
    %s72 = sadd.s32 %s71, 1
    %p75 = scmp.eq.s32.totalorder %s25, 1
    %p76 = scmp.ne.s32.totalorder %s71, %s73
    %p77 = scmp.eq.s32.totalorder %s25, 0
    %p78 = por %p76, %p77
    %p79 = scmp.ne.s32.totalorder %s71, %s73
    %p80 = scmp.eq.s32.totalorder %s30, 1
    %p81 = por %p79, %p80
    %p82 = scmp.ne.s32.totalorder %s73, %s74
    %p83 = scmp.eq.s32.totalorder %s30, 0
    %p84 = por %p82, %p83
    %p85 = scmp.ne.s32.totalorder %s73, %s74
    %p86 = scmp.eq.s32.totalorder %s31, 1
    %p87 = por %p85, %p86
    %p89 = scmp.ne.s32.totalorder %s74, %s88
    %p90 = scmp.eq.s32.totalorder %s31, 0
    %p91 = por %p89, %p90
    %s93 = sadd.s32 %s92, 1
    %p96 = scmp.eq.s32.totalorder %s25, 1
    %p97 = scmp.ne.s32.totalorder %s92, %s94
    %p98 = scmp.eq.s32.totalorder %s25, 0
    %p99 = por %p97, %p98
    %p100 = scmp.ne.s32.totalorder %s92, %s94
    %p101 = scmp.eq.s32.totalorder %s30, 1
    %p102 = por %p100, %p101
    %p103 = scmp.ne.s32.totalorder %s94, %s95
    %p104 = scmp.eq.s32.totalorder %s30, 0
    %p105 = por %p103, %p104
    %p106 = scmp.ne.s32.totalorder %s94, %s95
    %p107 = scmp.eq.s32.totalorder %s31, 1
    %p108 = por %p106, %p107
    %p110 = scmp.ne.s32.totalorder %s95, %s109
    %p111 = scmp.eq.s32.totalorder %s31, 0
    %p112 = por %p110, %p111
    %s114 = sadd.s32 %s113, 1
    %p117 = scmp.eq.s32.totalorder %s25, 1
    %p118 = scmp.ne.s32.totalorder %s113, %s115
    %p119 = scmp.eq.s32.totalorder %s25, 0
    %p120 = por %p118, %p119
    %p121 = scmp.ne.s32.totalorder %s113, %s115
    %p122 = scmp.eq.s32.totalorder %s30, 1
    %p123 = por %p121, %p122
    %p124 = scmp.ne.s32.totalorder %s115, %s116
    %p125 = scmp.eq.s32.totalorder %s30, 0
    %p126 = por %p124, %p125
    %p127 = scmp.ne.s32.totalorder %s115, %s116
    %p128 = scmp.eq.s32.totalorder %s31, 1
    %p129 = por %p127, %p128
    %p131 = scmp.ne.s32.totalorder %s116, %s130
    %p132 = scmp.eq.s32.totalorder %s31, 0
    %p133 = por %p131, %p132
    %s135 = sadd.s32 %s134, 1
    %p138 = scmp.eq.s32.totalorder %s25, 1
    %p139 = scmp.ne.s32.totalorder %s134, %s136
    %p140 = scmp.eq.s32.totalorder %s25, 0
    %p141 = por %p139, %p140
    %p142 = scmp.ne.s32.totalorder %s134, %s136
    %p143 = scmp.eq.s32.totalorder %s30, 1
    %p144 = por %p142, %p143
    %p145 = scmp.ne.s32.totalorder %s136, %s137
    %p146 = scmp.eq.s32.totalorder %s30, 0
    %p147 = por %p145, %p146
    %p148 = scmp.ne.s32.totalorder %s136, %s137
    %p149 = scmp.eq.s32.totalorder %s31, 1
    %p150 = por %p148, %p149
    %p152 = scmp.ne.s32.totalorder %s137, %s151
    %p153 = scmp.eq.s32.totalorder %s31, 0
    %p154 = por %p152, %p153
    %s155 = ssub.s32 %s33, %s40
    %p156 = scmp.eq.s32.totalorder %s155, 0
    %s158 = sadd.s32 %s157, 1
    %s159 = scalar_select %p156, %s157, %s158
    %p162 = pneg %p156
    %p163 = scmp.eq.s32.totalorder %s25, 1
    %p164 = por %p162, %p163
    %p165 = scmp.ne.s32.totalorder %s157, %s160
    %p166 = scmp.eq.s32.totalorder %s25, 0
    %p167 = por %p165, %p166
    %p168 = scmp.ne.s32.totalorder %s157, %s160
    %p169 = scmp.eq.s32.totalorder %s30, 1
    %p170 = por %p168, %p169
    %p171 = scmp.ne.s32.totalorder %s160, %s161
    %p172 = scmp.eq.s32.totalorder %s30, 0
    %p173 = por %p171, %p172
    %p174 = scmp.ne.s32.totalorder %s160, %s161
    %p175 = scmp.eq.s32.totalorder %s31, 1
    %p176 = por %p174, %p175
    %p178 = scmp.ne.s32.totalorder %s161, %s177
    %p179 = scmp.eq.s32.totalorder %s31, 0
    %p180 = por %p178, %p179
    %s181 = ssub.s32 %s33, %s40
    %p182 = scmp.eq.s32.totalorder %s181, 0
    %s184 = sadd.s32 %s183, 1
    %s185 = scalar_select %p182, %s183, %s184
    %p188 = pneg %p182
    %p189 = scmp.eq.s32.totalorder %s25, 1
    %p190 = por %p188, %p189
    %p191 = scmp.ne.s32.totalorder %s183, %s186
    %p192 = scmp.eq.s32.totalorder %s25, 0
    %p193 = por %p191, %p192
    %p194 = scmp.ne.s32.totalorder %s183, %s186
    %p195 = scmp.eq.s32.totalorder %s30, 1
    %p196 = por %p194, %p195
    %p197 = scmp.ne.s32.totalorder %s186, %s187
    %p198 = scmp.eq.s32.totalorder %s30, 0
    %p199 = por %p197, %p198
    %p200 = scmp.ne.s32.totalorder %s186, %s187
    %p201 = scmp.eq.s32.totalorder %s31, 1
    %p202 = por %p200, %p201
    %p204 = scmp.ne.s32.totalorder %s187, %s203
    %p205 = scmp.eq.s32.totalorder %s31, 0
    %p206 = por %p204, %p205
    %s207 = ssub.s32 %s33, %s40
    %p208 = scmp.eq.s32.totalorder %s207, 0
    %s210 = sadd.s32 %s209, 1
    %s211 = scalar_select %p208, %s209, %s210
    %p214 = pneg %p208
    %p215 = scmp.eq.s32.totalorder %s25, 1
    %p216 = por %p214, %p215
    %p217 = scmp.ne.s32.totalorder %s209, %s212
    %p218 = scmp.eq.s32.totalorder %s25, 0
    %p219 = por %p217, %p218
    %p220 = scmp.ne.s32.totalorder %s209, %s212
    %p221 = scmp.eq.s32.totalorder %s30, 1
    %p222 = por %p220, %p221
    %p223 = scmp.ne.s32.totalorder %s212, %s213
    %p224 = scmp.eq.s32.totalorder %s30, 0
    %p225 = por %p223, %p224
    %p226 = scmp.ne.s32.totalorder %s212, %s213
    %p227 = scmp.eq.s32.totalorder %s31, 1
    %p228 = por %p226, %p227
    %p230 = scmp.ne.s32.totalorder %s213, %s229
    %p231 = scmp.eq.s32.totalorder %s31, 0
    %p232 = por %p230, %p231
    %s233 = ssub.s32 %s33, %s40
    %p234 = scmp.eq.s32.totalorder %s233, 0
    %s236 = sadd.s32 %s235, 1
    %s237 = scalar_select %p234, %s235, %s236
    %p240 = pneg %p234
    %p241 = scmp.eq.s32.totalorder %s25, 1
    %p242 = por %p240, %p241
    %p243 = scmp.ne.s32.totalorder %s235, %s238
    %p244 = scmp.eq.s32.totalorder %s25, 0
    %p245 = por %p243, %p244
    %p246 = scmp.ne.s32.totalorder %s235, %s238
    %p247 = scmp.eq.s32.totalorder %s30, 1
    %p248 = por %p246, %p247
    %p249 = scmp.ne.s32.totalorder %s238, %s239
    %p250 = scmp.eq.s32.totalorder %s30, 0
    %p251 = por %p249, %p250
    %p252 = scmp.ne.s32.totalorder %s238, %s239
    %p253 = scmp.eq.s32.totalorder %s31, 1
    %p254 = por %p252, %p253
    %p256 = scmp.ne.s32.totalorder %s239, %s255
    %p257 = scmp.eq.s32.totalorder %s31, 0
    %p258 = por %p256, %p257
    %s259 = ssub.s32 %s33, %s40
    %p260 = scmp.eq.s32.totalorder %s259, 0
    %s262 = sadd.s32 %s261, 1
    %s263 = scalar_select %p260, %s261, %s262
    %p266 = pneg %p260
    %p267 = scmp.eq.s32.totalorder %s25, 1
    %p268 = por %p266, %p267
    %p269 = scmp.ne.s32.totalorder %s261, %s264
    %p270 = scmp.eq.s32.totalorder %s25, 0
    %p271 = por %p269, %p270
    %p272 = scmp.ne.s32.totalorder %s261, %s264
    %p273 = scmp.eq.s32.totalorder %s30, 1
    %p274 = por %p272, %p273
    %p275 = scmp.ne.s32.totalorder %s264, %s265
    %p276 = scmp.eq.s32.totalorder %s30, 0
    %p277 = por %p275, %p276
    %p278 = scmp.ne.s32.totalorder %s264, %s265
    %p279 = scmp.eq.s32.totalorder %s31, 1
    %p280 = por %p278, %p279
    %p282 = scmp.ne.s32.totalorder %s265, %s281
    %p283 = scmp.eq.s32.totalorder %s31, 0
    %p284 = por %p282, %p283
    %s285 = ssub.s32 %s33, %s40
    %p286 = scmp.eq.s32.totalorder %s285, 0
    %s288 = sadd.s32 %s287, 1
    %s289 = scalar_select %p286, %s287, %s288
    %p292 = pneg %p286
    %p293 = scmp.eq.s32.totalorder %s25, 1
    %p294 = por %p292, %p293
    %p295 = scmp.ne.s32.totalorder %s287, %s290
    %p296 = scmp.eq.s32.totalorder %s25, 0
    %p297 = por %p295, %p296
    %p298 = scmp.ne.s32.totalorder %s287, %s290
    %p299 = scmp.eq.s32.totalorder %s30, 1
    %p300 = por %p298, %p299
    %p301 = scmp.ne.s32.totalorder %s290, %s291
    %p302 = scmp.eq.s32.totalorder %s30, 0
    %p303 = por %p301, %p302
    %p304 = scmp.ne.s32.totalorder %s290, %s291
    %p305 = scmp.eq.s32.totalorder %s31, 1
    %p306 = por %p304, %p305
    %p308 = scmp.ne.s32.totalorder %s291, %s307
    %p309 = scmp.eq.s32.totalorder %s31, 0
    %p310 = por %p308, %p309
    %s311 = ssub.s32 %s33, %s40
    %p312 = scmp.eq.s32.totalorder %s311, 0
    %s314 = sadd.s32 %s313, 1
    %s315 = scalar_select %p312, %s313, %s314
    %p318 = pneg %p312
    %p319 = scmp.eq.s32.totalorder %s25, 1
    %p320 = por %p318, %p319
    %p321 = scmp.ne.s32.totalorder %s313, %s316
    %p322 = scmp.eq.s32.totalorder %s25, 0
    %p323 = por %p321, %p322
    %p324 = scmp.ne.s32.totalorder %s313, %s316
    %p325 = scmp.eq.s32.totalorder %s30, 1
    %p326 = por %p324, %p325
    %p327 = scmp.ne.s32.totalorder %s316, %s317
    %p328 = scmp.eq.s32.totalorder %s30, 0
    %p329 = por %p327, %p328
    %p330 = scmp.ne.s32.totalorder %s316, %s317
    %p331 = scmp.eq.s32.totalorder %s31, 1
    %p332 = por %p330, %p331
    %p334 = scmp.ne.s32.totalorder %s317, %s333
    %p335 = scmp.eq.s32.totalorder %s31, 0
    %p336 = por %p334, %p335
    %s337 = ssub.s32 %s33, %s40
    %p338 = scmp.eq.s32.totalorder %s337, 0
    %s340 = sadd.s32 %s339, 1
    %s341 = scalar_select %p338, %s339, %s340
    %p344 = pneg %p338
    %p345 = scmp.eq.s32.totalorder %s25, 1
    %p346 = por %p344, %p345
    %p347 = scmp.ne.s32.totalorder %s339, %s342
    %p348 = scmp.eq.s32.totalorder %s25, 0
    %p349 = por %p347, %p348
    %p350 = scmp.ne.s32.totalorder %s339, %s342
    %p351 = scmp.eq.s32.totalorder %s30, 1
    %p352 = por %p350, %p351
    %p353 = scmp.ne.s32.totalorder %s342, %s343
    %p354 = scmp.eq.s32.totalorder %s30, 0
    %p355 = por %p353, %p354
    %p356 = scmp.ne.s32.totalorder %s342, %s343
    %p357 = scmp.eq.s32.totalorder %s31, 1
    %p358 = por %p356, %p357
    %p360 = scmp.ne.s32.totalorder %s343, %s359
    %p361 = scmp.eq.s32.totalorder %s31, 0
    %p362 = por %p360, %p361
    %s363 = ssub.s32 %s33, %s40
    %p364 = scmp.eq.s32.totalorder %s363, 0
    %s366 = sadd.s32 %s365, 1
    %s367 = scalar_select %p364, %s365, %s366
    %p370 = pneg %p364
    %p371 = scmp.eq.s32.totalorder %s25, 1
    %p372 = por %p370, %p371
    %p373 = scmp.ne.s32.totalorder %s365, %s368
    %p374 = scmp.eq.s32.totalorder %s25, 0
    %p375 = por %p373, %p374
    %p376 = scmp.ne.s32.totalorder %s365, %s368
    %p377 = scmp.eq.s32.totalorder %s30, 1
    %p378 = por %p376, %p377
    %p379 = scmp.ne.s32.totalorder %s368, %s369
    %p380 = scmp.eq.s32.totalorder %s30, 0
    %p381 = por %p379, %p380
    %p382 = scmp.ne.s32.totalorder %s368, %s369
    %p383 = scmp.eq.s32.totalorder %s31, 1
    %p384 = por %p382, %p383
    %p386 = scmp.ne.s32.totalorder %s369, %s385
    %p387 = scmp.eq.s32.totalorder %s31, 0
    %p388 = por %p386, %p387
    %s389 = ssub.s32 %s33, %s40
    %p390 = scmp.eq.s32.totalorder %s389, 0
    %s392 = sadd.s32 %s391, 1
    %s393 = scalar_select %p390, %s391, %s392
    %p396 = pneg %p390
    %p397 = scmp.eq.s32.totalorder %s25, 1
    %p398 = por %p396, %p397
    %p399 = scmp.ne.s32.totalorder %s391, %s394
    %p400 = scmp.eq.s32.totalorder %s25, 0
    %p401 = por %p399, %p400
    %p402 = scmp.ne.s32.totalorder %s391, %s394
    %p403 = scmp.eq.s32.totalorder %s30, 1
    %p404 = por %p402, %p403
    %p405 = scmp.ne.s32.totalorder %s394, %s395
    %p406 = scmp.eq.s32.totalorder %s30, 0
    %p407 = por %p405, %p406
    %p408 = scmp.ne.s32.totalorder %s394, %s395
    %p409 = scmp.eq.s32.totalorder %s31, 1
    %p410 = por %p408, %p409
    %p412 = scmp.ne.s32.totalorder %s395, %s411
    %p413 = scmp.eq.s32.totalorder %s31, 0
    %p414 = por %p412, %p413
    %s416 = sadd.s32 %s415, 1
    %p419 = scmp.eq.s32.totalorder %s25, 1
    %p420 = scmp.ne.s32.totalorder %s415, %s417
    %p421 = scmp.eq.s32.totalorder %s25, 0
    %p422 = por %p420, %p421
    %p423 = scmp.ne.s32.totalorder %s415, %s417
    %p424 = scmp.eq.s32.totalorder %s30, 1
    %p425 = por %p423, %p424
    %p426 = scmp.ne.s32.totalorder %s417, %s418
    %p427 = scmp.eq.s32.totalorder %s30, 0
    %p428 = por %p426, %p427
    %p429 = scmp.ne.s32.totalorder %s417, %s418
    %p430 = scmp.eq.s32.totalorder %s31, 1
    %p431 = por %p429, %p430
    %p433 = scmp.ne.s32.totalorder %s418, %s432
    %p434 = scmp.eq.s32.totalorder %s31, 0
    %p435 = por %p433, %p434
    %s437 = sadd.s32 %s436, 1
    %p440 = scmp.eq.s32.totalorder %s25, 1
    %p441 = scmp.ne.s32.totalorder %s436, %s438
    %p442 = scmp.eq.s32.totalorder %s25, 0
    %p443 = por %p441, %p442
    %p444 = scmp.ne.s32.totalorder %s436, %s438
    %p445 = scmp.eq.s32.totalorder %s30, 1
    %p446 = por %p444, %p445
    %p447 = scmp.ne.s32.totalorder %s438, %s439
    %p448 = scmp.eq.s32.totalorder %s30, 0
    %p449 = por %p447, %p448
    %p450 = scmp.ne.s32.totalorder %s438, %s439
    %p451 = scmp.eq.s32.totalorder %s31, 1
    %p452 = por %p450, %p451
    %p454 = scmp.ne.s32.totalorder %s439, %s453
    %p455 = scmp.eq.s32.totalorder %s31, 0
    %p456 = por %p454, %p455
    %s457 = ssub.s32 %s32, %s44
    %p458 = scmp.eq.s32.totalorder %s457, 0
    %s460 = sadd.s32 %s459, 1
    %s461 = scalar_select %p458, %s459, %s460
    %p464 = pneg %p458
    %p465 = scmp.eq.s32.totalorder %s25, 1
    %p466 = por %p464, %p465
    %p467 = scmp.ne.s32.totalorder %s459, %s462
    %p468 = scmp.eq.s32.totalorder %s25, 0
    %p469 = por %p467, %p468
    %p470 = scmp.ne.s32.totalorder %s459, %s462
    %p471 = scmp.eq.s32.totalorder %s30, 1
    %p472 = por %p470, %p471
    %p473 = scmp.ne.s32.totalorder %s462, %s463
    %p474 = scmp.eq.s32.totalorder %s30, 0
    %p475 = por %p473, %p474
    %p476 = scmp.ne.s32.totalorder %s462, %s463
    %p477 = scmp.eq.s32.totalorder %s31, 1
    %p478 = por %p476, %p477
    %p480 = scmp.ne.s32.totalorder %s463, %s479
    %p481 = scmp.eq.s32.totalorder %s31, 0
    %p482 = por %p480, %p481
    %p483 = scmp.le.s32.totalorder 1, %s25
    %p484 = scmp.lt.s32.totalorder %s25, 3
    %p485 = pnand %p483, %p484
    %p486 = pneg %p485
    // Predicated region
    $region9: #{vit_forward.1} parent=5 // pred_check
      _
    $region10: #{vit_forward.1} parent=5 // pred_check_branch
      %488 = sbr.rel (%p485) target = $region12
    $region11: #{vit_forward.1} parent=5 // pred_region
      %s489 = ssub.s32 %s25, 1
      // Predicated region
      $region13: #{vit_forward.1} parent=11 // pred_check
        %p490 = pneg %p63
      $region14: #{vit_forward.1} parent=11 // pred_check_branch
        %492 = sbr.rel (%p490) target = $region16
      $region15: #{vit_forward.1} parent=11 // pred_region
        %s493 = smul.u32 8, %s34
        %p494 = scmp.lt.s32.totalorder %s493, 7
        %s495 = scalar_select %p494, %s493, 7
        %s496 = smul.addr %s495, 8
        %s497 = scalar_lea.vmem %s0, %s496
        %s498 = smul.u32 8, %s34
      $region16: #{vit_forward.1} parent=11 // pred_fallthru
        _
      // Predicated region
      $region17: #{vit_forward.1} parent=11 // pred_check
        %p499 = pneg %p84
      $region18: #{vit_forward.1} parent=11 // pred_check_branch
        %501 = sbr.rel (%p499) target = $region20
      $region19: #{vit_forward.1} parent=11 // pred_region
        _
      $region20: #{vit_forward.1} parent=11 // pred_fallthru
        _
      // Predicated region
      $region21: #{vit_forward.1} parent=11 // pred_check
        %p502 = pneg %p105
      $region22: #{vit_forward.1} parent=11 // pred_check_branch
        %504 = sbr.rel (%p502) target = $region24
      $region23: #{vit_forward.1} parent=11 // pred_region
        _
      $region24: #{vit_forward.1} parent=11 // pred_fallthru
        _
      // Predicated region
      $region25: #{vit_forward.1} parent=11 // pred_check
        %p505 = pneg %p126
      $region26: #{vit_forward.1} parent=11 // pred_check_branch
        %507 = sbr.rel (%p505) target = $region28
      $region27: #{vit_forward.1} parent=11 // pred_region
        _
      $region28: #{vit_forward.1} parent=11 // pred_fallthru
        _
      // Predicated region
      $region29: #{vit_forward.1} parent=11 // pred_check
        %p508 = pneg %p147
      $region30: #{vit_forward.1} parent=11 // pred_check_branch
        %510 = sbr.rel (%p508) target = $region32
      $region31: #{vit_forward.1} parent=11 // pred_region
        _
      $region32: #{vit_forward.1} parent=11 // pred_fallthru
        _
      // Predicated region
      $region33: #{vit_forward.1} parent=11 // pred_check
        %p511 = pneg %p428
      $region34: #{vit_forward.1} parent=11 // pred_check_branch
        %513 = sbr.rel (%p511) target = $region36
      $region35: #{vit_forward.1} parent=11 // pred_region
        _
      $region36: #{vit_forward.1} parent=11 // pred_fallthru
        _
      // Predicated region
      $region37: #{vit_forward.1} parent=11 // pred_check
        %p514 = pneg %p449
      $region38: #{vit_forward.1} parent=11 // pred_check_branch
        %516 = sbr.rel (%p514) target = $region40
      $region39: #{vit_forward.1} parent=11 // pred_region
        _
      $region40: #{vit_forward.1} parent=11 // pred_fallthru
        _
    $region12: #{vit_forward.1} parent=5 // pred_fallthru
      _
    %p517 = scmp.lt.s32.totalorder %s25, 2
    // Predicated region
    $region41: #{vit_forward.1} parent=5 // pred_check
      %p518 = pneg %p517
    $region42: #{vit_forward.1} parent=5 // pred_check_branch
      %520 = sbr.rel (%p518) target = $region44
    $region43: #{vit_forward.1} parent=5 // pred_region
      // Predicated region
      $region45: #{vit_forward.1} parent=43 // pred_check
        %p521 = pneg %p167
      $region46: #{vit_forward.1} parent=43 // pred_check_branch
        %523 = sbr.rel (%p521) target = $region48
      $region47: #{vit_forward.1} parent=43 // pred_region
        %p524 = scmp.lt.s32.totalorder %s33, 1
        %s525 = scalar_select %p524, %s33, 1
        %s526 = scalar_lea.vmem %s5, %s525
      $region48: #{vit_forward.1} parent=43 // pred_fallthru
        _
      // Predicated region
      $region49: #{vit_forward.1} parent=43 // pred_check
        %p527 = pneg %p193
      $region50: #{vit_forward.1} parent=43 // pred_check_branch
        %529 = sbr.rel (%p527) target = $region52
      $region51: #{vit_forward.1} parent=43 // pred_region
        %p530 = scmp.lt.s32.totalorder %s33, 1
        %s531 = scalar_select %p530, %s33, 1
        %s532 = scalar_lea.vmem %s6, %s531
      $region52: #{vit_forward.1} parent=43 // pred_fallthru
        _
      // Predicated region
      $region53: #{vit_forward.1} parent=43 // pred_check
        %p533 = pneg %p219
      $region54: #{vit_forward.1} parent=43 // pred_check_branch
        %535 = sbr.rel (%p533) target = $region56
      $region55: #{vit_forward.1} parent=43 // pred_region
        %p536 = scmp.lt.s32.totalorder %s33, 1
        %s537 = scalar_select %p536, %s33, 1
        %s538 = smul.addr %s537, 4
        %s539 = smul.addr %s538, 8
        %s540 = scalar_lea.vmem %s7, %s539
      $region56: #{vit_forward.1} parent=43 // pred_fallthru
        _
      // Predicated region
      $region57: #{vit_forward.1} parent=43 // pred_check
        %p541 = pneg %p245
      $region58: #{vit_forward.1} parent=43 // pred_check_branch
        %543 = sbr.rel (%p541) target = $region60
      $region59: #{vit_forward.1} parent=43 // pred_region
        %p544 = scmp.lt.s32.totalorder %s33, 1
        %s545 = scalar_select %p544, %s33, 1
        %s546 = scalar_lea.vmem %s8, %s545
      $region60: #{vit_forward.1} parent=43 // pred_fallthru
        _
      // Predicated region
      $region61: #{vit_forward.1} parent=43 // pred_check
        %p547 = pneg %p271
      $region62: #{vit_forward.1} parent=43 // pred_check_branch
        %549 = sbr.rel (%p547) target = $region64
      $region63: #{vit_forward.1} parent=43 // pred_region
        %p550 = scmp.lt.s32.totalorder %s33, 1
        %s551 = scalar_select %p550, %s33, 1
        %s552 = scalar_lea.vmem %s9, %s551
      $region64: #{vit_forward.1} parent=43 // pred_fallthru
        _
      // Predicated region
      $region65: #{vit_forward.1} parent=43 // pred_check
        %p553 = pneg %p297
      $region66: #{vit_forward.1} parent=43 // pred_check_branch
        %555 = sbr.rel (%p553) target = $region68
      $region67: #{vit_forward.1} parent=43 // pred_region
        %p556 = scmp.lt.s32.totalorder %s33, 1
        %s557 = scalar_select %p556, %s33, 1
        %s558 = scalar_lea.vmem %s10, %s557
      $region68: #{vit_forward.1} parent=43 // pred_fallthru
        _
      // Predicated region
      $region69: #{vit_forward.1} parent=43 // pred_check
        %p559 = pneg %p323
      $region70: #{vit_forward.1} parent=43 // pred_check_branch
        %561 = sbr.rel (%p559) target = $region72
      $region71: #{vit_forward.1} parent=43 // pred_region
        %p562 = scmp.lt.s32.totalorder %s33, 1
        %s563 = scalar_select %p562, %s33, 1
        %s564 = smul.addr %s563, 4
        %s565 = smul.addr %s564, 8
        %s566 = scalar_lea.vmem %s11, %s565
      $region72: #{vit_forward.1} parent=43 // pred_fallthru
        _
      // Predicated region
      $region73: #{vit_forward.1} parent=43 // pred_check
        %p567 = pneg %p349
      $region74: #{vit_forward.1} parent=43 // pred_check_branch
        %569 = sbr.rel (%p567) target = $region76
      $region75: #{vit_forward.1} parent=43 // pred_region
        %p570 = scmp.lt.s32.totalorder %s33, 1
        %s571 = scalar_select %p570, %s33, 1
        %s572 = scalar_lea.vmem %s12, %s571
      $region76: #{vit_forward.1} parent=43 // pred_fallthru
        _
      // Predicated region
      $region77: #{vit_forward.1} parent=43 // pred_check
        %p573 = pneg %p375
      $region78: #{vit_forward.1} parent=43 // pred_check_branch
        %575 = sbr.rel (%p573) target = $region80
      $region79: #{vit_forward.1} parent=43 // pred_region
        %p576 = scmp.lt.s32.totalorder %s33, 1
        %s577 = scalar_select %p576, %s33, 1
        %s578 = smul.addr %s577, 16
        %s579 = smul.addr %s578, 8
        %s580 = scalar_lea.vmem %s13, %s579
      $region80: #{vit_forward.1} parent=43 // pred_fallthru
        _
      // Predicated region
      $region81: #{vit_forward.1} parent=43 // pred_check
        %p581 = pneg %p401
      $region82: #{vit_forward.1} parent=43 // pred_check_branch
        %583 = sbr.rel (%p581) target = $region84
      $region83: #{vit_forward.1} parent=43 // pred_region
        %p584 = scmp.lt.s32.totalorder %s33, 1
        %s585 = scalar_select %p584, %s33, 1
        %s586 = scalar_lea.vmem %s14, %s585
      $region84: #{vit_forward.1} parent=43 // pred_fallthru
        _
    $region44: #{vit_forward.1} parent=5 // pred_fallthru
      _
    %p587 = scmp.le.s32.totalorder 1, %s25
    %p588 = scmp.lt.s32.totalorder %s25, 3
    %p589 = pnand %p587, %p588
    %p590 = pneg %p589
    // Predicated region
    $region85: #{vit_forward.1} parent=5 // pred_check
      _
    $region86: #{vit_forward.1} parent=5 // pred_check_branch
      %592 = sbr.rel (%p589) target = $region88
    $region87: #{vit_forward.1} parent=5 // pred_region
      %s593 = ssub.s32 %s25, 1
      %s594 = smul.u32 8, %s34
      %p595 = scmp.lt.s32.totalorder %s594, 7
      %s596 = scalar_select %p595, %s594, 7
      %s597 = smul.addr %s596, 8
      %s598 = scalar_lea.vmem %s0, %s597
      %p599 = pneg %p63
      %p600 = pneg %p60
      %p601 = pneg %p84
      %p602 = pneg %p81
      %p603 = pneg %p105
      %p604 = pneg %p102
      %p605 = pneg %p126
      %p606 = pneg %p123
      %p607 = pneg %p147
      %p608 = pneg %p144
      %p609 = scmp.lt.s32.totalorder %s35, 1
      %s610 = scalar_select %p609, %s35, 1
      %s611 = scalar_lea.vmem %s5, %s610
      %p612 = pneg %p173
      %p613 = pneg %p170
      %p614 = scmp.lt.s32.totalorder %s35, 1
      %s615 = scalar_select %p614, %s35, 1
      %s616 = scalar_lea.vmem %s6, %s615
      %p617 = pneg %p199
      %p618 = pneg %p196
      %p619 = scmp.lt.s32.totalorder %s35, 1
      %s620 = scalar_select %p619, %s35, 1
      %s621 = smul.addr %s620, 4
      %s622 = smul.addr %s621, 8
      %s623 = scalar_lea.vmem %s7, %s622
      %p624 = pneg %p225
      %p625 = pneg %p222
      %p626 = scmp.lt.s32.totalorder %s35, 1
      %s627 = scalar_select %p626, %s35, 1
      %s628 = scalar_lea.vmem %s8, %s627
      %p629 = pneg %p251
      %p630 = pneg %p248
      %p631 = scmp.lt.s32.totalorder %s35, 1
      %s632 = scalar_select %p631, %s35, 1
      %s633 = scalar_lea.vmem %s9, %s632
      %p634 = pneg %p277
      %p635 = pneg %p274
      %p636 = scmp.lt.s32.totalorder %s35, 1
      %s637 = scalar_select %p636, %s35, 1
      %s638 = scalar_lea.vmem %s10, %s637
      %p639 = pneg %p303
      %p640 = pneg %p300
      %p641 = scmp.lt.s32.totalorder %s35, 1
      %s642 = scalar_select %p641, %s35, 1
      %s643 = smul.addr %s642, 4
      %s644 = smul.addr %s643, 8
      %s645 = scalar_lea.vmem %s11, %s644
      %p646 = pneg %p329
      %p647 = pneg %p326
      %p648 = scmp.lt.s32.totalorder %s35, 1
      %s649 = scalar_select %p648, %s35, 1
      %s650 = scalar_lea.vmem %s12, %s649
      %p651 = pneg %p355
      %p652 = pneg %p352
      %p653 = scmp.lt.s32.totalorder %s35, 1
      %s654 = scalar_select %p653, %s35, 1
      %s655 = smul.addr %s654, 16
      %s656 = smul.addr %s655, 8
      %s657 = scalar_lea.vmem %s13, %s656
      %p658 = pneg %p381
      %p659 = pneg %p378
      %p660 = scmp.lt.s32.totalorder %s35, 1
      %s661 = scalar_select %p660, %s35, 1
      %s662 = scalar_lea.vmem %s14, %s661
      %p663 = pneg %p407
      %p664 = pneg %p404
      %p665 = pneg %p428
      %p666 = pneg %p425
      %p667 = pneg %p449
      %p668 = pneg %p446
      %p669 = pneg %p475
      %p670 = pneg %p472
      %s671 = smul.u32 2, %s34
      %p672 = scmp.lt.s32.totalorder %s671, 1
      %s673 = scalar_select %p672, %s671, 1
      %s674 = scalar_lea.vmem %s17, %s673
      %s675 = smul.u32 8, %s34
      %p676 = scmp.lt.s32.totalorder %s675, 7
      %s677 = scalar_select %p676, %s675, 7
      %s678 = smul.addr %s677, 8
      %s679 = scalar_lea.vmem %s0, %s678
      %s680 = smul.u32 8, %s34
      %p681 = scmp.lt.s32.totalorder %s35, 1
      %s682 = scalar_select %p681, %s35, 1
      %s683 = scalar_lea.vmem %s5, %s682
      %p684 = scmp.lt.s32.totalorder %s35, 1
      %s685 = scalar_select %p684, %s35, 1
      %s686 = scalar_lea.vmem %s6, %s685
      %p687 = scmp.lt.s32.totalorder %s35, 1
      %s688 = scalar_select %p687, %s35, 1
      %s689 = smul.addr %s688, 4
      %s690 = smul.addr %s689, 8
      %s691 = scalar_lea.vmem %s7, %s690
      %p692 = scmp.lt.s32.totalorder %s35, 1
      %s693 = scalar_select %p692, %s35, 1
      %s694 = scalar_lea.vmem %s8, %s693
      %p695 = scmp.lt.s32.totalorder %s35, 1
      %s696 = scalar_select %p695, %s35, 1
      %s697 = scalar_lea.vmem %s9, %s696
      %p698 = scmp.lt.s32.totalorder %s35, 1
      %s699 = scalar_select %p698, %s35, 1
      %s700 = scalar_lea.vmem %s10, %s699
      %p701 = scmp.lt.s32.totalorder %s35, 1
      %s702 = scalar_select %p701, %s35, 1
      %s703 = smul.addr %s702, 4
      %s704 = smul.addr %s703, 8
      %s705 = scalar_lea.vmem %s11, %s704
      %p706 = scmp.lt.s32.totalorder %s35, 1
      %s707 = scalar_select %p706, %s35, 1
      %s708 = scalar_lea.vmem %s12, %s707
      %p709 = scmp.lt.s32.totalorder %s35, 1
      %s710 = scalar_select %p709, %s35, 1
      %s711 = smul.addr %s710, 16
      %s712 = smul.addr %s711, 8
      %s713 = scalar_lea.vmem %s13, %s712
      %p714 = scmp.lt.s32.totalorder %s35, 1
      %s715 = scalar_select %p714, %s35, 1
      %s716 = scalar_lea.vmem %s14, %s715
      %s717 = smul.u32 2, %s34
      %p718 = scmp.lt.s32.totalorder %s717, 1
      %s719 = scalar_select %p718, %s717, 1
      %s720 = scalar_lea.vmem %s17, %s719
      %s721 = smul.u32 2, %s34
      %p722 = scmp.eq.s32.totalorder %s35, 0
      // Predicated region
      $region89: #{vit_forward.1} parent=87 // pred_check
        %p723 = pneg %p722
      $region90: #{vit_forward.1} parent=87 // pred_check_branch
        %725 = sbr.rel (%p723) target = $region92
      $region91: #{vit_forward.1} parent=87 // pred_region
        %v726 = vld [vmem:[%s1] sm:$0xff]
        %v727 = vld [vmem:[%s1 + $0x8] sm:$0xff]
        %v728 = vld [vmem:[%s1 + $0x10] sm:$0xff]
        %v729 = vld [vmem:[%s1 + $0x18] sm:$0xff]
        %v730 = vld [vmem:[%s1 + $0x20] sm:$0xff]
        %v731 = vld [vmem:[%s1 + $0x28] sm:$0xff]
        %v732 = vld [vmem:[%s1 + $0x30] sm:$0xff]
        %v733 = vld [vmem:[%s1 + $0x38] sm:$0xff]
        %v734 = vld [vmem:[%s679] sm:$0xff]
        %v735 = vld [vmem:[%s679 + $0x8] sm:$0xff]
        %v736 = vld [vmem:[%s679 + $0x10] sm:$0xff]
        %v737 = vld [vmem:[%s679 + $0x18] sm:$0xff]
        %v738 = vld [vmem:[%s679 + $0x20] sm:$0xff]
        %v739 = vld [vmem:[%s679 + $0x28] sm:$0xff]
        %v740 = vld [vmem:[%s679 + $0x30] sm:$0xff]
        %v741 = vld [vmem:[%s679 + $0x38] sm:$0xff]
        %v742 = vld [vmem:[%s2] sm:$0x1]
        %v744 = vlaneseq
        %v745 = vshrl.u32 %v744, 7
        %v746 = vsub.s32 0, %v745
        %v747 = vrot.slane %v742, %v746
        %vm749 = vcmask 523264
        %v751 = vsel %vm749, %v734, 0
        %v754 = vsel %vm749, %v735, 0
        %v757 = vsel %vm749, %v736, 0
        %v760 = vsel %vm749, %v737, 0
        %v763 = vsel %vm749, %v738, 0
        %v766 = vsel %vm749, %v739, 0
        %v769 = vsel %vm749, %v740, 0
        %v772 = vsel %vm749, %v741, 0
        %774 = vmatprep.subr.mxu0 0.0
        %775 = vmatpush1.msra.mxu0 %v726
        %776 = vmatprep.subr.mxu0 0.0
        %777 = vmatpush1.msra.mxu0 %v727
        %778 = vmatprep.subr.mxu0 0.0
        %779 = vmatpush1.msra.mxu0 %v728
        %780 = vmatprep.subr.mxu0 0.0
        %781 = vmatpush1.msra.mxu0 %v729
        %782 = vmatprep.subr.mxu0 0.0
        %783 = vmatpush1.msra.mxu0 %v730
        %784 = vmatprep.subr.mxu0 0.0
        %785 = vmatpush1.msra.mxu0 %v731
        %786 = vmatprep.subr.mxu0 0.0
        %787 = vmatpush1.msra.mxu0 %v732
        %788 = vmatprep.subr.mxu0 0.0
        %789 = vmatpush1.msra.mxu0 %v733
        %790 = vmatprep.subr.mxu0 0.0
        %791 = vmatpush1.msra.mxu0 0.0
        %792 = vmatprep.subr.mxu0 0.0
        %793 = vmatpush1.msra.mxu0 0.0
        %794 = vmatprep.subr.mxu0 0.0
        %795 = vmatpush1.msra.mxu0 0.0
        %796 = vmatprep.subr.mxu0 0.0
        %797 = vmatpush1.msra.mxu0 0.0
        %798 = vmatprep.subr.mxu0 0.0
        %799 = vmatpush1.msra.mxu0 0.0
        %800 = vmatprep.subr.mxu0 0.0
        %801 = vmatpush1.msra.mxu0 0.0
        %802 = vmatprep.subr.mxu0 0.0
        %803 = vmatpush1.msra.mxu0 0.0
        %804 = vmatprep.subr.mxu0 0.0
        %805 = vmatpush1.msra.mxu0 0.0
        %806 = vmatprep.subr.mxu0 0.0
        %807 = vmatpush1.msra.mxu0 0.0
        %808 = vmatprep.subr.mxu0 0.0
        %809 = vmatpush1.msra.mxu0 0.0
        %810 = vmatprep.subr.mxu0 0.0
        %811 = vmatpush1.msra.mxu0 0.0
        %812 = vmatprep.subr.mxu0 0.0
        %813 = vmatpush1.msra.mxu0 0.0
        %814 = vmatprep.subr.mxu0 0.0
        %815 = vmatpush1.msra.mxu0 0.0
        %816 = vmatprep.subr.mxu0 0.0
        %817 = vmatpush1.msra.mxu0 0.0
        %818 = vmatprep.subr.mxu0 0.0
        %819 = vmatpush1.msra.mxu0 0.0
        %820 = vmatprep.subr.mxu0 0.0
        %821 = vmatpush1.msra.mxu0 0.0
        %822 = vmatprep.subr.mxu0 0.0
        %823 = vmatpush1.msra.mxu0 0.0
        %824 = vmatprep.subr.mxu0 0.0
        %825 = vmatpush1.msra.mxu0 0.0
        %826 = vmatprep.subr.mxu0 0.0
        %827 = vmatpush1.msra.mxu0 0.0
        %828 = vmatprep.subr.mxu0 0.0
        %829 = vmatpush1.msra.mxu0 0.0
        %830 = vmatprep.subr.mxu0 0.0
        %831 = vmatpush1.msra.mxu0 0.0
        %832 = vmatprep.subr.mxu0 0.0
        %833 = vmatpush1.msra.mxu0 0.0
        %834 = vmatprep.subr.mxu0 0.0
        %835 = vmatpush1.msra.mxu0 0.0
        %836 = vmatprep.subr.mxu0 0.0
        %837 = vmatpush1.msra.mxu0 0.0
        %838 = vmatprep.mubr.f32.mxu0 0.0
        %839 = vmatmul.mubr.f32.gmra.mrb[0].mxu0 %v751
        %v840 = vpop.f32.mrb[0].mxu0
        %v841 = vadd.f32 %v747, %v840
        %v842 = vpop.f32.mrb[0].mxu0
        %843 = vmatprep.mubr.f32.mxu0 0.0
        %844 = vmatmul.mubr.f32.gmra.mrb[0].mxu0 %v754
        %v845 = vpop.f32.mrb[0].mxu0
        %v846 = vadd.f32 %v747, %v845
        %v847 = vpop.f32.mrb[0].mxu0
        %848 = vmatprep.mubr.f32.mxu0 0.0
        %849 = vmatmul.mubr.f32.gmra.mrb[0].mxu0 %v757
        %v850 = vpop.f32.mrb[0].mxu0
        %v851 = vadd.f32 %v747, %v850
        %v852 = vpop.f32.mrb[0].mxu0
        %853 = vmatprep.mubr.f32.mxu0 0.0
        %854 = vmatmul.mubr.f32.gmra.mrb[0].mxu0 %v760
        %v855 = vpop.f32.mrb[0].mxu0
        %v856 = vadd.f32 %v747, %v855
        %v857 = vpop.f32.mrb[0].mxu0
        %858 = vmatprep.mubr.f32.mxu0 0.0
        %859 = vmatmul.mubr.f32.gmra.mrb[0].mxu0 %v763
        %v860 = vpop.f32.mrb[0].mxu0
        %v861 = vadd.f32 %v747, %v860
        %v862 = vpop.f32.mrb[0].mxu0
        %863 = vmatprep.mubr.f32.mxu0 0.0
        %864 = vmatmul.mubr.f32.gmra.mrb[0].mxu0 %v766
        %v865 = vpop.f32.mrb[0].mxu0
        %v866 = vadd.f32 %v747, %v865
        %v867 = vpop.f32.mrb[0].mxu0
        %868 = vmatprep.mubr.f32.mxu0 0.0
        %869 = vmatmul.mubr.f32.gmra.mrb[0].mxu0 %v769
        %v870 = vpop.f32.mrb[0].mxu0
        %v871 = vadd.f32 %v747, %v870
        %v872 = vpop.f32.mrb[0].mxu0
        %873 = vmatprep.mubr.f32.mxu0 0.0
        %874 = vmatmul.mubr.f32.gmra.mrb[0].mxu0 %v772
        %v875 = vpop.f32.mrb[0].mxu0
        %v876 = vadd.f32 %v747, %v875
        %v877 = vpop.f32.mrb[0].mxu0
        %878 = vdwg.mxu0
        %v879 = vld [vmem:[%s4] sm:$0xff]
        %v880 = vld [vmem:[%s4 + $0x8] sm:$0xff]
        %v881 = vld [vmem:[%s4 + $0x10] sm:$0xff]
        %v882 = vld [vmem:[%s4 + $0x18] sm:$0xff]
        %v883 = vld [vmem:[%s4 + $0x20] sm:$0x1]
        %v884 = vld [vmem:[%s3] sm:$0x1]
        %v885 = vadd.f32 %v884, %v879
        %vm891 = vcmask 1046528
        %v892 = vrot.slane %v879, 1
        %v893 = vrot.slane %v880, 1
        %v894 = vsel %vm891, %v892, %v893
        %v895 = vrot.slane %v881, 1
        %v896 = vsel %vm891, %v893, %v895
        %v897 = vrot.slane %v882, 1
        %v898 = vsel %vm891, %v895, %v897
        %v899 = vrot.slane %v883, 1
        %v900 = vsel %vm891, %v897, %v899
        %v905 = vadd.f32 %v841, %v894
        %v906 = vadd.f32 %v846, %v896
        %v907 = vadd.f32 %v851, %v898
        %v908 = vadd.f32 %v856, %v900
        %v909 = vadd.f32 %v861, %v894
        %v910 = vadd.f32 %v866, %v896
        %v911 = vadd.f32 %v871, %v898
        %v912 = vadd.f32 %v876, %v900
        %vm917 = vcmask 1040384
        %v918 = vrot.slane %v905, 7
        %v919 = vrot.slane %v906, 7
        %v920 = vsel %vm917, %v918, %v919
        %v921 = vrot.slane %v907, 7
        %v922 = vsel %vm917, %v919, %v921
        %v923 = vrot.slane %v908, 7
        %v924 = vsel %vm917, %v921, %v923
        %v931 = vlaneseq
        %v932 = vshrl.u32 %v931, 7
        %v933 = vsub.s32 0, %v932
        %v934 = vrot.slane %v885, %v933
        %vm940 = vcmask 1041408
        %v941 = vrot.slane %v909, 6
        %v942 = vrot.slane %v910, 6
        %v943 = vsel %vm940, %v941, %v942
        %v944 = vrot.slane %v911, 6
        %v945 = vsel %vm940, %v942, %v944
        %v946 = vrot.slane %v912, 6
        %v947 = vsel %vm940, %v944, %v946
        %v953 = vsel %vm917, %v885, %v918
        %v954 = vsel %vm917, %v923, %v934
        %v955 = vsel %vm940, %v954, %v941
        %vm956 = vcmask 261120
        %957 = vst.msk [vmem:[#allocation2] sm:$0xff] %vm956, %v953
        %958 = vst.msk [vmem:[#allocation2 + $0x8] sm:$0xff] %vm956, %v920
        %959 = vst.msk [vmem:[#allocation2 + $0x10] sm:$0xff] %vm956, %v922
        %960 = vst.msk [vmem:[#allocation2 + $0x18] sm:$0xff] %vm956, %v924
        %961 = vst.msk [vmem:[#allocation2 + $0x20] sm:$0xff] %vm956, %v955
        %962 = vst.msk [vmem:[#allocation2 + $0x28] sm:$0xff] %vm956, %v943
        %963 = vst.msk [vmem:[#allocation2 + $0x30] sm:$0xff] %vm956, %v945
        %964 = vst.msk [vmem:[#allocation2 + $0x38] sm:$0xff] %vm956, %v947
        %vm965 = vcmask 254976
        %966 = vst.msk [vmem:[#allocation2 + $0x40] sm:$0x3] %vm965, %v946
      $region92: #{vit_forward.1} parent=87 // pred_fallthru
        _
      %v967 = vld [vmem:[#allocation2] sm:$0xff]
      %v968 = vld [vmem:[#allocation2 + $0x8] sm:$0xff]
      %v969 = vld [vmem:[#allocation2 + $0x10] sm:$0xff]
      %v970 = vld [vmem:[#allocation2 + $0x18] sm:$0xff]
      %v971 = vld [vmem:[#allocation2 + $0x20] sm:$0xff]
      %v972 = vld [vmem:[#allocation2 + $0x28] sm:$0xff]
      %v973 = vld [vmem:[#allocation2 + $0x30] sm:$0xff]
      %v974 = vld [vmem:[#allocation2 + $0x38] sm:$0xff]
      %v975 = vld [vmem:[#allocation2 + $0x40] sm:$0x3]
      %v976 = vld [vmem:[%s683] sm:$0x1]
      %v977 = vld [vmem:[%s686] sm:$0x1]
      %vm978 = vcmask 261120
      %v979 = vsel %vm978, %v967, 0.0
      %980 = vadd.xlane.f32.xlu0 %v979
      %v981 = vpop.xlane.xlu0 %980
      %v982 = vsel %vm978, %v968, 0.0
      %983 = vadd.xlane.f32.xlu0 %v982
      %v984 = vpop.xlane.xlu0 %983
      %v985 = vsel %vm978, %v969, 0.0
      %986 = vadd.xlane.f32.xlu0 %v985
      %v987 = vpop.xlane.xlu0 %986
      %v988 = vsel %vm978, %v970, 0.0
      %989 = vadd.xlane.f32.xlu0 %v988
      %v990 = vpop.xlane.xlu0 %989
      %v991 = vsel %vm978, %v971, 0.0
      %992 = vadd.xlane.f32.xlu0 %v991
      %v993 = vpop.xlane.xlu0 %992
      %v994 = vsel %vm978, %v972, 0.0
      %995 = vadd.xlane.f32.xlu0 %v994
      %v996 = vpop.xlane.xlu0 %995
      %v997 = vsel %vm978, %v973, 0.0
      %998 = vadd.xlane.f32.xlu0 %v997
      %v999 = vpop.xlane.xlu0 %998
      %v1000 = vsel %vm978, %v974, 0.0
      %1001 = vadd.xlane.f32.xlu0 %v1000
      %v1002 = vpop.xlane.xlu0 %1001
      %vm1003 = vcmask 254976
      %v1004 = vsel %vm1003, %v975, 0.0
      %1005 = vadd.xlane.f32.xlu0 %v1004
      %v1006 = vpop.xlane.xlu0 %1005
      %v1007 = vmul.f32 %v967, %v967
      %v1008 = vmul.f32 %v968, %v968
      %v1009 = vmul.f32 %v969, %v969
      %v1010 = vmul.f32 %v970, %v970
      %v1011 = vmul.f32 %v971, %v971
      %v1012 = vmul.f32 %v972, %v972
      %v1013 = vmul.f32 %v973, %v973
      %v1014 = vmul.f32 %v974, %v974
      %v1015 = vmul.f32 %v975, %v975
      %v1016 = vsel %vm978, %v1007, 0.0
      %1017 = vadd.xlane.f32.xlu0 %v1016
      %v1018 = vpop.xlane.xlu0 %1017
      %v1019 = vsel %vm978, %v1008, 0.0
      %1020 = vadd.xlane.f32.xlu0 %v1019
      %v1021 = vpop.xlane.xlu0 %1020
      %v1022 = vsel %vm978, %v1009, 0.0
      %1023 = vadd.xlane.f32.xlu0 %v1022
      %v1024 = vpop.xlane.xlu0 %1023
      %v1025 = vsel %vm978, %v1010, 0.0
      %1026 = vadd.xlane.f32.xlu0 %v1025
      %v1027 = vpop.xlane.xlu0 %1026
      %v1028 = vsel %vm978, %v1011, 0.0
      %1029 = vadd.xlane.f32.xlu0 %v1028
      %v1030 = vpop.xlane.xlu0 %1029
      %v1031 = vsel %vm978, %v1012, 0.0
      %1032 = vadd.xlane.f32.xlu0 %v1031
      %v1033 = vpop.xlane.xlu0 %1032
      %v1034 = vsel %vm978, %v1013, 0.0
      %1035 = vadd.xlane.f32.xlu0 %v1034
      %v1036 = vpop.xlane.xlu0 %1035
      %v1037 = vsel %vm978, %v1014, 0.0
      %1038 = vadd.xlane.f32.xlu0 %v1037
      %v1039 = vpop.xlane.xlu0 %1038
      %v1040 = vsel %vm1003, %v1015, 0.0
      %1041 = vadd.xlane.f32.xlu0 %v1040
      %v1042 = vpop.xlane.xlu0 %1041
      %v1043 = vmul.f32 %v981, 0.03125
      %v1044 = vmul.f32 %v984, 0.03125
      %v1045 = vmul.f32 %v987, 0.03125
      %v1046 = vmul.f32 %v990, 0.03125
      %v1047 = vmul.f32 %v993, 0.03125
      %v1048 = vmul.f32 %v996, 0.03125
      %v1049 = vmul.f32 %v999, 0.03125
      %v1050 = vmul.f32 %v1002, 0.03125
      %v1051 = vmul.f32 %v1006, 0.03125
      %v1052 = vmul.f32 %v1018, 0.03125
      %v1053 = vmul.f32 %v1021, 0.03125
      %v1054 = vmul.f32 %v1024, 0.03125
      %v1055 = vmul.f32 %v1027, 0.03125
      %v1056 = vmul.f32 %v1030, 0.03125
      %v1057 = vmul.f32 %v1033, 0.03125
      %v1058 = vmul.f32 %v1036, 0.03125
      %v1059 = vmul.f32 %v1039, 0.03125
      %v1060 = vmul.f32 %v1042, 0.03125
      %v1061 = vmul.f32 %v1043, %v1043
      %v1062 = vmul.f32 %v1044, %v1044
      %v1063 = vmul.f32 %v1045, %v1045
      %v1064 = vmul.f32 %v1046, %v1046
      %v1065 = vmul.f32 %v1047, %v1047
      %v1066 = vmul.f32 %v1048, %v1048
      %v1067 = vmul.f32 %v1049, %v1049
      %v1068 = vmul.f32 %v1050, %v1050
      %v1069 = vmul.f32 %v1051, %v1051
      %v1070 = vsub.f32 %v1052, %v1061
      %v1071 = vsub.f32 %v1053, %v1062
      %v1072 = vsub.f32 %v1054, %v1063
      %v1073 = vsub.f32 %v1055, %v1064
      %v1074 = vsub.f32 %v1056, %v1065
      %v1075 = vsub.f32 %v1057, %v1066
      %v1076 = vsub.f32 %v1058, %v1067
      %v1077 = vsub.f32 %v1059, %v1068
      %v1078 = vsub.f32 %v1060, %v1069
      %v1079 = vsub.f32 %v967, %v1043
      %v1080 = vsub.f32 %v968, %v1044
      %v1081 = vsub.f32 %v969, %v1045
      %v1082 = vsub.f32 %v970, %v1046
      %v1083 = vsub.f32 %v971, %v1047
      %v1084 = vsub.f32 %v972, %v1048
      %v1085 = vsub.f32 %v973, %v1049
      %v1086 = vsub.f32 %v974, %v1050
      %v1087 = vsub.f32 %v975, %v1051
      %v1088 = vadd.f32 %v1070, 1e-05
      %v1089 = vadd.f32 %v1071, 1e-05
      %v1090 = vadd.f32 %v1072, 1e-05
      %v1091 = vadd.f32 %v1073, 1e-05
      %v1092 = vadd.f32 %v1074, 1e-05
      %v1093 = vadd.f32 %v1075, 1e-05
      %v1094 = vadd.f32 %v1076, 1e-05
      %v1095 = vadd.f32 %v1077, 1e-05
      %v1096 = vadd.f32 %v1078, 1e-05
      %v1097 = vrsqrt.pop %v1088
      %v1098 = vrsqrt.pop %v1089
      %v1099 = vrsqrt.pop %v1090
      %v1100 = vrsqrt.pop %v1091
      %v1101 = vrsqrt.pop %v1092
      %v1102 = vrsqrt.pop %v1093
      %v1103 = vrsqrt.pop %v1094
      %v1104 = vrsqrt.pop %v1095
      %v1105 = vrsqrt.pop %v1096
      %v1106 = vmul.f32 %v1079, %v1097
      %v1107 = vmul.f32 %v1080, %v1098
      %v1108 = vmul.f32 %v1081, %v1099
      %v1109 = vmul.f32 %v1082, %v1100
      %v1110 = vmul.f32 %v1083, %v1101
      %v1111 = vmul.f32 %v1084, %v1102
      %v1112 = vmul.f32 %v1085, %v1103
      %v1113 = vmul.f32 %v1086, %v1104
      %v1114 = vmul.f32 %v1087, %v1105
      %v1116 = vlaneseq
      %v1117 = vshrl.u32 %v1116, 7
      %v1118 = vsub.s32 0, %v1117
      %v1119 = vrot.slane %v976, %v1118
      %v1121 = vmul.f32 %v1106, %v1119
      %v1122 = vmul.f32 %v1107, %v1119
      %v1123 = vmul.f32 %v1108, %v1119
      %v1124 = vmul.f32 %v1109, %v1119
      %v1125 = vmul.f32 %v1110, %v1119
      %v1126 = vmul.f32 %v1111, %v1119
      %v1127 = vmul.f32 %v1112, %v1119
      %v1128 = vmul.f32 %v1113, %v1119
      %v1129 = vmul.f32 %v1114, %v1119
      %v1131 = vlaneseq
      %v1132 = vshrl.u32 %v1131, 7
      %v1133 = vsub.s32 0, %v1132
      %v1134 = vrot.slane %v977, %v1133
      %v1136 = vadd.f32 %v1121, %v1134
      %v1137 = vadd.f32 %v1122, %v1134
      %v1138 = vadd.f32 %v1123, %v1134
      %v1139 = vadd.f32 %v1124, %v1134
      %v1140 = vadd.f32 %v1125, %v1134
      %v1141 = vadd.f32 %v1126, %v1134
      %v1142 = vadd.f32 %v1127, %v1134
      %v1143 = vadd.f32 %v1128, %v1134
      %v1144 = vadd.f32 %v1129, %v1134
      %v1145 = vld [vmem:[%s691] sm:$0xff]
      %v1146 = vld [vmem:[%s691 + $0x8] sm:$0xff]
      %v1147 = vld [vmem:[%s691 + $0x10] sm:$0xff]
      %v1148 = vld [vmem:[%s691 + $0x18] sm:$0xff]
      %v1149 = vld [vmem:[%s694] sm:$0x1]
      %v1151 = vlaneseq
      %v1152 = vshrl.u32 %v1151, 7
      %v1153 = vsub.s32 0, %v1152
      %v1154 = vrot.slane %v1149, %v1153
      %v1157 = vsel %vm978, %v1136, 0
      %v1160 = vsel %vm978, %v1137, 0
      %v1163 = vsel %vm978, %v1138, 0
      %v1166 = vsel %vm978, %v1139, 0
      %v1169 = vsel %vm978, %v1140, 0
      %v1172 = vsel %vm978, %v1141, 0
      %v1175 = vsel %vm978, %v1142, 0
      %v1178 = vsel %vm978, %v1143, 0
      %v1181 = vsel %vm978, %v1144, 0
      %1183 = vmatprep.subr.mxu0 0.0
      %1184 = vmatpush1.msra.mxu0 %v1145
      %1185 = vmatprep.subr.mxu0 0.0
      %1186 = vmatpush1.msra.mxu0 %v1146
      %1187 = vmatprep.subr.mxu0 0.0
      %1188 = vmatpush1.msra.mxu0 %v1147
      %1189 = vmatprep.subr.mxu0 0.0
      %1190 = vmatpush1.msra.mxu0 %v1148
      %1191 = vmatprep.subr.mxu0 0.0
      %1192 = vmatpush1.msra.mxu0 0.0
      %1193 = vmatprep.subr.mxu0 0.0
      %1194 = vmatpush1.msra.mxu0 0.0
      %1195 = vmatprep.subr.mxu0 0.0
      %1196 = vmatpush1.msra.mxu0 0.0
      %1197 = vmatprep.subr.mxu0 0.0
      %1198 = vmatpush1.msra.mxu0 0.0
      %1199 = vmatprep.subr.mxu0 0.0
      %1200 = vmatpush1.msra.mxu0 0.0
      %1201 = vmatprep.subr.mxu0 0.0
      %1202 = vmatpush1.msra.mxu0 0.0
      %1203 = vmatprep.subr.mxu0 0.0
      %1204 = vmatpush1.msra.mxu0 0.0
      %1205 = vmatprep.subr.mxu0 0.0
      %1206 = vmatpush1.msra.mxu0 0.0
      %1207 = vmatprep.subr.mxu0 0.0
      %1208 = vmatpush1.msra.mxu0 0.0
      %1209 = vmatprep.subr.mxu0 0.0
      %1210 = vmatpush1.msra.mxu0 0.0
      %1211 = vmatprep.subr.mxu0 0.0
      %1212 = vmatpush1.msra.mxu0 0.0
      %1213 = vmatprep.subr.mxu0 0.0
      %1214 = vmatpush1.msra.mxu0 0.0
      %1215 = vmatprep.subr.mxu0 0.0
      %1216 = vmatpush1.msra.mxu0 0.0
      %1217 = vmatprep.subr.mxu0 0.0
      %1218 = vmatpush1.msra.mxu0 0.0
      %1219 = vmatprep.subr.mxu0 0.0
      %1220 = vmatpush1.msra.mxu0 0.0
      %1221 = vmatprep.subr.mxu0 0.0
      %1222 = vmatpush1.msra.mxu0 0.0
      %1223 = vmatprep.subr.mxu0 0.0
      %1224 = vmatpush1.msra.mxu0 0.0
      %1225 = vmatprep.subr.mxu0 0.0
      %1226 = vmatpush1.msra.mxu0 0.0
      %1227 = vmatprep.subr.mxu0 0.0
      %1228 = vmatpush1.msra.mxu0 0.0
      %1229 = vmatprep.subr.mxu0 0.0
      %1230 = vmatpush1.msra.mxu0 0.0
      %1231 = vmatprep.subr.mxu0 0.0
      %1232 = vmatpush1.msra.mxu0 0.0
      %1233 = vmatprep.subr.mxu0 0.0
      %1234 = vmatpush1.msra.mxu0 0.0
      %1235 = vmatprep.subr.mxu0 0.0
      %1236 = vmatpush1.msra.mxu0 0.0
      %1237 = vmatprep.subr.mxu0 0.0
      %1238 = vmatpush1.msra.mxu0 0.0
      %1239 = vmatprep.subr.mxu0 0.0
      %1240 = vmatpush1.msra.mxu0 0.0
      %1241 = vmatprep.subr.mxu0 0.0
      %1242 = vmatpush1.msra.mxu0 0.0
      %1243 = vmatprep.subr.mxu0 0.0
      %1244 = vmatpush1.msra.mxu0 0.0
      %1245 = vmatprep.subr.mxu0 0.0
      %1246 = vmatpush1.msra.mxu0 0.0
      %1247 = vmatprep.mubr.f32.mxu0 0.0
      %1248 = vmatmul.mubr.f32.gmra.mrb[0].mxu0 %v1157
      %v1249 = vpop.f32.mrb[0].mxu0
      %v1250 = vadd.f32 %v1154, %v1249
      %v1251 = vpop.f32.mrb[0].mxu0
      %1252 = vmatprep.mubr.f32.mxu0 0.0
      %1253 = vmatmul.mubr.f32.gmra.mrb[0].mxu0 %v1160
      %v1254 = vpop.f32.mrb[0].mxu0
      %v1255 = vadd.f32 %v1154, %v1254
      %v1256 = vpop.f32.mrb[0].mxu0
      %1257 = vmatprep.mubr.f32.mxu0 0.0
      %1258 = vmatmul.mubr.f32.gmra.mrb[0].mxu0 %v1163
      %v1259 = vpop.f32.mrb[0].mxu0
      %v1260 = vadd.f32 %v1154, %v1259
      %v1261 = vpop.f32.mrb[0].mxu0
      %1262 = vmatprep.mubr.f32.mxu0 0.0
      %1263 = vmatmul.mubr.f32.gmra.mrb[0].mxu0 %v1166
      %v1264 = vpop.f32.mrb[0].mxu0
      %v1265 = vadd.f32 %v1154, %v1264
      %v1266 = vpop.f32.mrb[0].mxu0
      %1267 = vmatprep.mubr.f32.mxu0 0.0
      %1268 = vmatmul.mubr.f32.gmra.mrb[0].mxu0 %v1169
      %v1269 = vpop.f32.mrb[0].mxu0
      %v1270 = vadd.f32 %v1154, %v1269
      %v1271 = vpop.f32.mrb[0].mxu0
      %1272 = vmatprep.mubr.f32.mxu0 0.0
      %1273 = vmatmul.mubr.f32.gmra.mrb[0].mxu0 %v1172
      %v1274 = vpop.f32.mrb[0].mxu0
      %v1275 = vadd.f32 %v1154, %v1274
      %v1276 = vpop.f32.mrb[0].mxu0
      %1277 = vmatprep.mubr.f32.mxu0 0.0
      %1278 = vmatmul.mubr.f32.gmra.mrb[0].mxu0 %v1175
      %v1279 = vpop.f32.mrb[0].mxu0
      %v1280 = vadd.f32 %v1154, %v1279
      %v1281 = vpop.f32.mrb[0].mxu0
      %1282 = vmatprep.mubr.f32.mxu0 0.0
      %1283 = vmatmul.mubr.f32.gmra.mrb[0].mxu0 %v1178
      %v1284 = vpop.f32.mrb[0].mxu0
      %v1285 = vadd.f32 %v1154, %v1284
      %v1286 = vpop.f32.mrb[0].mxu0
      %1287 = vmatprep.mubr.f32.mxu0 0.0
      %1288 = vmatmul.mubr.f32.gmra.mrb[0].mxu0 %v1181
      %v1289 = vpop.f32.mrb[0].mxu0
      %v1290 = vadd.f32 %v1154, %v1289
      %v1291 = vpop.f32.mrb[0].mxu0
      %1292 = vdwg.mxu0
      %1298 = vrot.lane.b32.xlu0 %v1250, 112
      %v1299 = vpop.permute.xlu0 %1298
      %1300 = vrot.lane.b32.xlu0 %v1255, 112
      %v1301 = vpop.permute.xlu0 %1300
      %1302 = vrot.lane.b32.xlu0 %v1260, 112
      %v1303 = vpop.permute.xlu0 %1302
      %1304 = vrot.lane.b32.xlu0 %v1265, 112
      %v1305 = vpop.permute.xlu0 %1304
      %1306 = vrot.lane.b32.xlu0 %v1270, 112
      %v1307 = vpop.permute.xlu0 %1306
      %1308 = vrot.lane.b32.xlu0 %v1250, 96
      %v1309 = vpop.permute.xlu0 %1308
      %1310 = vrot.lane.b32.xlu0 %v1255, 96
      %v1311 = vpop.permute.xlu0 %1310
      %1312 = vrot.lane.b32.xlu0 %v1260, 96
      %v1313 = vpop.permute.xlu0 %1312
      %1314 = vrot.lane.b32.xlu0 %v1265, 96
      %v1315 = vpop.permute.xlu0 %1314
      %1316 = vrot.lane.b32.xlu0 %v1270, 96
      %v1317 = vpop.permute.xlu0 %1316
      %vm1318 = vcmask 130048
      %v1319 = vsel %vm1318, %v1250, 0
      %v1321 = vsel %vm1318, %v1255, 0
      %v1323 = vsel %vm1318, %v1260, 0
      %v1325 = vsel %vm1318, %v1265, 0
      %v1327 = vsel %vm1318, %v1270, 0
      %v1329 = vsel %vm1318, %v1309, 0
      %v1331 = vsel %vm1318, %v1311, 0
      %v1333 = vsel %vm1318, %v1313, 0
      %v1335 = vsel %vm1318, %v1315, 0
      %v1337 = vsel %vm1318, %v1317, 0
      %1339 = vmatprep.subr.mxu0 0.0
      %1340 = vmatpush1.xpose.msra.mxu0 %v1329
      %1341 = vmatprep.subr.mxu0 0.0
      %1342 = vmatpush1.xpose.msra.mxu0 %v1331
      %1343 = vmatprep.subr.mxu0 0.0
      %1344 = vmatpush1.xpose.msra.mxu0 %v1333
      %1345 = vmatprep.subr.mxu0 0.0
      %1346 = vmatpush1.xpose.msra.mxu0 %v1335
      %1347 = vmatprep.subr.mxu0 0.0
      %1348 = vmatpush1.xpose.msra.mxu0 %v1337
      %1349 = vmatprep.subr.mxu0 0.0
      %1350 = vmatpush1.xpose.msra.mxu0 0.0
      %1351 = vmatprep.subr.mxu0 0.0
      %1352 = vmatpush1.xpose.msra.mxu0 0.0
      %1353 = vmatprep.subr.mxu0 0.0
      %1354 = vmatpush1.xpose.msra.mxu0 0.0
      %1355 = vmatprep.subr.mxu0 0.0
      %1356 = vmatpush1.xpose.msra.mxu0 0.0
      %1357 = vmatprep.subr.mxu0 0.0
      %1358 = vmatpush1.xpose.msra.mxu0 0.0
      %1359 = vmatprep.subr.mxu0 0.0
      %1360 = vmatpush1.xpose.msra.mxu0 0.0
      %1361 = vmatprep.subr.mxu0 0.0
      %1362 = vmatpush1.xpose.msra.mxu0 0.0
      %1363 = vmatprep.subr.mxu0 0.0
      %1364 = vmatpush1.xpose.msra.mxu0 0.0
      %1365 = vmatprep.subr.mxu0 0.0
      %1366 = vmatpush1.xpose.msra.mxu0 0.0
      %1367 = vmatprep.subr.mxu0 0.0
      %1368 = vmatpush1.xpose.msra.mxu0 0.0
      %1369 = vmatprep.subr.mxu0 0.0
      %1370 = vmatpush1.xpose.msra.mxu0 0.0
      %1371 = vmatprep.subr.mxu0 0.0
      %1372 = vmatpush1.xpose.msra.mxu0 0.0
      %1373 = vmatprep.subr.mxu0 0.0
      %1374 = vmatpush1.xpose.msra.mxu0 0.0
      %1375 = vmatprep.subr.mxu0 0.0
      %1376 = vmatpush1.xpose.msra.mxu0 0.0
      %1377 = vmatprep.subr.mxu0 0.0
      %1378 = vmatpush1.xpose.msra.mxu0 0.0
      %1379 = vmatprep.subr.mxu0 0.0
      %1380 = vmatpush1.xpose.msra.mxu0 0.0
      %1381 = vmatprep.subr.mxu0 0.0
      %1382 = vmatpush1.xpose.msra.mxu0 0.0
      %1383 = vmatprep.subr.mxu0 0.0
      %1384 = vmatpush1.xpose.msra.mxu0 0.0
      %1385 = vmatprep.subr.mxu0 0.0
      %1386 = vmatpush1.xpose.msra.mxu0 0.0
      %1387 = vmatprep.subr.mxu0 0.0
      %1388 = vmatpush1.xpose.msra.mxu0 0.0
      %1389 = vmatprep.subr.mxu0 0.0
      %1390 = vmatpush1.xpose.msra.mxu0 0.0
      %1391 = vmatprep.subr.mxu0 0.0
      %1392 = vmatpush1.xpose.msra.mxu0 0.0
      %1393 = vmatprep.subr.mxu0 0.0
      %1394 = vmatpush1.xpose.msra.mxu0 0.0
      %1395 = vmatprep.subr.mxu0 0.0
      %1396 = vmatpush1.xpose.msra.mxu0 0.0
      %1397 = vmatprep.subr.mxu0 0.0
      %1398 = vmatpush1.xpose.msra.mxu0 0.0
      %1399 = vmatprep.subr.mxu0 0.0
      %1400 = vmatpush1.xpose.msra.mxu0 0.0
      %1401 = vmatprep.subr.mxu0 0.0
      %1402 = vmatpush1.xpose.msra.mxu0 0.0
      %1403 = vmatprep.mubr.f32.mxu0 0.0
      %1404 = vmatmul.mubr.f32.gmra.mrb[0].mxu0 %v1319
      %v1405 = vpop.f32.mrb[0].mxu0
      %v1406 = vadd.f32 0.0, %v1405
      %v1407 = vpop.f32.mrb[0].mxu0
      %1408 = vmatprep.mubr.f32.mxu0 0.0
      %1409 = vmatmul.mubr.f32.gmra.mrb[0].mxu0 %v1321
      %v1410 = vpop.f32.mrb[0].mxu0
      %v1411 = vadd.f32 0.0, %v1410
      %v1412 = vpop.f32.mrb[0].mxu0
      %1413 = vmatprep.mubr.f32.mxu0 0.0
      %1414 = vmatmul.mubr.f32.gmra.mrb[0].mxu0 %v1323
      %v1415 = vpop.f32.mrb[0].mxu0
      %v1416 = vadd.f32 0.0, %v1415
      %v1417 = vpop.f32.mrb[0].mxu0
      %1418 = vmatprep.mubr.f32.mxu0 0.0
      %1419 = vmatmul.mubr.f32.gmra.mrb[0].mxu0 %v1325
      %v1420 = vpop.f32.mrb[0].mxu0
      %v1421 = vadd.f32 0.0, %v1420
      %v1422 = vpop.f32.mrb[0].mxu0
      %1423 = vmatprep.mubr.f32.mxu0 0.0
      %1424 = vmatmul.mubr.f32.gmra.mrb[0].mxu0 %v1327
      %v1425 = vpop.f32.mrb[0].mxu0
      %v1426 = vadd.f32 0.0, %v1425
      %v1427 = vpop.f32.mrb[0].mxu0
      %1428 = vdwg.mxu0
      %1429 = vrot.lane.b32.xlu0 %v1299, 96
      %v1430 = vpop.permute.xlu0 %1429
      %1431 = vrot.lane.b32.xlu0 %v1301, 96
      %v1432 = vpop.permute.xlu0 %1431
      %1433 = vrot.lane.b32.xlu0 %v1303, 96
      %v1434 = vpop.permute.xlu0 %1433
      %1435 = vrot.lane.b32.xlu0 %v1305, 96
      %v1436 = vpop.permute.xlu0 %1435
      %1437 = vrot.lane.b32.xlu0 %v1307, 96
      %v1438 = vpop.permute.xlu0 %1437
      %v1439 = vsel %vm1318, %v1299, 0
      %v1441 = vsel %vm1318, %v1301, 0
      %v1443 = vsel %vm1318, %v1303, 0
      %v1445 = vsel %vm1318, %v1305, 0
      %v1447 = vsel %vm1318, %v1307, 0
      %v1449 = vsel %vm1318, %v1430, 0
      %v1451 = vsel %vm1318, %v1432, 0
      %v1453 = vsel %vm1318, %v1434, 0
      %v1455 = vsel %vm1318, %v1436, 0
      %v1457 = vsel %vm1318, %v1438, 0
      %1459 = vmatprep.subr.mxu0 0.0
      %1460 = vmatpush1.xpose.msra.mxu0 %v1449
      %1461 = vmatprep.subr.mxu0 0.0
      %1462 = vmatpush1.xpose.msra.mxu0 %v1451
      %1463 = vmatprep.subr.mxu0 0.0
      %1464 = vmatpush1.xpose.msra.mxu0 %v1453
      %1465 = vmatprep.subr.mxu0 0.0
      %1466 = vmatpush1.xpose.msra.mxu0 %v1455
      %1467 = vmatprep.subr.mxu0 0.0
      %1468 = vmatpush1.xpose.msra.mxu0 %v1457
      %1469 = vmatprep.subr.mxu0 0.0
      %1470 = vmatpush1.xpose.msra.mxu0 0.0
      %1471 = vmatprep.subr.mxu0 0.0
      %1472 = vmatpush1.xpose.msra.mxu0 0.0
      %1473 = vmatprep.subr.mxu0 0.0
      %1474 = vmatpush1.xpose.msra.mxu0 0.0
      %1475 = vmatprep.subr.mxu0 0.0
      %1476 = vmatpush1.xpose.msra.mxu0 0.0
      %1477 = vmatprep.subr.mxu0 0.0
      %1478 = vmatpush1.xpose.msra.mxu0 0.0
      %1479 = vmatprep.subr.mxu0 0.0
      %1480 = vmatpush1.xpose.msra.mxu0 0.0
      %1481 = vmatprep.subr.mxu0 0.0
      %1482 = vmatpush1.xpose.msra.mxu0 0.0
      %1483 = vmatprep.subr.mxu0 0.0
      %1484 = vmatpush1.xpose.msra.mxu0 0.0
      %1485 = vmatprep.subr.mxu0 0.0
      %1486 = vmatpush1.xpose.msra.mxu0 0.0
      %1487 = vmatprep.subr.mxu0 0.0
      %1488 = vmatpush1.xpose.msra.mxu0 0.0
      %1489 = vmatprep.subr.mxu0 0.0
      %1490 = vmatpush1.xpose.msra.mxu0 0.0
      %1491 = vmatprep.subr.mxu0 0.0
      %1492 = vmatpush1.xpose.msra.mxu0 0.0
      %1493 = vmatprep.subr.mxu0 0.0
      %1494 = vmatpush1.xpose.msra.mxu0 0.0
      %1495 = vmatprep.subr.mxu0 0.0
      %1496 = vmatpush1.xpose.msra.mxu0 0.0
      %1497 = vmatprep.subr.mxu0 0.0
      %1498 = vmatpush1.xpose.msra.mxu0 0.0
      %1499 = vmatprep.subr.mxu0 0.0
      %1500 = vmatpush1.xpose.msra.mxu0 0.0
      %1501 = vmatprep.subr.mxu0 0.0
      %1502 = vmatpush1.xpose.msra.mxu0 0.0
      %1503 = vmatprep.subr.mxu0 0.0
      %1504 = vmatpush1.xpose.msra.mxu0 0.0
      %1505 = vmatprep.subr.mxu0 0.0
      %1506 = vmatpush1.xpose.msra.mxu0 0.0
      %1507 = vmatprep.subr.mxu0 0.0
      %1508 = vmatpush1.xpose.msra.mxu0 0.0
      %1509 = vmatprep.subr.mxu0 0.0
      %1510 = vmatpush1.xpose.msra.mxu0 0.0
      %1511 = vmatprep.subr.mxu0 0.0
      %1512 = vmatpush1.xpose.msra.mxu0 0.0
      %1513 = vmatprep.subr.mxu0 0.0
      %1514 = vmatpush1.xpose.msra.mxu0 0.0
      %1515 = vmatprep.subr.mxu0 0.0
      %1516 = vmatpush1.xpose.msra.mxu0 0.0
      %1517 = vmatprep.subr.mxu0 0.0
      %1518 = vmatpush1.xpose.msra.mxu0 0.0
      %1519 = vmatprep.subr.mxu0 0.0
      %1520 = vmatpush1.xpose.msra.mxu0 0.0
      %1521 = vmatprep.subr.mxu0 0.0
      %1522 = vmatpush1.xpose.msra.mxu0 0.0
      %1523 = vmatprep.mubr.f32.mxu0 0.0
      %1524 = vmatmul.mubr.f32.gmra.mrb[0].mxu0 %v1439
      %v1525 = vpop.f32.mrb[0].mxu0
      %v1526 = vadd.f32 0.0, %v1525
      %v1527 = vpop.f32.mrb[0].mxu0
      %1528 = vmatprep.mubr.f32.mxu0 0.0
      %1529 = vmatmul.mubr.f32.gmra.mrb[0].mxu0 %v1441
      %v1530 = vpop.f32.mrb[0].mxu0
      %v1531 = vadd.f32 0.0, %v1530
      %v1532 = vpop.f32.mrb[0].mxu0
      %1533 = vmatprep.mubr.f32.mxu0 0.0
      %1534 = vmatmul.mubr.f32.gmra.mrb[0].mxu0 %v1443
      %v1535 = vpop.f32.mrb[0].mxu0
      %v1536 = vadd.f32 0.0, %v1535
      %v1537 = vpop.f32.mrb[0].mxu0
      %1538 = vmatprep.mubr.f32.mxu0 0.0
      %1539 = vmatmul.mubr.f32.gmra.mrb[0].mxu0 %v1445
      %v1540 = vpop.f32.mrb[0].mxu0
      %v1541 = vadd.f32 0.0, %v1540
      %v1542 = vpop.f32.mrb[0].mxu0
      %1543 = vmatprep.mubr.f32.mxu0 0.0
      %1544 = vmatmul.mubr.f32.gmra.mrb[0].mxu0 %v1447
      %v1545 = vpop.f32.mrb[0].mxu0
      %v1546 = vadd.f32 0.0, %v1545
      %v1547 = vpop.f32.mrb[0].mxu0
      %1548 = vdwg.mxu0
      %v1549 = vmul.f32 %v1406, 0.25
      %v1550 = vmul.f32 %v1411, 0.25
      %v1551 = vmul.f32 %v1416, 0.25
      %v1552 = vmul.f32 %v1421, 0.25
      %v1553 = vmul.f32 %v1426, 0.25
      %v1554 = vmul.f32 %v1526, 0.25
      %v1555 = vmul.f32 %v1531, 0.25
      %v1556 = vmul.f32 %v1536, 0.25
      %v1557 = vmul.f32 %v1541, 0.25
      %v1558 = vmul.f32 %v1546, 0.25
      %vm1559 = vcmask 269312
      %v1560 = vsel %vm1559, %v1549, -inf
      %1561 = vmax.xlane.f32.xlu0 %v1560
      %v1562 = vpop.xlane.xlu0 %1561
      %v1563 = vsel %vm1559, %v1550, -inf
      %1564 = vmax.xlane.f32.xlu0 %v1563
      %v1565 = vpop.xlane.xlu0 %1564
      %v1566 = vsel %vm1559, %v1551, -inf
      %1567 = vmax.xlane.f32.xlu0 %v1566
      %v1568 = vpop.xlane.xlu0 %1567
      %v1569 = vsel %vm1559, %v1552, -inf
      %1570 = vmax.xlane.f32.xlu0 %v1569
      %v1571 = vpop.xlane.xlu0 %1570
      %vm1572 = vcmask 262144
      %v1573 = vsel %vm1572, %v1553, -inf
      %1574 = vmax.xlane.f32.xlu0 %v1573
      %v1575 = vpop.xlane.xlu0 %1574
      %v1576 = vsel %vm1559, %v1554, -inf
      %1577 = vmax.xlane.f32.xlu0 %v1576
      %v1578 = vpop.xlane.xlu0 %1577
      %v1579 = vsel %vm1559, %v1555, -inf
      %1580 = vmax.xlane.f32.xlu0 %v1579
      %v1581 = vpop.xlane.xlu0 %1580
      %v1582 = vsel %vm1559, %v1556, -inf
      %1583 = vmax.xlane.f32.xlu0 %v1582
      %v1584 = vpop.xlane.xlu0 %1583
      %v1585 = vsel %vm1559, %v1557, -inf
      %1586 = vmax.xlane.f32.xlu0 %v1585
      %v1587 = vpop.xlane.xlu0 %1586
      %v1588 = vsel %vm1572, %v1558, -inf
      %1589 = vmax.xlane.f32.xlu0 %v1588
      %v1590 = vpop.xlane.xlu0 %1589
      %v1591 = vsub.f32 %v1549, %v1562
      %v1592 = vsub.f32 %v1550, %v1565
      %v1593 = vsub.f32 %v1551, %v1568
      %v1594 = vsub.f32 %v1552, %v1571
      %v1595 = vsub.f32 %v1553, %v1575
      %v1596 = vsub.f32 %v1554, %v1578
      %v1597 = vsub.f32 %v1555, %v1581
      %v1598 = vsub.f32 %v1556, %v1584
      %v1599 = vsub.f32 %v1557, %v1587
      %v1600 = vsub.f32 %v1558, %v1590
      %v1601 = vmul.f32 %v1591, 1.442695
      %v1602 = vpow.pop %v1601
      %v1603 = vmul.f32 %v1592, 1.442695
      %v1604 = vpow.pop %v1603
      %v1605 = vmul.f32 %v1593, 1.442695
      %v1606 = vpow.pop %v1605
      %v1607 = vmul.f32 %v1594, 1.442695
      %v1608 = vpow.pop %v1607
      %v1609 = vmul.f32 %v1595, 1.442695
      %v1610 = vpow.pop %v1609
      %v1611 = vmul.f32 %v1596, 1.442695
      %v1612 = vpow.pop %v1611
      %v1613 = vmul.f32 %v1597, 1.442695
      %v1614 = vpow.pop %v1613
      %v1615 = vmul.f32 %v1598, 1.442695
      %v1616 = vpow.pop %v1615
      %v1617 = vmul.f32 %v1599, 1.442695
      %v1618 = vpow.pop %v1617
      %v1619 = vmul.f32 %v1600, 1.442695
      %v1620 = vpow.pop %v1619
      %v1621 = vsel %vm1559, %v1602, 0.0
      %1622 = vadd.xlane.f32.xlu0 %v1621
      %v1623 = vpop.xlane.xlu0 %1622
      %v1624 = vsel %vm1559, %v1604, 0.0
      %1625 = vadd.xlane.f32.xlu0 %v1624
      %v1626 = vpop.xlane.xlu0 %1625
      %v1627 = vsel %vm1559, %v1606, 0.0
      %1628 = vadd.xlane.f32.xlu0 %v1627
      %v1629 = vpop.xlane.xlu0 %1628
      %v1630 = vsel %vm1559, %v1608, 0.0
      %1631 = vadd.xlane.f32.xlu0 %v1630
      %v1632 = vpop.xlane.xlu0 %1631
      %v1633 = vsel %vm1572, %v1610, 0.0
      %1634 = vadd.xlane.f32.xlu0 %v1633
      %v1635 = vpop.xlane.xlu0 %1634
      %v1636 = vsel %vm1559, %v1612, 0.0
      %1637 = vadd.xlane.f32.xlu0 %v1636
      %v1638 = vpop.xlane.xlu0 %1637
      %v1639 = vsel %vm1559, %v1614, 0.0
      %1640 = vadd.xlane.f32.xlu0 %v1639
      %v1641 = vpop.xlane.xlu0 %1640
      %v1642 = vsel %vm1559, %v1616, 0.0
      %1643 = vadd.xlane.f32.xlu0 %v1642
      %v1644 = vpop.xlane.xlu0 %1643
      %v1645 = vsel %vm1559, %v1618, 0.0
      %1646 = vadd.xlane.f32.xlu0 %v1645
      %v1647 = vpop.xlane.xlu0 %1646
      %v1648 = vsel %vm1572, %v1620, 0.0
      %1649 = vadd.xlane.f32.xlu0 %v1648
      %v1650 = vpop.xlane.xlu0 %1649
      %v1651 = vrcp.pop %v1623
      %v1652 = vrcp.pop %v1626
      %v1653 = vrcp.pop %v1629
      %v1654 = vrcp.pop %v1632
      %v1655 = vrcp.pop %v1635
      %v1656 = vrcp.pop %v1638
      %v1657 = vrcp.pop %v1641
      %v1658 = vrcp.pop %v1644
      %v1659 = vrcp.pop %v1647
      %v1660 = vrcp.pop %v1650
      %v1661 = vmul.f32 %v1602, %v1651
      %v1662 = vmul.f32 %v1604, %v1652
      %v1663 = vmul.f32 %v1606, %v1653
      %v1664 = vmul.f32 %v1608, %v1654
      %v1665 = vmul.f32 %v1610, %v1655
      %v1666 = vmul.f32 %v1612, %v1656
      %v1667 = vmul.f32 %v1614, %v1657
      %v1668 = vmul.f32 %v1616, %v1658
      %v1669 = vmul.f32 %v1618, %v1659
      %v1670 = vmul.f32 %v1620, %v1660
      %1671 = vrot.lane.b32.xlu0 %v1250, 64
      %v1672 = vpop.permute.xlu0 %1671
      %1673 = vrot.lane.b32.xlu0 %v1255, 64
      %v1674 = vpop.permute.xlu0 %1673
      %1675 = vrot.lane.b32.xlu0 %v1260, 64
      %v1676 = vpop.permute.xlu0 %1675
      %1677 = vrot.lane.b32.xlu0 %v1265, 64
      %v1678 = vpop.permute.xlu0 %1677
      %1679 = vrot.lane.b32.xlu0 %v1270, 64
      %v1680 = vpop.permute.xlu0 %1679
      %v1686 = vsel %vm1559, %v1661, 0
      %v1689 = vsel %vm1559, %v1662, 0
      %v1692 = vsel %vm1559, %v1663, 0
      %v1695 = vsel %vm1559, %v1664, 0
      %v1698 = vsel %vm1559, %v1665, 0
      %vm1700 = vcmask 1040384
      %v1701 = vsel %vm1700, %v1680, 0
      %1703 = vmatprep.subr.mxu0 0.0
      %1704 = vmatpush1.msra.mxu0 %v1672
      %1705 = vmatprep.subr.mxu0 0.0
      %1706 = vmatpush1.msra.mxu0 %v1674
      %1707 = vmatprep.subr.mxu0 0.0
      %1708 = vmatpush1.msra.mxu0 %v1676
      %1709 = vmatprep.subr.mxu0 0.0
      %1710 = vmatpush1.msra.mxu0 %v1678
      %1711 = vmatprep.subr.mxu0 0.0
      %1712 = vmatpush1.msra.mxu0 %v1701
      %1713 = vmatprep.subr.mxu0 0.0
      %1714 = vmatpush1.msra.mxu0 0.0
      %1715 = vmatprep.subr.mxu0 0.0
      %1716 = vmatpush1.msra.mxu0 0.0
      %1717 = vmatprep.subr.mxu0 0.0
      %1718 = vmatpush1.msra.mxu0 0.0
      %1719 = vmatprep.subr.mxu0 0.0
      %1720 = vmatpush1.msra.mxu0 0.0
      %1721 = vmatprep.subr.mxu0 0.0
      %1722 = vmatpush1.msra.mxu0 0.0
      %1723 = vmatprep.subr.mxu0 0.0
      %1724 = vmatpush1.msra.mxu0 0.0
      %1725 = vmatprep.subr.mxu0 0.0
      %1726 = vmatpush1.msra.mxu0 0.0
      %1727 = vmatprep.subr.mxu0 0.0
      %1728 = vmatpush1.msra.mxu0 0.0
      %1729 = vmatprep.subr.mxu0 0.0
      %1730 = vmatpush1.msra.mxu0 0.0
      %1731 = vmatprep.subr.mxu0 0.0
      %1732 = vmatpush1.msra.mxu0 0.0
      %1733 = vmatprep.subr.mxu0 0.0
      %1734 = vmatpush1.msra.mxu0 0.0
      %1735 = vmatprep.subr.mxu0 0.0
      %1736 = vmatpush1.msra.mxu0 0.0
      %1737 = vmatprep.subr.mxu0 0.0
      %1738 = vmatpush1.msra.mxu0 0.0
      %1739 = vmatprep.subr.mxu0 0.0
      %1740 = vmatpush1.msra.mxu0 0.0
      %1741 = vmatprep.subr.mxu0 0.0
      %1742 = vmatpush1.msra.mxu0 0.0
      %1743 = vmatprep.subr.mxu0 0.0
      %1744 = vmatpush1.msra.mxu0 0.0
      %1745 = vmatprep.subr.mxu0 0.0
      %1746 = vmatpush1.msra.mxu0 0.0
      %1747 = vmatprep.subr.mxu0 0.0
      %1748 = vmatpush1.msra.mxu0 0.0
      %1749 = vmatprep.subr.mxu0 0.0
      %1750 = vmatpush1.msra.mxu0 0.0
      %1751 = vmatprep.subr.mxu0 0.0
      %1752 = vmatpush1.msra.mxu0 0.0
      %1753 = vmatprep.subr.mxu0 0.0
      %1754 = vmatpush1.msra.mxu0 0.0
      %1755 = vmatprep.subr.mxu0 0.0
      %1756 = vmatpush1.msra.mxu0 0.0
      %1757 = vmatprep.subr.mxu0 0.0
      %1758 = vmatpush1.msra.mxu0 0.0
      %1759 = vmatprep.subr.mxu0 0.0
      %1760 = vmatpush1.msra.mxu0 0.0
      %1761 = vmatprep.subr.mxu0 0.0
      %1762 = vmatpush1.msra.mxu0 0.0
      %1763 = vmatprep.subr.mxu0 0.0
      %1764 = vmatpush1.msra.mxu0 0.0
      %1765 = vmatprep.subr.mxu0 0.0
      %1766 = vmatpush1.msra.mxu0 0.0
      %1767 = vmatprep.mubr.f32.mxu0 0.0
      %1768 = vmatmul.mubr.f32.gmra.mrb[0].mxu0 %v1686
      %v1769 = vpop.f32.mrb[0].mxu0
      %v1770 = vadd.f32 0.0, %v1769
      %v1771 = vpop.f32.mrb[0].mxu0
      %1772 = vmatprep.mubr.f32.mxu0 0.0
      %1773 = vmatmul.mubr.f32.gmra.mrb[0].mxu0 %v1689
      %v1774 = vpop.f32.mrb[0].mxu0
      %v1775 = vadd.f32 0.0, %v1774
      %v1776 = vpop.f32.mrb[0].mxu0
      %1777 = vmatprep.mubr.f32.mxu0 0.0
      %1778 = vmatmul.mubr.f32.gmra.mrb[0].mxu0 %v1692
      %v1779 = vpop.f32.mrb[0].mxu0
      %v1780 = vadd.f32 0.0, %v1779
      %v1781 = vpop.f32.mrb[0].mxu0
      %1782 = vmatprep.mubr.f32.mxu0 0.0
      %1783 = vmatmul.mubr.f32.gmra.mrb[0].mxu0 %v1695
      %v1784 = vpop.f32.mrb[0].mxu0
      %v1785 = vadd.f32 0.0, %v1784
      %v1786 = vpop.f32.mrb[0].mxu0
      %1787 = vmatprep.mubr.f32.mxu0 0.0
      %1788 = vmatmul.mubr.f32.gmra.mrb[0].mxu0 %v1698
      %v1789 = vpop.f32.mrb[0].mxu0
      %v1790 = vadd.f32 0.0, %v1789
      %v1791 = vpop.f32.mrb[0].mxu0
      %1792 = vdwg.mxu0
      %1793 = vrot.lane.b32.xlu0 %v1299, 64
      %v1794 = vpop.permute.xlu0 %1793
      %1795 = vrot.lane.b32.xlu0 %v1301, 64
      %v1796 = vpop.permute.xlu0 %1795
      %1797 = vrot.lane.b32.xlu0 %v1303, 64
      %v1798 = vpop.permute.xlu0 %1797
      %1799 = vrot.lane.b32.xlu0 %v1305, 64
      %v1800 = vpop.permute.xlu0 %1799
      %1801 = vrot.lane.b32.xlu0 %v1307, 64
      %v1802 = vpop.permute.xlu0 %1801
      %v1808 = vsel %vm1559, %v1666, 0
      %v1811 = vsel %vm1559, %v1667, 0
      %v1814 = vsel %vm1559, %v1668, 0
      %v1817 = vsel %vm1559, %v1669, 0
      %v1820 = vsel %vm1559, %v1670, 0
      %v1822 = vsel %vm1700, %v1802, 0
      %1824 = vmatprep.subr.mxu0 0.0
      %1825 = vmatpush1.msra.mxu0 %v1794
      %1826 = vmatprep.subr.mxu0 0.0
      %1827 = vmatpush1.msra.mxu0 %v1796
      %1828 = vmatprep.subr.mxu0 0.0
      %1829 = vmatpush1.msra.mxu0 %v1798
      %1830 = vmatprep.subr.mxu0 0.0
      %1831 = vmatpush1.msra.mxu0 %v1800
      %1832 = vmatprep.subr.mxu0 0.0
      %1833 = vmatpush1.msra.mxu0 %v1822
      %1834 = vmatprep.subr.mxu0 0.0
      %1835 = vmatpush1.msra.mxu0 0.0
      %1836 = vmatprep.subr.mxu0 0.0
      %1837 = vmatpush1.msra.mxu0 0.0
      %1838 = vmatprep.subr.mxu0 0.0
      %1839 = vmatpush1.msra.mxu0 0.0
      %1840 = vmatprep.subr.mxu0 0.0
      %1841 = vmatpush1.msra.mxu0 0.0
      %1842 = vmatprep.subr.mxu0 0.0
      %1843 = vmatpush1.msra.mxu0 0.0
      %1844 = vmatprep.subr.mxu0 0.0
      %1845 = vmatpush1.msra.mxu0 0.0
      %1846 = vmatprep.subr.mxu0 0.0
      %1847 = vmatpush1.msra.mxu0 0.0
      %1848 = vmatprep.subr.mxu0 0.0
      %1849 = vmatpush1.msra.mxu0 0.0
      %1850 = vmatprep.subr.mxu0 0.0
      %1851 = vmatpush1.msra.mxu0 0.0
      %1852 = vmatprep.subr.mxu0 0.0
      %1853 = vmatpush1.msra.mxu0 0.0
      %1854 = vmatprep.subr.mxu0 0.0
      %1855 = vmatpush1.msra.mxu0 0.0
      %1856 = vmatprep.subr.mxu0 0.0
      %1857 = vmatpush1.msra.mxu0 0.0
      %1858 = vmatprep.subr.mxu0 0.0
      %1859 = vmatpush1.msra.mxu0 0.0
      %1860 = vmatprep.subr.mxu0 0.0
      %1861 = vmatpush1.msra.mxu0 0.0
      %1862 = vmatprep.subr.mxu0 0.0
      %1863 = vmatpush1.msra.mxu0 0.0
      %1864 = vmatprep.subr.mxu0 0.0
      %1865 = vmatpush1.msra.mxu0 0.0
      %1866 = vmatprep.subr.mxu0 0.0
      %1867 = vmatpush1.msra.mxu0 0.0
      %1868 = vmatprep.subr.mxu0 0.0
      %1869 = vmatpush1.msra.mxu0 0.0
      %1870 = vmatprep.subr.mxu0 0.0
      %1871 = vmatpush1.msra.mxu0 0.0
      %1872 = vmatprep.subr.mxu0 0.0
      %1873 = vmatpush1.msra.mxu0 0.0
      %1874 = vmatprep.subr.mxu0 0.0
      %1875 = vmatpush1.msra.mxu0 0.0
      %1876 = vmatprep.subr.mxu0 0.0
      %1877 = vmatpush1.msra.mxu0 0.0
      %1878 = vmatprep.subr.mxu0 0.0
      %1879 = vmatpush1.msra.mxu0 0.0
      %1880 = vmatprep.subr.mxu0 0.0
      %1881 = vmatpush1.msra.mxu0 0.0
      %1882 = vmatprep.subr.mxu0 0.0
      %1883 = vmatpush1.msra.mxu0 0.0
      %1884 = vmatprep.subr.mxu0 0.0
      %1885 = vmatpush1.msra.mxu0 0.0
      %1886 = vmatprep.subr.mxu0 0.0
      %1887 = vmatpush1.msra.mxu0 0.0
      %1888 = vmatprep.mubr.f32.mxu0 0.0
      %1889 = vmatmul.mubr.f32.gmra.mrb[0].mxu0 %v1808
      %v1890 = vpop.f32.mrb[0].mxu0
      %v1891 = vadd.f32 0.0, %v1890
      %v1892 = vpop.f32.mrb[0].mxu0
      %1893 = vmatprep.mubr.f32.mxu0 0.0
      %1894 = vmatmul.mubr.f32.gmra.mrb[0].mxu0 %v1811
      %v1895 = vpop.f32.mrb[0].mxu0
      %v1896 = vadd.f32 0.0, %v1895
      %v1897 = vpop.f32.mrb[0].mxu0
      %1898 = vmatprep.mubr.f32.mxu0 0.0
      %1899 = vmatmul.mubr.f32.gmra.mrb[0].mxu0 %v1814
      %v1900 = vpop.f32.mrb[0].mxu0
      %v1901 = vadd.f32 0.0, %v1900
      %v1902 = vpop.f32.mrb[0].mxu0
      %1903 = vmatprep.mubr.f32.mxu0 0.0
      %1904 = vmatmul.mubr.f32.gmra.mrb[0].mxu0 %v1817
      %v1905 = vpop.f32.mrb[0].mxu0
      %v1906 = vadd.f32 0.0, %v1905
      %v1907 = vpop.f32.mrb[0].mxu0
      %1908 = vmatprep.mubr.f32.mxu0 0.0
      %1909 = vmatmul.mubr.f32.gmra.mrb[0].mxu0 %v1820
      %v1910 = vpop.f32.mrb[0].mxu0
      %v1911 = vadd.f32 0.0, %v1910
      %v1912 = vpop.f32.mrb[0].mxu0
      %1913 = vdwg.mxu0
      %1919 = vrot.lane.b32.xlu0 %v1891, 16
      %v1920 = vpop.permute.xlu0 %1919
      %1921 = vrot.lane.b32.xlu0 %v1896, 16
      %v1922 = vpop.permute.xlu0 %1921
      %1923 = vrot.lane.b32.xlu0 %v1901, 16
      %v1924 = vpop.permute.xlu0 %1923
      %1925 = vrot.lane.b32.xlu0 %v1906, 16
      %v1926 = vpop.permute.xlu0 %1925
      %1927 = vrot.lane.b32.xlu0 %v1911, 16
      %v1928 = vpop.permute.xlu0 %1927
      %v1934 = vsel %vm1318, %v1770, %v1920
      %v1935 = vsel %vm1318, %v1775, %v1922
      %v1936 = vsel %vm1318, %v1780, %v1924
      %v1937 = vsel %vm1318, %v1785, %v1926
      %v1938 = vsel %vm1318, %v1790, %v1928
      %v1939 = vadd.f32 %v967, %v1934
      %v1940 = vadd.f32 %v968, %v1935
      %v1941 = vadd.f32 %v969, %v1936
      %v1942 = vadd.f32 %v970, %v1937
      %v1943 = vadd.f32 %v971, %v1938
      %1948 = vrot.lane.b32.xlu0 %v1275, 112
      %v1949 = vpop.permute.xlu0 %1948
      %1950 = vrot.lane.b32.xlu0 %v1280, 112
      %v1951 = vpop.permute.xlu0 %1950
      %1952 = vrot.lane.b32.xlu0 %v1285, 112
      %v1953 = vpop.permute.xlu0 %1952
      %1954 = vrot.lane.b32.xlu0 %v1290, 112
      %v1955 = vpop.permute.xlu0 %1954
      %vm1956 = vcmask 1046528
      %v1957 = vrot.slane %v1270, 1
      %v1958 = vrot.slane %v1275, 1
      %v1959 = vsel %vm1956, %v1957, %v1958
      %v1960 = vrot.slane %v1280, 1
      %v1961 = vsel %vm1956, %v1958, %v1960
      %v1962 = vrot.slane %v1285, 1
      %v1963 = vsel %vm1956, %v1960, %v1962
      %v1964 = vrot.slane %v1290, 1
      %v1965 = vsel %vm1956, %v1962, %v1964
      %1966 = vrot.lane.b32.xlu0 %v1959, 96
      %v1967 = vpop.permute.xlu0 %1966
      %1968 = vrot.lane.b32.xlu0 %v1961, 96
      %v1969 = vpop.permute.xlu0 %1968
      %1970 = vrot.lane.b32.xlu0 %v1963, 96
      %v1971 = vpop.permute.xlu0 %1970
      %1972 = vrot.lane.b32.xlu0 %v1965, 96
      %v1973 = vpop.permute.xlu0 %1972
      %1974 = vrot.lane.b32.xlu0 %v1964, 96
      %v1975 = vpop.permute.xlu0 %1974
      %v1976 = vsel %vm1318, %v1959, 0
      %v1978 = vsel %vm1318, %v1961, 0
      %v1980 = vsel %vm1318, %v1963, 0
      %v1982 = vsel %vm1318, %v1965, 0
      %v1984 = vsel %vm1318, %v1964, 0
      %v1986 = vsel %vm1318, %v1967, 0
      %v1988 = vsel %vm1318, %v1969, 0
      %v1990 = vsel %vm1318, %v1971, 0
      %v1992 = vsel %vm1318, %v1973, 0
      %v1994 = vsel %vm1318, %v1975, 0
      %1996 = vmatprep.subr.mxu0 0.0
      %1997 = vmatpush1.xpose.msra.mxu0 %v1986
      %1998 = vmatprep.subr.mxu0 0.0
      %1999 = vmatpush1.xpose.msra.mxu0 %v1988
      %2000 = vmatprep.subr.mxu0 0.0
      %2001 = vmatpush1.xpose.msra.mxu0 %v1990
      %2002 = vmatprep.subr.mxu0 0.0
      %2003 = vmatpush1.xpose.msra.mxu0 %v1992
      %2004 = vmatprep.subr.mxu0 0.0
      %2005 = vmatpush1.xpose.msra.mxu0 %v1994
      %2006 = vmatprep.subr.mxu0 0.0
      %2007 = vmatpush1.xpose.msra.mxu0 0.0
      %2008 = vmatprep.subr.mxu0 0.0
      %2009 = vmatpush1.xpose.msra.mxu0 0.0
      %2010 = vmatprep.subr.mxu0 0.0
      %2011 = vmatpush1.xpose.msra.mxu0 0.0
      %2012 = vmatprep.subr.mxu0 0.0
      %2013 = vmatpush1.xpose.msra.mxu0 0.0
      %2014 = vmatprep.subr.mxu0 0.0
      %2015 = vmatpush1.xpose.msra.mxu0 0.0
      %2016 = vmatprep.subr.mxu0 0.0
      %2017 = vmatpush1.xpose.msra.mxu0 0.0
      %2018 = vmatprep.subr.mxu0 0.0
      %2019 = vmatpush1.xpose.msra.mxu0 0.0
      %2020 = vmatprep.subr.mxu0 0.0
      %2021 = vmatpush1.xpose.msra.mxu0 0.0
      %2022 = vmatprep.subr.mxu0 0.0
      %2023 = vmatpush1.xpose.msra.mxu0 0.0
      %2024 = vmatprep.subr.mxu0 0.0
      %2025 = vmatpush1.xpose.msra.mxu0 0.0
      %2026 = vmatprep.subr.mxu0 0.0
      %2027 = vmatpush1.xpose.msra.mxu0 0.0
      %2028 = vmatprep.subr.mxu0 0.0
      %2029 = vmatpush1.xpose.msra.mxu0 0.0
      %2030 = vmatprep.subr.mxu0 0.0
      %2031 = vmatpush1.xpose.msra.mxu0 0.0
      %2032 = vmatprep.subr.mxu0 0.0
      %2033 = vmatpush1.xpose.msra.mxu0 0.0
      %2034 = vmatprep.subr.mxu0 0.0
      %2035 = vmatpush1.xpose.msra.mxu0 0.0
      %2036 = vmatprep.subr.mxu0 0.0
      %2037 = vmatpush1.xpose.msra.mxu0 0.0
      %2038 = vmatprep.subr.mxu0 0.0
      %2039 = vmatpush1.xpose.msra.mxu0 0.0
      %2040 = vmatprep.subr.mxu0 0.0
      %2041 = vmatpush1.xpose.msra.mxu0 0.0
      %2042 = vmatprep.subr.mxu0 0.0
      %2043 = vmatpush1.xpose.msra.mxu0 0.0
      %2044 = vmatprep.subr.mxu0 0.0
      %2045 = vmatpush1.xpose.msra.mxu0 0.0
      %2046 = vmatprep.subr.mxu0 0.0
      %2047 = vmatpush1.xpose.msra.mxu0 0.0
      %2048 = vmatprep.subr.mxu0 0.0
      %2049 = vmatpush1.xpose.msra.mxu0 0.0
      %2050 = vmatprep.subr.mxu0 0.0
      %2051 = vmatpush1.xpose.msra.mxu0 0.0
      %2052 = vmatprep.subr.mxu0 0.0
      %2053 = vmatpush1.xpose.msra.mxu0 0.0
      %2054 = vmatprep.subr.mxu0 0.0
      %2055 = vmatpush1.xpose.msra.mxu0 0.0
      %2056 = vmatprep.subr.mxu0 0.0
      %2057 = vmatpush1.xpose.msra.mxu0 0.0
      %2058 = vmatprep.subr.mxu0 0.0
      %2059 = vmatpush1.xpose.msra.mxu0 0.0
      %2060 = vmatprep.mubr.f32.mxu0 0.0
      %2061 = vmatmul.mubr.f32.gmra.mrb[0].mxu0 %v1976
      %v2062 = vpop.f32.mrb[0].mxu0
      %v2063 = vadd.f32 0.0, %v2062
      %v2064 = vpop.f32.mrb[0].mxu0
      %2065 = vmatprep.mubr.f32.mxu0 0.0
      %2066 = vmatmul.mubr.f32.gmra.mrb[0].mxu0 %v1978
      %v2067 = vpop.f32.mrb[0].mxu0
      %v2068 = vadd.f32 0.0, %v2067
      %v2069 = vpop.f32.mrb[0].mxu0
      %2070 = vmatprep.mubr.f32.mxu0 0.0
      %2071 = vmatmul.mubr.f32.gmra.mrb[0].mxu0 %v1980
      %v2072 = vpop.f32.mrb[0].mxu0
      %v2073 = vadd.f32 0.0, %v2072
      %v2074 = vpop.f32.mrb[0].mxu0
      %2075 = vmatprep.mubr.f32.mxu0 0.0
      %2076 = vmatmul.mubr.f32.gmra.mrb[0].mxu0 %v1982
      %v2077 = vpop.f32.mrb[0].mxu0
      %v2078 = vadd.f32 0.0, %v2077
      %v2079 = vpop.f32.mrb[0].mxu0
      %2080 = vmatprep.mubr.f32.mxu0 0.0
      %2081 = vmatmul.mubr.f32.gmra.mrb[0].mxu0 %v1984
      %v2082 = vpop.f32.mrb[0].mxu0
      %v2083 = vadd.f32 0.0, %v2082
      %v2084 = vpop.f32.mrb[0].mxu0
      %2085 = vdwg.mxu0
      %v2086 = vrot.slane %v1307, 1
      %v2087 = vrot.slane %v1949, 1
      %v2088 = vsel %vm1956, %v2086, %v2087
      %v2089 = vrot.slane %v1951, 1
      %v2090 = vsel %vm1956, %v2087, %v2089
      %v2091 = vrot.slane %v1953, 1
      %v2092 = vsel %vm1956, %v2089, %v2091
      %v2093 = vrot.slane %v1955, 1
      %v2094 = vsel %vm1956, %v2091, %v2093
      %2095 = vrot.lane.b32.xlu0 %v2088, 96
      %v2096 = vpop.permute.xlu0 %2095
      %2097 = vrot.lane.b32.xlu0 %v2090, 96
      %v2098 = vpop.permute.xlu0 %2097
      %2099 = vrot.lane.b32.xlu0 %v2092, 96
      %v2100 = vpop.permute.xlu0 %2099
      %2101 = vrot.lane.b32.xlu0 %v2094, 96
      %v2102 = vpop.permute.xlu0 %2101
      %2103 = vrot.lane.b32.xlu0 %v2093, 96
      %v2104 = vpop.permute.xlu0 %2103
      %v2105 = vsel %vm1318, %v2088, 0
      %v2107 = vsel %vm1318, %v2090, 0
      %v2109 = vsel %vm1318, %v2092, 0
      %v2111 = vsel %vm1318, %v2094, 0
      %v2113 = vsel %vm1318, %v2093, 0
      %v2115 = vsel %vm1318, %v2096, 0
      %v2117 = vsel %vm1318, %v2098, 0
      %v2119 = vsel %vm1318, %v2100, 0
      %v2121 = vsel %vm1318, %v2102, 0
      %v2123 = vsel %vm1318, %v2104, 0
      %2125 = vmatprep.subr.mxu0 0.0
      %2126 = vmatpush1.xpose.msra.mxu0 %v2115
      %2127 = vmatprep.subr.mxu0 0.0
      %2128 = vmatpush1.xpose.msra.mxu0 %v2117
      %2129 = vmatprep.subr.mxu0 0.0
      %2130 = vmatpush1.xpose.msra.mxu0 %v2119
      %2131 = vmatprep.subr.mxu0 0.0
      %2132 = vmatpush1.xpose.msra.mxu0 %v2121
      %2133 = vmatprep.subr.mxu0 0.0
      %2134 = vmatpush1.xpose.msra.mxu0 %v2123
      %2135 = vmatprep.subr.mxu0 0.0
      %2136 = vmatpush1.xpose.msra.mxu0 0.0
      %2137 = vmatprep.subr.mxu0 0.0
      %2138 = vmatpush1.xpose.msra.mxu0 0.0
      %2139 = vmatprep.subr.mxu0 0.0
      %2140 = vmatpush1.xpose.msra.mxu0 0.0
      %2141 = vmatprep.subr.mxu0 0.0
      %2142 = vmatpush1.xpose.msra.mxu0 0.0
      %2143 = vmatprep.subr.mxu0 0.0
      %2144 = vmatpush1.xpose.msra.mxu0 0.0
      %2145 = vmatprep.subr.mxu0 0.0
      %2146 = vmatpush1.xpose.msra.mxu0 0.0
      %2147 = vmatprep.subr.mxu0 0.0
      %2148 = vmatpush1.xpose.msra.mxu0 0.0
      %2149 = vmatprep.subr.mxu0 0.0
      %2150 = vmatpush1.xpose.msra.mxu0 0.0
      %2151 = vmatprep.subr.mxu0 0.0
      %2152 = vmatpush1.xpose.msra.mxu0 0.0
      %2153 = vmatprep.subr.mxu0 0.0
      %2154 = vmatpush1.xpose.msra.mxu0 0.0
      %2155 = vmatprep.subr.mxu0 0.0
      %2156 = vmatpush1.xpose.msra.mxu0 0.0
      %2157 = vmatprep.subr.mxu0 0.0
      %2158 = vmatpush1.xpose.msra.mxu0 0.0
      %2159 = vmatprep.subr.mxu0 0.0
      %2160 = vmatpush1.xpose.msra.mxu0 0.0
      %2161 = vmatprep.subr.mxu0 0.0
      %2162 = vmatpush1.xpose.msra.mxu0 0.0
      %2163 = vmatprep.subr.mxu0 0.0
      %2164 = vmatpush1.xpose.msra.mxu0 0.0
      %2165 = vmatprep.subr.mxu0 0.0
      %2166 = vmatpush1.xpose.msra.mxu0 0.0
      %2167 = vmatprep.subr.mxu0 0.0
      %2168 = vmatpush1.xpose.msra.mxu0 0.0
      %2169 = vmatprep.subr.mxu0 0.0
      %2170 = vmatpush1.xpose.msra.mxu0 0.0
      %2171 = vmatprep.subr.mxu0 0.0
      %2172 = vmatpush1.xpose.msra.mxu0 0.0
      %2173 = vmatprep.subr.mxu0 0.0
      %2174 = vmatpush1.xpose.msra.mxu0 0.0
      %2175 = vmatprep.subr.mxu0 0.0
      %2176 = vmatpush1.xpose.msra.mxu0 0.0
      %2177 = vmatprep.subr.mxu0 0.0
      %2178 = vmatpush1.xpose.msra.mxu0 0.0
      %2179 = vmatprep.subr.mxu0 0.0
      %2180 = vmatpush1.xpose.msra.mxu0 0.0
      %2181 = vmatprep.subr.mxu0 0.0
      %2182 = vmatpush1.xpose.msra.mxu0 0.0
      %2183 = vmatprep.subr.mxu0 0.0
      %2184 = vmatpush1.xpose.msra.mxu0 0.0
      %2185 = vmatprep.subr.mxu0 0.0
      %2186 = vmatpush1.xpose.msra.mxu0 0.0
      %2187 = vmatprep.subr.mxu0 0.0
      %2188 = vmatpush1.xpose.msra.mxu0 0.0
      %2189 = vmatprep.mubr.f32.mxu0 0.0
      %2190 = vmatmul.mubr.f32.gmra.mrb[0].mxu0 %v2105
      %v2191 = vpop.f32.mrb[0].mxu0
      %v2192 = vadd.f32 0.0, %v2191
      %v2193 = vpop.f32.mrb[0].mxu0
      %2194 = vmatprep.mubr.f32.mxu0 0.0
      %2195 = vmatmul.mubr.f32.gmra.mrb[0].mxu0 %v2107
      %v2196 = vpop.f32.mrb[0].mxu0
      %v2197 = vadd.f32 0.0, %v2196
      %v2198 = vpop.f32.mrb[0].mxu0
      %2199 = vmatprep.mubr.f32.mxu0 0.0
      %2200 = vmatmul.mubr.f32.gmra.mrb[0].mxu0 %v2109
      %v2201 = vpop.f32.mrb[0].mxu0
      %v2202 = vadd.f32 0.0, %v2201
      %v2203 = vpop.f32.mrb[0].mxu0
      %2204 = vmatprep.mubr.f32.mxu0 0.0
      %2205 = vmatmul.mubr.f32.gmra.mrb[0].mxu0 %v2111
      %v2206 = vpop.f32.mrb[0].mxu0
      %v2207 = vadd.f32 0.0, %v2206
      %v2208 = vpop.f32.mrb[0].mxu0
      %2209 = vmatprep.mubr.f32.mxu0 0.0
      %2210 = vmatmul.mubr.f32.gmra.mrb[0].mxu0 %v2113
      %v2211 = vpop.f32.mrb[0].mxu0
      %v2212 = vadd.f32 0.0, %v2211
      %v2213 = vpop.f32.mrb[0].mxu0
      %2214 = vdwg.mxu0
      %v2215 = vmul.f32 %v2063, 0.25
      %v2216 = vmul.f32 %v2068, 0.25
      %v2217 = vmul.f32 %v2073, 0.25
      %v2218 = vmul.f32 %v2078, 0.25
      %v2219 = vmul.f32 %v2083, 0.25
      %v2220 = vmul.f32 %v2192, 0.25
      %v2221 = vmul.f32 %v2197, 0.25
      %v2222 = vmul.f32 %v2202, 0.25
      %v2223 = vmul.f32 %v2207, 0.25
      %v2224 = vmul.f32 %v2212, 0.25
      %v2225 = vsel %vm1559, %v2215, -inf
      %2226 = vmax.xlane.f32.xlu0 %v2225
      %v2227 = vpop.xlane.xlu0 %2226
      %v2228 = vsel %vm1559, %v2216, -inf
      %2229 = vmax.xlane.f32.xlu0 %v2228
      %v2230 = vpop.xlane.xlu0 %2229
      %v2231 = vsel %vm1559, %v2217, -inf
      %2232 = vmax.xlane.f32.xlu0 %v2231
      %v2233 = vpop.xlane.xlu0 %2232
      %v2234 = vsel %vm1559, %v2218, -inf
      %2235 = vmax.xlane.f32.xlu0 %v2234
      %v2236 = vpop.xlane.xlu0 %2235
      %v2237 = vsel %vm1572, %v2219, -inf
      %2238 = vmax.xlane.f32.xlu0 %v2237
      %v2239 = vpop.xlane.xlu0 %2238
      %v2240 = vsel %vm1559, %v2220, -inf
      %2241 = vmax.xlane.f32.xlu0 %v2240
      %v2242 = vpop.xlane.xlu0 %2241
      %v2243 = vsel %vm1559, %v2221, -inf
      %2244 = vmax.xlane.f32.xlu0 %v2243
      %v2245 = vpop.xlane.xlu0 %2244
      %v2246 = vsel %vm1559, %v2222, -inf
      %2247 = vmax.xlane.f32.xlu0 %v2246
      %v2248 = vpop.xlane.xlu0 %2247
      %v2249 = vsel %vm1559, %v2223, -inf
      %2250 = vmax.xlane.f32.xlu0 %v2249
      %v2251 = vpop.xlane.xlu0 %2250
      %v2252 = vsel %vm1572, %v2224, -inf
      %2253 = vmax.xlane.f32.xlu0 %v2252
      %v2254 = vpop.xlane.xlu0 %2253
      %v2255 = vsub.f32 %v2215, %v2227
      %v2256 = vsub.f32 %v2216, %v2230
      %v2257 = vsub.f32 %v2217, %v2233
      %v2258 = vsub.f32 %v2218, %v2236
      %v2259 = vsub.f32 %v2219, %v2239
      %v2260 = vsub.f32 %v2220, %v2242
      %v2261 = vsub.f32 %v2221, %v2245
      %v2262 = vsub.f32 %v2222, %v2248
      %v2263 = vsub.f32 %v2223, %v2251
      %v2264 = vsub.f32 %v2224, %v2254
      %v2265 = vmul.f32 %v2255, 1.442695
      %v2266 = vpow.pop %v2265
      %v2267 = vmul.f32 %v2256, 1.442695
      %v2268 = vpow.pop %v2267
      %v2269 = vmul.f32 %v2257, 1.442695
      %v2270 = vpow.pop %v2269
      %v2271 = vmul.f32 %v2258, 1.442695
      %v2272 = vpow.pop %v2271
      %v2273 = vmul.f32 %v2259, 1.442695
      %v2274 = vpow.pop %v2273
      %v2275 = vmul.f32 %v2260, 1.442695
      %v2276 = vpow.pop %v2275
      %v2277 = vmul.f32 %v2261, 1.442695
      %v2278 = vpow.pop %v2277
      %v2279 = vmul.f32 %v2262, 1.442695
      %v2280 = vpow.pop %v2279
      %v2281 = vmul.f32 %v2263, 1.442695
      %v2282 = vpow.pop %v2281
      %v2283 = vmul.f32 %v2264, 1.442695
      %v2284 = vpow.pop %v2283
      %v2285 = vsel %vm1559, %v2266, 0.0
      %2286 = vadd.xlane.f32.xlu0 %v2285
      %v2287 = vpop.xlane.xlu0 %2286
      %v2288 = vsel %vm1559, %v2268, 0.0
      %2289 = vadd.xlane.f32.xlu0 %v2288
      %v2290 = vpop.xlane.xlu0 %2289
      %v2291 = vsel %vm1559, %v2270, 0.0
      %2292 = vadd.xlane.f32.xlu0 %v2291
      %v2293 = vpop.xlane.xlu0 %2292
      %v2294 = vsel %vm1559, %v2272, 0.0
      %2295 = vadd.xlane.f32.xlu0 %v2294
      %v2296 = vpop.xlane.xlu0 %2295
      %v2297 = vsel %vm1572, %v2274, 0.0
      %2298 = vadd.xlane.f32.xlu0 %v2297
      %v2299 = vpop.xlane.xlu0 %2298
      %v2300 = vsel %vm1559, %v2276, 0.0
      %2301 = vadd.xlane.f32.xlu0 %v2300
      %v2302 = vpop.xlane.xlu0 %2301
      %v2303 = vsel %vm1559, %v2278, 0.0
      %2304 = vadd.xlane.f32.xlu0 %v2303
      %v2305 = vpop.xlane.xlu0 %2304
      %v2306 = vsel %vm1559, %v2280, 0.0
      %2307 = vadd.xlane.f32.xlu0 %v2306
      %v2308 = vpop.xlane.xlu0 %2307
      %v2309 = vsel %vm1559, %v2282, 0.0
      %2310 = vadd.xlane.f32.xlu0 %v2309
      %v2311 = vpop.xlane.xlu0 %2310
      %v2312 = vsel %vm1572, %v2284, 0.0
      %2313 = vadd.xlane.f32.xlu0 %v2312
      %v2314 = vpop.xlane.xlu0 %2313
      %v2315 = vrcp.pop %v2287
      %v2316 = vrcp.pop %v2290
      %v2317 = vrcp.pop %v2293
      %v2318 = vrcp.pop %v2296
      %v2319 = vrcp.pop %v2299
      %v2320 = vrcp.pop %v2302
      %v2321 = vrcp.pop %v2305
      %v2322 = vrcp.pop %v2308
      %v2323 = vrcp.pop %v2311
      %v2324 = vrcp.pop %v2314
      %v2325 = vmul.f32 %v2266, %v2315
      %v2326 = vmul.f32 %v2268, %v2316
      %v2327 = vmul.f32 %v2270, %v2317
      %v2328 = vmul.f32 %v2272, %v2318
      %v2329 = vmul.f32 %v2274, %v2319
      %v2330 = vmul.f32 %v2276, %v2320
      %v2331 = vmul.f32 %v2278, %v2321
      %v2332 = vmul.f32 %v2280, %v2322
      %v2333 = vmul.f32 %v2282, %v2323
      %v2334 = vmul.f32 %v2284, %v2324
      %2335 = vrot.lane.b32.xlu0 %v1959, 64
      %v2336 = vpop.permute.xlu0 %2335
      %2337 = vrot.lane.b32.xlu0 %v1961, 64
      %v2338 = vpop.permute.xlu0 %2337
      %2339 = vrot.lane.b32.xlu0 %v1963, 64
      %v2340 = vpop.permute.xlu0 %2339
      %2341 = vrot.lane.b32.xlu0 %v1965, 64
      %v2342 = vpop.permute.xlu0 %2341
      %2343 = vrot.lane.b32.xlu0 %v1964, 64
      %v2344 = vpop.permute.xlu0 %2343
      %v2350 = vsel %vm1559, %v2325, 0
      %v2353 = vsel %vm1559, %v2326, 0
      %v2356 = vsel %vm1559, %v2327, 0
      %v2359 = vsel %vm1559, %v2328, 0
      %v2362 = vsel %vm1559, %v2329, 0
      %v2364 = vsel %vm1700, %v2344, 0
      %2366 = vmatprep.subr.mxu0 0.0
      %2367 = vmatpush1.msra.mxu0 %v2336
      %2368 = vmatprep.subr.mxu0 0.0
      %2369 = vmatpush1.msra.mxu0 %v2338
      %2370 = vmatprep.subr.mxu0 0.0
      %2371 = vmatpush1.msra.mxu0 %v2340
      %2372 = vmatprep.subr.mxu0 0.0
      %2373 = vmatpush1.msra.mxu0 %v2342
      %2374 = vmatprep.subr.mxu0 0.0
      %2375 = vmatpush1.msra.mxu0 %v2364
      %2376 = vmatprep.subr.mxu0 0.0
      %2377 = vmatpush1.msra.mxu0 0.0
      %2378 = vmatprep.subr.mxu0 0.0
      %2379 = vmatpush1.msra.mxu0 0.0
      %2380 = vmatprep.subr.mxu0 0.0
      %2381 = vmatpush1.msra.mxu0 0.0
      %2382 = vmatprep.subr.mxu0 0.0
      %2383 = vmatpush1.msra.mxu0 0.0
      %2384 = vmatprep.subr.mxu0 0.0
      %2385 = vmatpush1.msra.mxu0 0.0
      %2386 = vmatprep.subr.mxu0 0.0
      %2387 = vmatpush1.msra.mxu0 0.0
      %2388 = vmatprep.subr.mxu0 0.0
      %2389 = vmatpush1.msra.mxu0 0.0
      %2390 = vmatprep.subr.mxu0 0.0
      %2391 = vmatpush1.msra.mxu0 0.0
      %2392 = vmatprep.subr.mxu0 0.0
      %2393 = vmatpush1.msra.mxu0 0.0
      %2394 = vmatprep.subr.mxu0 0.0
      %2395 = vmatpush1.msra.mxu0 0.0
      %2396 = vmatprep.subr.mxu0 0.0
      %2397 = vmatpush1.msra.mxu0 0.0
      %2398 = vmatprep.subr.mxu0 0.0
      %2399 = vmatpush1.msra.mxu0 0.0
      %2400 = vmatprep.subr.mxu0 0.0
      %2401 = vmatpush1.msra.mxu0 0.0
      %2402 = vmatprep.subr.mxu0 0.0
      %2403 = vmatpush1.msra.mxu0 0.0
      %2404 = vmatprep.subr.mxu0 0.0
      %2405 = vmatpush1.msra.mxu0 0.0
      %2406 = vmatprep.subr.mxu0 0.0
      %2407 = vmatpush1.msra.mxu0 0.0
      %2408 = vmatprep.subr.mxu0 0.0
      %2409 = vmatpush1.msra.mxu0 0.0
      %2410 = vmatprep.subr.mxu0 0.0
      %2411 = vmatpush1.msra.mxu0 0.0
      %2412 = vmatprep.subr.mxu0 0.0
      %2413 = vmatpush1.msra.mxu0 0.0
      %2414 = vmatprep.subr.mxu0 0.0
      %2415 = vmatpush1.msra.mxu0 0.0
      %2416 = vmatprep.subr.mxu0 0.0
      %2417 = vmatpush1.msra.mxu0 0.0
      %2418 = vmatprep.subr.mxu0 0.0
      %2419 = vmatpush1.msra.mxu0 0.0
      %2420 = vmatprep.subr.mxu0 0.0
      %2421 = vmatpush1.msra.mxu0 0.0
      %2422 = vmatprep.subr.mxu0 0.0
      %2423 = vmatpush1.msra.mxu0 0.0
      %2424 = vmatprep.subr.mxu0 0.0
      %2425 = vmatpush1.msra.mxu0 0.0
      %2426 = vmatprep.subr.mxu0 0.0
      %2427 = vmatpush1.msra.mxu0 0.0
      %2428 = vmatprep.subr.mxu0 0.0
      %2429 = vmatpush1.msra.mxu0 0.0
      %2430 = vmatprep.mubr.f32.mxu0 0.0
      %2431 = vmatmul.mubr.f32.gmra.mrb[0].mxu0 %v2350
      %v2432 = vpop.f32.mrb[0].mxu0
      %v2433 = vadd.f32 0.0, %v2432
      %v2434 = vpop.f32.mrb[0].mxu0
      %2435 = vmatprep.mubr.f32.mxu0 0.0
      %2436 = vmatmul.mubr.f32.gmra.mrb[0].mxu0 %v2353
      %v2437 = vpop.f32.mrb[0].mxu0
      %v2438 = vadd.f32 0.0, %v2437
      %v2439 = vpop.f32.mrb[0].mxu0
      %2440 = vmatprep.mubr.f32.mxu0 0.0
      %2441 = vmatmul.mubr.f32.gmra.mrb[0].mxu0 %v2356
      %v2442 = vpop.f32.mrb[0].mxu0
      %v2443 = vadd.f32 0.0, %v2442
      %v2444 = vpop.f32.mrb[0].mxu0
      %2445 = vmatprep.mubr.f32.mxu0 0.0
      %2446 = vmatmul.mubr.f32.gmra.mrb[0].mxu0 %v2359
      %v2447 = vpop.f32.mrb[0].mxu0
      %v2448 = vadd.f32 0.0, %v2447
      %v2449 = vpop.f32.mrb[0].mxu0
      %2450 = vmatprep.mubr.f32.mxu0 0.0
      %2451 = vmatmul.mubr.f32.gmra.mrb[0].mxu0 %v2362
      %v2452 = vpop.f32.mrb[0].mxu0
      %v2453 = vadd.f32 0.0, %v2452
      %v2454 = vpop.f32.mrb[0].mxu0
      %2455 = vdwg.mxu0
      %2456 = vrot.lane.b32.xlu0 %v2088, 64
      %v2457 = vpop.permute.xlu0 %2456
      %2458 = vrot.lane.b32.xlu0 %v2090, 64
      %v2459 = vpop.permute.xlu0 %2458
      %2460 = vrot.lane.b32.xlu0 %v2092, 64
      %v2461 = vpop.permute.xlu0 %2460
      %2462 = vrot.lane.b32.xlu0 %v2094, 64
      %v2463 = vpop.permute.xlu0 %2462
      %2464 = vrot.lane.b32.xlu0 %v2093, 64
      %v2465 = vpop.permute.xlu0 %2464
      %v2471 = vsel %vm1559, %v2330, 0
      %v2474 = vsel %vm1559, %v2331, 0
      %v2477 = vsel %vm1559, %v2332, 0
      %v2480 = vsel %vm1559, %v2333, 0
      %v2483 = vsel %vm1559, %v2334, 0
      %v2485 = vsel %vm1700, %v2465, 0
      %2487 = vmatprep.subr.mxu0 0.0
      %2488 = vmatpush1.msra.mxu0 %v2457
      %2489 = vmatprep.subr.mxu0 0.0
      %2490 = vmatpush1.msra.mxu0 %v2459
      %2491 = vmatprep.subr.mxu0 0.0
      %2492 = vmatpush1.msra.mxu0 %v2461
      %2493 = vmatprep.subr.mxu0 0.0
      %2494 = vmatpush1.msra.mxu0 %v2463
      %2495 = vmatprep.subr.mxu0 0.0
      %2496 = vmatpush1.msra.mxu0 %v2485
      %2497 = vmatprep.subr.mxu0 0.0
      %2498 = vmatpush1.msra.mxu0 0.0
      %2499 = vmatprep.subr.mxu0 0.0
      %2500 = vmatpush1.msra.mxu0 0.0
      %2501 = vmatprep.subr.mxu0 0.0
      %2502 = vmatpush1.msra.mxu0 0.0
      %2503 = vmatprep.subr.mxu0 0.0
      %2504 = vmatpush1.msra.mxu0 0.0
      %2505 = vmatprep.subr.mxu0 0.0
      %2506 = vmatpush1.msra.mxu0 0.0
      %2507 = vmatprep.subr.mxu0 0.0
      %2508 = vmatpush1.msra.mxu0 0.0
      %2509 = vmatprep.subr.mxu0 0.0
      %2510 = vmatpush1.msra.mxu0 0.0
      %2511 = vmatprep.subr.mxu0 0.0
      %2512 = vmatpush1.msra.mxu0 0.0
      %2513 = vmatprep.subr.mxu0 0.0
      %2514 = vmatpush1.msra.mxu0 0.0
      %2515 = vmatprep.subr.mxu0 0.0
      %2516 = vmatpush1.msra.mxu0 0.0
      %2517 = vmatprep.subr.mxu0 0.0
      %2518 = vmatpush1.msra.mxu0 0.0
      %2519 = vmatprep.subr.mxu0 0.0
      %2520 = vmatpush1.msra.mxu0 0.0
      %2521 = vmatprep.subr.mxu0 0.0
      %2522 = vmatpush1.msra.mxu0 0.0
      %2523 = vmatprep.subr.mxu0 0.0
      %2524 = vmatpush1.msra.mxu0 0.0
      %2525 = vmatprep.subr.mxu0 0.0
      %2526 = vmatpush1.msra.mxu0 0.0
      %2527 = vmatprep.subr.mxu0 0.0
      %2528 = vmatpush1.msra.mxu0 0.0
      %2529 = vmatprep.subr.mxu0 0.0
      %2530 = vmatpush1.msra.mxu0 0.0
      %2531 = vmatprep.subr.mxu0 0.0
      %2532 = vmatpush1.msra.mxu0 0.0
      %2533 = vmatprep.subr.mxu0 0.0
      %2534 = vmatpush1.msra.mxu0 0.0
      %2535 = vmatprep.subr.mxu0 0.0
      %2536 = vmatpush1.msra.mxu0 0.0
      %2537 = vmatprep.subr.mxu0 0.0
      %2538 = vmatpush1.msra.mxu0 0.0
      %2539 = vmatprep.subr.mxu0 0.0
      %2540 = vmatpush1.msra.mxu0 0.0
      %2541 = vmatprep.subr.mxu0 0.0
      %2542 = vmatpush1.msra.mxu0 0.0
      %2543 = vmatprep.subr.mxu0 0.0
      %2544 = vmatpush1.msra.mxu0 0.0
      %2545 = vmatprep.subr.mxu0 0.0
      %2546 = vmatpush1.msra.mxu0 0.0
      %2547 = vmatprep.subr.mxu0 0.0
      %2548 = vmatpush1.msra.mxu0 0.0
      %2549 = vmatprep.subr.mxu0 0.0
      %2550 = vmatpush1.msra.mxu0 0.0
      %2551 = vmatprep.mubr.f32.mxu0 0.0
      %2552 = vmatmul.mubr.f32.gmra.mrb[0].mxu0 %v2471
      %v2553 = vpop.f32.mrb[0].mxu0
      %v2554 = vadd.f32 0.0, %v2553
      %v2555 = vpop.f32.mrb[0].mxu0
      %2556 = vmatprep.mubr.f32.mxu0 0.0
      %2557 = vmatmul.mubr.f32.gmra.mrb[0].mxu0 %v2474
      %v2558 = vpop.f32.mrb[0].mxu0
      %v2559 = vadd.f32 0.0, %v2558
      %v2560 = vpop.f32.mrb[0].mxu0
      %2561 = vmatprep.mubr.f32.mxu0 0.0
      %2562 = vmatmul.mubr.f32.gmra.mrb[0].mxu0 %v2477
      %v2563 = vpop.f32.mrb[0].mxu0
      %v2564 = vadd.f32 0.0, %v2563
      %v2565 = vpop.f32.mrb[0].mxu0
      %2566 = vmatprep.mubr.f32.mxu0 0.0
      %2567 = vmatmul.mubr.f32.gmra.mrb[0].mxu0 %v2480
      %v2568 = vpop.f32.mrb[0].mxu0
      %v2569 = vadd.f32 0.0, %v2568
      %v2570 = vpop.f32.mrb[0].mxu0
      %2571 = vmatprep.mubr.f32.mxu0 0.0
      %2572 = vmatmul.mubr.f32.gmra.mrb[0].mxu0 %v2483
      %v2573 = vpop.f32.mrb[0].mxu0
      %v2574 = vadd.f32 0.0, %v2573
      %v2575 = vpop.f32.mrb[0].mxu0
      %2576 = vdwg.mxu0
      %2582 = vrot.lane.b32.xlu0 %v2554, 16
      %v2583 = vpop.permute.xlu0 %2582
      %2584 = vrot.lane.b32.xlu0 %v2559, 16
      %v2585 = vpop.permute.xlu0 %2584
      %2586 = vrot.lane.b32.xlu0 %v2564, 16
      %v2587 = vpop.permute.xlu0 %2586
      %2588 = vrot.lane.b32.xlu0 %v2569, 16
      %v2589 = vpop.permute.xlu0 %2588
      %2590 = vrot.lane.b32.xlu0 %v2574, 16
      %v2591 = vpop.permute.xlu0 %2590
      %v2597 = vsel %vm1318, %v2433, %v2583
      %v2598 = vsel %vm1318, %v2438, %v2585
      %v2599 = vsel %vm1318, %v2443, %v2587
      %v2600 = vsel %vm1318, %v2448, %v2589
      %v2601 = vsel %vm1318, %v2453, %v2591
      %v2607 = vrot.slane %v2597, 7
      %v2608 = vrot.slane %v2598, 7
      %v2609 = vsel %vm1700, %v2607, %v2608
      %v2610 = vrot.slane %v2599, 7
      %v2611 = vsel %vm1700, %v2608, %v2610
      %v2612 = vrot.slane %v2600, 7
      %v2613 = vsel %vm1700, %v2610, %v2612
      %v2614 = vrot.slane %v2601, 7
      %v2615 = vsel %vm1700, %v2612, %v2614
      %v2621 = vadd.f32 %v971, %v2607
      %v2622 = vadd.f32 %v972, %v2609
      %v2623 = vadd.f32 %v973, %v2611
      %v2624 = vadd.f32 %v974, %v2613
      %v2625 = vadd.f32 %v975, %v2615
      %v2626 = vsel %vm1700, %v1943, %v2621
      %v2627 = vld [vmem:[%s697] sm:$0x1]
      %v2628 = vld [vmem:[%s700] sm:$0x1]
      %v2629 = vsel %vm978, %v1939, 0.0
      %2630 = vadd.xlane.f32.xlu0 %v2629
      %v2631 = vpop.xlane.xlu0 %2630
      %v2632 = vsel %vm978, %v1940, 0.0
      %2633 = vadd.xlane.f32.xlu0 %v2632
      %v2634 = vpop.xlane.xlu0 %2633
      %v2635 = vsel %vm978, %v1941, 0.0
      %2636 = vadd.xlane.f32.xlu0 %v2635
      %v2637 = vpop.xlane.xlu0 %2636
      %v2638 = vsel %vm978, %v1942, 0.0
      %2639 = vadd.xlane.f32.xlu0 %v2638
      %v2640 = vpop.xlane.xlu0 %2639
      %v2641 = vsel %vm978, %v2626, 0.0
      %2642 = vadd.xlane.f32.xlu0 %v2641
      %v2643 = vpop.xlane.xlu0 %2642
      %v2644 = vsel %vm978, %v2622, 0.0
      %2645 = vadd.xlane.f32.xlu0 %v2644
      %v2646 = vpop.xlane.xlu0 %2645
      %v2647 = vsel %vm978, %v2623, 0.0
      %2648 = vadd.xlane.f32.xlu0 %v2647
      %v2649 = vpop.xlane.xlu0 %2648
      %v2650 = vsel %vm978, %v2624, 0.0
      %2651 = vadd.xlane.f32.xlu0 %v2650
      %v2652 = vpop.xlane.xlu0 %2651
      %v2653 = vsel %vm1003, %v2625, 0.0
      %2654 = vadd.xlane.f32.xlu0 %v2653
      %v2655 = vpop.xlane.xlu0 %2654
      %v2656 = vmul.f32 %v1939, %v1939
      %v2657 = vmul.f32 %v1940, %v1940
      %v2658 = vmul.f32 %v1941, %v1941
      %v2659 = vmul.f32 %v1942, %v1942
      %v2660 = vmul.f32 %v2626, %v2626
      %v2661 = vmul.f32 %v2622, %v2622
      %v2662 = vmul.f32 %v2623, %v2623
      %v2663 = vmul.f32 %v2624, %v2624
      %v2664 = vmul.f32 %v2625, %v2625
      %v2665 = vsel %vm978, %v2656, 0.0
      %2666 = vadd.xlane.f32.xlu0 %v2665
      %v2667 = vpop.xlane.xlu0 %2666
      %v2668 = vsel %vm978, %v2657, 0.0
      %2669 = vadd.xlane.f32.xlu0 %v2668
      %v2670 = vpop.xlane.xlu0 %2669
      %v2671 = vsel %vm978, %v2658, 0.0
      %2672 = vadd.xlane.f32.xlu0 %v2671
      %v2673 = vpop.xlane.xlu0 %2672
      %v2674 = vsel %vm978, %v2659, 0.0
      %2675 = vadd.xlane.f32.xlu0 %v2674
      %v2676 = vpop.xlane.xlu0 %2675
      %v2677 = vsel %vm978, %v2660, 0.0
      %2678 = vadd.xlane.f32.xlu0 %v2677
      %v2679 = vpop.xlane.xlu0 %2678
      %v2680 = vsel %vm978, %v2661, 0.0
      %2681 = vadd.xlane.f32.xlu0 %v2680
      %v2682 = vpop.xlane.xlu0 %2681
      %v2683 = vsel %vm978, %v2662, 0.0
      %2684 = vadd.xlane.f32.xlu0 %v2683
      %v2685 = vpop.xlane.xlu0 %2684
      %v2686 = vsel %vm978, %v2663, 0.0
      %2687 = vadd.xlane.f32.xlu0 %v2686
      %v2688 = vpop.xlane.xlu0 %2687
      %v2689 = vsel %vm1003, %v2664, 0.0
      %2690 = vadd.xlane.f32.xlu0 %v2689
      %v2691 = vpop.xlane.xlu0 %2690
      %v2692 = vmul.f32 %v2631, 0.03125
      %v2693 = vmul.f32 %v2634, 0.03125
      %v2694 = vmul.f32 %v2637, 0.03125
      %v2695 = vmul.f32 %v2640, 0.03125
      %v2696 = vmul.f32 %v2643, 0.03125
      %v2697 = vmul.f32 %v2646, 0.03125
      %v2698 = vmul.f32 %v2649, 0.03125
      %v2699 = vmul.f32 %v2652, 0.03125
      %v2700 = vmul.f32 %v2655, 0.03125
      %v2701 = vmul.f32 %v2667, 0.03125
      %v2702 = vmul.f32 %v2670, 0.03125
      %v2703 = vmul.f32 %v2673, 0.03125
      %v2704 = vmul.f32 %v2676, 0.03125
      %v2705 = vmul.f32 %v2679, 0.03125
      %v2706 = vmul.f32 %v2682, 0.03125
      %v2707 = vmul.f32 %v2685, 0.03125
      %v2708 = vmul.f32 %v2688, 0.03125
      %v2709 = vmul.f32 %v2691, 0.03125
      %v2710 = vmul.f32 %v2692, %v2692
      %v2711 = vmul.f32 %v2693, %v2693
      %v2712 = vmul.f32 %v2694, %v2694
      %v2713 = vmul.f32 %v2695, %v2695
      %v2714 = vmul.f32 %v2696, %v2696
      %v2715 = vmul.f32 %v2697, %v2697
      %v2716 = vmul.f32 %v2698, %v2698
      %v2717 = vmul.f32 %v2699, %v2699
      %v2718 = vmul.f32 %v2700, %v2700
      %v2719 = vsub.f32 %v2701, %v2710
      %v2720 = vsub.f32 %v2702, %v2711
      %v2721 = vsub.f32 %v2703, %v2712
      %v2722 = vsub.f32 %v2704, %v2713
      %v2723 = vsub.f32 %v2705, %v2714
      %v2724 = vsub.f32 %v2706, %v2715
      %v2725 = vsub.f32 %v2707, %v2716
      %v2726 = vsub.f32 %v2708, %v2717
      %v2727 = vsub.f32 %v2709, %v2718
      %v2728 = vsub.f32 %v1939, %v2692
      %v2729 = vsub.f32 %v1940, %v2693
      %v2730 = vsub.f32 %v1941, %v2694
      %v2731 = vsub.f32 %v1942, %v2695
      %v2732 = vsub.f32 %v2626, %v2696
      %v2733 = vsub.f32 %v2622, %v2697
      %v2734 = vsub.f32 %v2623, %v2698
      %v2735 = vsub.f32 %v2624, %v2699
      %v2736 = vsub.f32 %v2625, %v2700
      %v2737 = vadd.f32 %v2719, 1e-05
      %v2738 = vadd.f32 %v2720, 1e-05
      %v2739 = vadd.f32 %v2721, 1e-05
      %v2740 = vadd.f32 %v2722, 1e-05
      %v2741 = vadd.f32 %v2723, 1e-05
      %v2742 = vadd.f32 %v2724, 1e-05
      %v2743 = vadd.f32 %v2725, 1e-05
      %v2744 = vadd.f32 %v2726, 1e-05
      %v2745 = vadd.f32 %v2727, 1e-05
      %v2746 = vrsqrt.pop %v2737
      %v2747 = vrsqrt.pop %v2738
      %v2748 = vrsqrt.pop %v2739
      %v2749 = vrsqrt.pop %v2740
      %v2750 = vrsqrt.pop %v2741
      %v2751 = vrsqrt.pop %v2742
      %v2752 = vrsqrt.pop %v2743
      %v2753 = vrsqrt.pop %v2744
      %v2754 = vrsqrt.pop %v2745
      %v2755 = vmul.f32 %v2728, %v2746
      %v2756 = vmul.f32 %v2729, %v2747
      %v2757 = vmul.f32 %v2730, %v2748
      %v2758 = vmul.f32 %v2731, %v2749
      %v2759 = vmul.f32 %v2732, %v2750
      %v2760 = vmul.f32 %v2733, %v2751
      %v2761 = vmul.f32 %v2734, %v2752
      %v2762 = vmul.f32 %v2735, %v2753
      %v2763 = vmul.f32 %v2736, %v2754
      %v2765 = vlaneseq
      %v2766 = vshrl.u32 %v2765, 7
      %v2767 = vsub.s32 0, %v2766
      %v2768 = vrot.slane %v2627, %v2767
      %v2770 = vmul.f32 %v2755, %v2768
      %v2771 = vmul.f32 %v2756, %v2768
      %v2772 = vmul.f32 %v2757, %v2768
      %v2773 = vmul.f32 %v2758, %v2768
      %v2774 = vmul.f32 %v2759, %v2768
      %v2775 = vmul.f32 %v2760, %v2768
      %v2776 = vmul.f32 %v2761, %v2768
      %v2777 = vmul.f32 %v2762, %v2768
      %v2778 = vmul.f32 %v2763, %v2768
      %v2780 = vlaneseq
      %v2781 = vshrl.u32 %v2780, 7
      %v2782 = vsub.s32 0, %v2781
      %v2783 = vrot.slane %v2628, %v2782
      %v2785 = vadd.f32 %v2770, %v2783
      %v2786 = vadd.f32 %v2771, %v2783
      %v2787 = vadd.f32 %v2772, %v2783
      %v2788 = vadd.f32 %v2773, %v2783
      %v2789 = vadd.f32 %v2774, %v2783
      %v2790 = vadd.f32 %v2775, %v2783
      %v2791 = vadd.f32 %v2776, %v2783
      %v2792 = vadd.f32 %v2777, %v2783
      %v2793 = vadd.f32 %v2778, %v2783
      %v2794 = vld [vmem:[%s705] sm:$0xff]
      %v2795 = vld [vmem:[%s705 + $0x8] sm:$0xff]
      %v2796 = vld [vmem:[%s705 + $0x10] sm:$0xff]
      %v2797 = vld [vmem:[%s705 + $0x18] sm:$0xff]
      %v2798 = vld [vmem:[%s713] sm:$0xff]
      %v2799 = vld [vmem:[%s713 + $0x8] sm:$0xff]
      %v2800 = vld [vmem:[%s713 + $0x10] sm:$0xff]
      %v2801 = vld [vmem:[%s713 + $0x18] sm:$0xff]
      %v2802 = vld [vmem:[%s713 + $0x20] sm:$0xff]
      %v2803 = vld [vmem:[%s713 + $0x28] sm:$0xff]
      %v2804 = vld [vmem:[%s713 + $0x30] sm:$0xff]
      %v2805 = vld [vmem:[%s713 + $0x38] sm:$0xff]
      %v2806 = vld [vmem:[%s713 + $0x40] sm:$0xff]
      %v2807 = vld [vmem:[%s713 + $0x48] sm:$0xff]
      %v2808 = vld [vmem:[%s713 + $0x50] sm:$0xff]
      %v2809 = vld [vmem:[%s713 + $0x58] sm:$0xff]
      %v2810 = vld [vmem:[%s713 + $0x60] sm:$0xff]
      %v2811 = vld [vmem:[%s713 + $0x68] sm:$0xff]
      %v2812 = vld [vmem:[%s713 + $0x70] sm:$0xff]
      %v2813 = vld [vmem:[%s713 + $0x78] sm:$0xff]
      %v2814 = vld [vmem:[%s708] sm:$0x1]
      %v2816 = vlaneseq
      %v2817 = vshrl.u32 %v2816, 7
      %v2818 = vsub.s32 0, %v2817
      %v2819 = vrot.slane %v2814, %v2818
      %v2822 = vsel %vm978, %v2785, 0
      %v2825 = vsel %vm978, %v2786, 0
      %v2828 = vsel %vm978, %v2787, 0
      %v2831 = vsel %vm978, %v2788, 0
      %v2834 = vsel %vm978, %v2789, 0
      %v2837 = vsel %vm978, %v2790, 0
      %v2840 = vsel %vm978, %v2791, 0
      %v2843 = vsel %vm978, %v2792, 0
      %v2846 = vsel %vm978, %v2793, 0
      %2848 = vmatprep.subr.mxu0 0.0
      %2849 = vmatpush1.msra.mxu0 %v2794
      %2850 = vmatprep.subr.mxu0 0.0
      %2851 = vmatpush1.msra.mxu0 %v2795
      %2852 = vmatprep.subr.mxu0 0.0
      %2853 = vmatpush1.msra.mxu0 %v2796
      %2854 = vmatprep.subr.mxu0 0.0
      %2855 = vmatpush1.msra.mxu0 %v2797
      %2856 = vmatprep.subr.mxu0 0.0
      %2857 = vmatpush1.msra.mxu0 0.0
      %2858 = vmatprep.subr.mxu0 0.0
      %2859 = vmatpush1.msra.mxu0 0.0
      %2860 = vmatprep.subr.mxu0 0.0
      %2861 = vmatpush1.msra.mxu0 0.0
      %2862 = vmatprep.subr.mxu0 0.0
      %2863 = vmatpush1.msra.mxu0 0.0
      %2864 = vmatprep.subr.mxu0 0.0
      %2865 = vmatpush1.msra.mxu0 0.0
      %2866 = vmatprep.subr.mxu0 0.0
      %2867 = vmatpush1.msra.mxu0 0.0
      %2868 = vmatprep.subr.mxu0 0.0
      %2869 = vmatpush1.msra.mxu0 0.0
      %2870 = vmatprep.subr.mxu0 0.0
      %2871 = vmatpush1.msra.mxu0 0.0
      %2872 = vmatprep.subr.mxu0 0.0
      %2873 = vmatpush1.msra.mxu0 0.0
      %2874 = vmatprep.subr.mxu0 0.0
      %2875 = vmatpush1.msra.mxu0 0.0
      %2876 = vmatprep.subr.mxu0 0.0
      %2877 = vmatpush1.msra.mxu0 0.0
      %2878 = vmatprep.subr.mxu0 0.0
      %2879 = vmatpush1.msra.mxu0 0.0
      %2880 = vmatprep.subr.mxu0 0.0
      %2881 = vmatpush1.msra.mxu0 0.0
      %2882 = vmatprep.subr.mxu0 0.0
      %2883 = vmatpush1.msra.mxu0 0.0
      %2884 = vmatprep.subr.mxu0 0.0
      %2885 = vmatpush1.msra.mxu0 0.0
      %2886 = vmatprep.subr.mxu0 0.0
      %2887 = vmatpush1.msra.mxu0 0.0
      %2888 = vmatprep.subr.mxu0 0.0
      %2889 = vmatpush1.msra.mxu0 0.0
      %2890 = vmatprep.subr.mxu0 0.0
      %2891 = vmatpush1.msra.mxu0 0.0
      %2892 = vmatprep.subr.mxu0 0.0
      %2893 = vmatpush1.msra.mxu0 0.0
      %2894 = vmatprep.subr.mxu0 0.0
      %2895 = vmatpush1.msra.mxu0 0.0
      %2896 = vmatprep.subr.mxu0 0.0
      %2897 = vmatpush1.msra.mxu0 0.0
      %2898 = vmatprep.subr.mxu0 0.0
      %2899 = vmatpush1.msra.mxu0 0.0
      %2900 = vmatprep.subr.mxu0 0.0
      %2901 = vmatpush1.msra.mxu0 0.0
      %2902 = vmatprep.subr.mxu0 0.0
      %2903 = vmatpush1.msra.mxu0 0.0
      %2904 = vmatprep.subr.mxu0 0.0
      %2905 = vmatpush1.msra.mxu0 0.0
      %2906 = vmatprep.subr.mxu0 0.0
      %2907 = vmatpush1.msra.mxu0 0.0
      %2908 = vmatprep.subr.mxu0 0.0
      %2909 = vmatpush1.msra.mxu0 0.0
      %2910 = vmatprep.subr.mxu0 0.0
      %2911 = vmatpush1.msra.mxu0 0.0
      %2912 = vmatprep.mubr.f32.mxu0 0.0
      %2913 = vmatmul.mubr.f32.gmra.mrb[0].mxu0 %v2822
      %v2914 = vpop.f32.mrb[0].mxu0
      %v2915 = vadd.f32 %v2819, %v2914
      %v2916 = vpop.f32.mrb[0].mxu0
      %2917 = vmatprep.mubr.f32.mxu0 0.0
      %2918 = vmatmul.mubr.f32.gmra.mrb[0].mxu0 %v2825
      %v2919 = vpop.f32.mrb[0].mxu0
      %v2920 = vadd.f32 %v2819, %v2919
      %v2921 = vpop.f32.mrb[0].mxu0
      %2922 = vmatprep.mubr.f32.mxu0 0.0
      %2923 = vmatmul.mubr.f32.gmra.mrb[0].mxu0 %v2828
      %v2924 = vpop.f32.mrb[0].mxu0
      %v2925 = vadd.f32 %v2819, %v2924
      %v2926 = vpop.f32.mrb[0].mxu0
      %2927 = vmatprep.mubr.f32.mxu0 0.0
      %2928 = vmatmul.mubr.f32.gmra.mrb[0].mxu0 %v2831
      %v2929 = vpop.f32.mrb[0].mxu0
      %v2930 = vadd.f32 %v2819, %v2929
      %v2931 = vpop.f32.mrb[0].mxu0
      %2932 = vmatprep.mubr.f32.mxu0 0.0
      %2933 = vmatmul.mubr.f32.gmra.mrb[0].mxu0 %v2834
      %v2934 = vpop.f32.mrb[0].mxu0
      %v2935 = vadd.f32 %v2819, %v2934
      %v2936 = vpop.f32.mrb[0].mxu0
      %2937 = vmatprep.mubr.f32.mxu0 0.0
      %2938 = vmatmul.mubr.f32.gmra.mrb[0].mxu0 %v2837
      %v2939 = vpop.f32.mrb[0].mxu0
      %v2940 = vadd.f32 %v2819, %v2939
      %v2941 = vpop.f32.mrb[0].mxu0
      %2942 = vmatprep.mubr.f32.mxu0 0.0
      %2943 = vmatmul.mubr.f32.gmra.mrb[0].mxu0 %v2840
      %v2944 = vpop.f32.mrb[0].mxu0
      %v2945 = vadd.f32 %v2819, %v2944
      %v2946 = vpop.f32.mrb[0].mxu0
      %2947 = vmatprep.mubr.f32.mxu0 0.0
      %2948 = vmatmul.mubr.f32.gmra.mrb[0].mxu0 %v2843
      %v2949 = vpop.f32.mrb[0].mxu0
      %v2950 = vadd.f32 %v2819, %v2949
      %v2951 = vpop.f32.mrb[0].mxu0
      %2952 = vmatprep.mubr.f32.mxu0 0.0
      %2953 = vmatmul.mubr.f32.gmra.mrb[0].mxu0 %v2846
      %v2954 = vpop.f32.mrb[0].mxu0
      %v2955 = vadd.f32 %v2819, %v2954
      %v2956 = vpop.f32.mrb[0].mxu0
      %2957 = vdwg.mxu0
      %v2958 = vmul.f32 %v2915, 0.5
      %v2959 = vmul.f32 %v2920, 0.5
      %v2960 = vmul.f32 %v2925, 0.5
      %v2961 = vmul.f32 %v2930, 0.5
      %v2962 = vmul.f32 %v2935, 0.5
      %v2963 = vmul.f32 %v2940, 0.5
      %v2964 = vmul.f32 %v2945, 0.5
      %v2965 = vmul.f32 %v2950, 0.5
      %v2966 = vmul.f32 %v2955, 0.5
      %v2967 = vmul.f32 %v2915, 0.70710677
      %v2968 = vmul.f32 %v2920, 0.70710677
      %v2969 = vmul.f32 %v2925, 0.70710677
      %v2970 = vmul.f32 %v2930, 0.70710677
      %v2971 = vmul.f32 %v2935, 0.70710677
      %v2972 = vmul.f32 %v2940, 0.70710677
      %v2973 = vmul.f32 %v2945, 0.70710677
      %v2974 = vmul.f32 %v2950, 0.70710677
      %v2975 = vmul.f32 %v2955, 0.70710677
      %v2976 = verf.f32.pop %v2967
      %v2977 = verf.f32.pop %v2968
      %v2978 = verf.f32.pop %v2969
      %v2979 = verf.f32.pop %v2970
      %v2980 = verf.f32.pop %v2971
      %v2981 = verf.f32.pop %v2972
      %v2982 = verf.f32.pop %v2973
      %v2983 = verf.f32.pop %v2974
      %v2984 = verf.f32.pop %v2975
      %v2985 = vadd.f32 %v2976, 1.0
      %v2986 = vadd.f32 %v2977, 1.0
      %v2987 = vadd.f32 %v2978, 1.0
      %v2988 = vadd.f32 %v2979, 1.0
      %v2989 = vadd.f32 %v2980, 1.0
      %v2990 = vadd.f32 %v2981, 1.0
      %v2991 = vadd.f32 %v2982, 1.0
      %v2992 = vadd.f32 %v2983, 1.0
      %v2993 = vadd.f32 %v2984, 1.0
      %v2994 = vmul.f32 %v2958, %v2985
      %v2995 = vmul.f32 %v2959, %v2986
      %v2996 = vmul.f32 %v2960, %v2987
      %v2997 = vmul.f32 %v2961, %v2988
      %v2998 = vmul.f32 %v2962, %v2989
      %v2999 = vmul.f32 %v2963, %v2990
      %v3000 = vmul.f32 %v2964, %v2991
      %v3001 = vmul.f32 %v2965, %v2992
      %v3002 = vmul.f32 %v2966, %v2993
      %v3003 = vld [vmem:[%s716] sm:$0x1]
      %v3005 = vlaneseq
      %v3006 = vshrl.u32 %v3005, 7
      %v3007 = vsub.s32 0, %v3006
      %v3008 = vrot.slane %v3003, %v3007
      %3010 = vmatprep.subr.mxu0 0.0
      %3011 = vmatpush1.msra.mxu0 %v2798
      %3012 = vmatprep.subr.mxu0 0.0
      %3013 = vmatpush1.msra.mxu0 %v2799
      %3014 = vmatprep.subr.mxu0 0.0
      %3015 = vmatpush1.msra.mxu0 %v2800
      %3016 = vmatprep.subr.mxu0 0.0
      %3017 = vmatpush1.msra.mxu0 %v2801
      %3018 = vmatprep.subr.mxu0 0.0
      %3019 = vmatpush1.msra.mxu0 %v2802
      %3020 = vmatprep.subr.mxu0 0.0
      %3021 = vmatpush1.msra.mxu0 %v2803
      %3022 = vmatprep.subr.mxu0 0.0
      %3023 = vmatpush1.msra.mxu0 %v2804
      %3024 = vmatprep.subr.mxu0 0.0
      %3025 = vmatpush1.msra.mxu0 %v2805
      %3026 = vmatprep.subr.mxu0 0.0
      %3027 = vmatpush1.msra.mxu0 %v2806
      %3028 = vmatprep.subr.mxu0 0.0
      %3029 = vmatpush1.msra.mxu0 %v2807
      %3030 = vmatprep.subr.mxu0 0.0
      %3031 = vmatpush1.msra.mxu0 %v2808
      %3032 = vmatprep.subr.mxu0 0.0
      %3033 = vmatpush1.msra.mxu0 %v2809
      %3034 = vmatprep.subr.mxu0 0.0
      %3035 = vmatpush1.msra.mxu0 %v2810
      %3036 = vmatprep.subr.mxu0 0.0
      %3037 = vmatpush1.msra.mxu0 %v2811
      %3038 = vmatprep.subr.mxu0 0.0
      %3039 = vmatpush1.msra.mxu0 %v2812
      %3040 = vmatprep.subr.mxu0 0.0
      %3041 = vmatpush1.msra.mxu0 %v2813
      %3042 = vmatprep.subr.mxu0 0.0
      %3043 = vmatpush1.msra.mxu0 0.0
      %3044 = vmatprep.subr.mxu0 0.0
      %3045 = vmatpush1.msra.mxu0 0.0
      %3046 = vmatprep.subr.mxu0 0.0
      %3047 = vmatpush1.msra.mxu0 0.0
      %3048 = vmatprep.subr.mxu0 0.0
      %3049 = vmatpush1.msra.mxu0 0.0
      %3050 = vmatprep.subr.mxu0 0.0
      %3051 = vmatpush1.msra.mxu0 0.0
      %3052 = vmatprep.subr.mxu0 0.0
      %3053 = vmatpush1.msra.mxu0 0.0
      %3054 = vmatprep.subr.mxu0 0.0
      %3055 = vmatpush1.msra.mxu0 0.0
      %3056 = vmatprep.subr.mxu0 0.0
      %3057 = vmatpush1.msra.mxu0 0.0
      %3058 = vmatprep.subr.mxu0 0.0
      %3059 = vmatpush1.msra.mxu0 0.0
      %3060 = vmatprep.subr.mxu0 0.0
      %3061 = vmatpush1.msra.mxu0 0.0
      %3062 = vmatprep.subr.mxu0 0.0
      %3063 = vmatpush1.msra.mxu0 0.0
      %3064 = vmatprep.subr.mxu0 0.0
      %3065 = vmatpush1.msra.mxu0 0.0
      %3066 = vmatprep.subr.mxu0 0.0
      %3067 = vmatpush1.msra.mxu0 0.0
      %3068 = vmatprep.subr.mxu0 0.0
      %3069 = vmatpush1.msra.mxu0 0.0
      %3070 = vmatprep.subr.mxu0 0.0
      %3071 = vmatpush1.msra.mxu0 0.0
      %3072 = vmatprep.subr.mxu0 0.0
      %3073 = vmatpush1.msra.mxu0 0.0
      %3074 = vmatprep.mubr.f32.mxu0 0.0
      %3075 = vmatmul.mubr.f32.gmra.mrb[0].mxu0 %v2994
      %v3076 = vpop.f32.mrb[0].mxu0
      %v3077 = vadd.f32 %v3008, %v3076
      %v3078 = vpop.f32.mrb[0].mxu0
      %3079 = vmatprep.mubr.f32.mxu0 0.0
      %3080 = vmatmul.mubr.f32.gmra.mrb[0].mxu0 %v2995
      %v3081 = vpop.f32.mrb[0].mxu0
      %v3082 = vadd.f32 %v3008, %v3081
      %v3083 = vpop.f32.mrb[0].mxu0
      %3084 = vmatprep.mubr.f32.mxu0 0.0
      %3085 = vmatmul.mubr.f32.gmra.mrb[0].mxu0 %v2996
      %v3086 = vpop.f32.mrb[0].mxu0
      %v3087 = vadd.f32 %v3008, %v3086
      %v3088 = vpop.f32.mrb[0].mxu0
      %3089 = vmatprep.mubr.f32.mxu0 0.0
      %3090 = vmatmul.mubr.f32.gmra.mrb[0].mxu0 %v2997
      %v3091 = vpop.f32.mrb[0].mxu0
      %v3092 = vadd.f32 %v3008, %v3091
      %v3093 = vpop.f32.mrb[0].mxu0
      %3094 = vmatprep.mubr.f32.mxu0 0.0
      %3095 = vmatmul.mubr.f32.gmra.mrb[0].mxu0 %v2998
      %v3096 = vpop.f32.mrb[0].mxu0
      %v3097 = vadd.f32 %v3008, %v3096
      %v3098 = vpop.f32.mrb[0].mxu0
      %3099 = vmatprep.mubr.f32.mxu0 0.0
      %3100 = vmatmul.mubr.f32.gmra.mrb[0].mxu0 %v2999
      %v3101 = vpop.f32.mrb[0].mxu0
      %v3102 = vadd.f32 %v3008, %v3101
      %v3103 = vpop.f32.mrb[0].mxu0
      %3104 = vmatprep.mubr.f32.mxu0 0.0
      %3105 = vmatmul.mubr.f32.gmra.mrb[0].mxu0 %v3000
      %v3106 = vpop.f32.mrb[0].mxu0
      %v3107 = vadd.f32 %v3008, %v3106
      %v3108 = vpop.f32.mrb[0].mxu0
      %3109 = vmatprep.mubr.f32.mxu0 0.0
      %3110 = vmatmul.mubr.f32.gmra.mrb[0].mxu0 %v3001
      %v3111 = vpop.f32.mrb[0].mxu0
      %v3112 = vadd.f32 %v3008, %v3111
      %v3113 = vpop.f32.mrb[0].mxu0
      %3114 = vmatprep.mubr.f32.mxu0 0.0
      %3115 = vmatmul.mubr.f32.gmra.mrb[0].mxu0 %v3002
      %v3116 = vpop.f32.mrb[0].mxu0
      %v3117 = vadd.f32 %v3008, %v3116
      %v3118 = vpop.f32.mrb[0].mxu0
      %3119 = vdwg.mxu0
      %v3120 = vadd.f32 %v1939, %v3077
      %v3121 = vadd.f32 %v1940, %v3082
      %v3122 = vadd.f32 %v1941, %v3087
      %v3123 = vadd.f32 %v1942, %v3092
      %v3124 = vadd.f32 %v2626, %v3097
      %v3125 = vadd.f32 %v2622, %v3102
      %v3126 = vadd.f32 %v2623, %v3107
      %v3127 = vadd.f32 %v2624, %v3112
      %v3128 = vadd.f32 %v2625, %v3117
      %3129 = vst.msk [vmem:[#allocation2] sm:$0xff] %vm978, %v3120
      %3130 = vst.msk [vmem:[#allocation2 + $0x8] sm:$0xff] %vm978, %v3121
      %3131 = vst.msk [vmem:[#allocation2 + $0x10] sm:$0xff] %vm978, %v3122
      %3132 = vst.msk [vmem:[#allocation2 + $0x18] sm:$0xff] %vm978, %v3123
      %3133 = vst.msk [vmem:[#allocation2 + $0x20] sm:$0xff] %vm978, %v3124
      %3134 = vst.msk [vmem:[#allocation2 + $0x28] sm:$0xff] %vm978, %v3125
      %3135 = vst.msk [vmem:[#allocation2 + $0x30] sm:$0xff] %vm978, %v3126
      %3136 = vst.msk [vmem:[#allocation2 + $0x38] sm:$0xff] %vm978, %v3127
      %3137 = vst.msk [vmem:[#allocation2 + $0x40] sm:$0x3] %vm1003, %v3128
      %p3138 = scmp.eq.s32.totalorder %s35, 1
      // Predicated region
      $region93: #{vit_forward.1} parent=87 // pred_check
        %p3139 = pneg %p3138
      $region94: #{vit_forward.1} parent=87 // pred_check_branch
        %3141 = sbr.rel (%p3139) target = $region96
      $region95: #{vit_forward.1} parent=87 // pred_region
        %v3142 = vld [vmem:[%s15] sm:$0xff]
        %v3143 = vld [vmem:[%s15 + $0x8] sm:$0xff]
        %v3144 = vld [vmem:[%s15 + $0x10] sm:$0xff]
        %v3145 = vld [vmem:[%s15 + $0x18] sm:$0xff]
        %v3146 = vsel %vm1700, %v3120, %v3124
        %v3147 = vld [vmem:[#allocation3] sm:$0x1]
        %v3149 = vlaneseq
        %v3150 = vshrl.u32 %v3149, 7
        %v3151 = vsub.s32 0, %v3150
        %v3152 = vrot.slane %v3147, %v3151
        %v3155 = vsel %vm978, %v3146, 0
        %3157 = vmatprep.subr.mxu0 0.0
        %3158 = vmatpush1.msra.mxu0 %v3142
        %3159 = vmatprep.subr.mxu0 0.0
        %3160 = vmatpush1.msra.mxu0 %v3143
        %3161 = vmatprep.subr.mxu0 0.0
        %3162 = vmatpush1.msra.mxu0 %v3144
        %3163 = vmatprep.subr.mxu0 0.0
        %3164 = vmatpush1.msra.mxu0 %v3145
        %3165 = vmatprep.subr.mxu0 0.0
        %3166 = vmatpush1.msra.mxu0 0.0
        %3167 = vmatprep.subr.mxu0 0.0
        %3168 = vmatpush1.msra.mxu0 0.0
        %3169 = vmatprep.subr.mxu0 0.0
        %3170 = vmatpush1.msra.mxu0 0.0
        %3171 = vmatprep.subr.mxu0 0.0
        %3172 = vmatpush1.msra.mxu0 0.0
        %3173 = vmatprep.subr.mxu0 0.0
        %3174 = vmatpush1.msra.mxu0 0.0
        %3175 = vmatprep.subr.mxu0 0.0
        %3176 = vmatpush1.msra.mxu0 0.0
        %3177 = vmatprep.subr.mxu0 0.0
        %3178 = vmatpush1.msra.mxu0 0.0
        %3179 = vmatprep.subr.mxu0 0.0
        %3180 = vmatpush1.msra.mxu0 0.0
        %3181 = vmatprep.subr.mxu0 0.0
        %3182 = vmatpush1.msra.mxu0 0.0
        %3183 = vmatprep.subr.mxu0 0.0
        %3184 = vmatpush1.msra.mxu0 0.0
        %3185 = vmatprep.subr.mxu0 0.0
        %3186 = vmatpush1.msra.mxu0 0.0
        %3187 = vmatprep.subr.mxu0 0.0
        %3188 = vmatpush1.msra.mxu0 0.0
        %3189 = vmatprep.subr.mxu0 0.0
        %3190 = vmatpush1.msra.mxu0 0.0
        %3191 = vmatprep.subr.mxu0 0.0
        %3192 = vmatpush1.msra.mxu0 0.0
        %3193 = vmatprep.subr.mxu0 0.0
        %3194 = vmatpush1.msra.mxu0 0.0
        %3195 = vmatprep.subr.mxu0 0.0
        %3196 = vmatpush1.msra.mxu0 0.0
        %3197 = vmatprep.subr.mxu0 0.0
        %3198 = vmatpush1.msra.mxu0 0.0
        %3199 = vmatprep.subr.mxu0 0.0
        %3200 = vmatpush1.msra.mxu0 0.0
        %3201 = vmatprep.subr.mxu0 0.0
        %3202 = vmatpush1.msra.mxu0 0.0
        %3203 = vmatprep.subr.mxu0 0.0
        %3204 = vmatpush1.msra.mxu0 0.0
        %3205 = vmatprep.subr.mxu0 0.0
        %3206 = vmatpush1.msra.mxu0 0.0
        %3207 = vmatprep.subr.mxu0 0.0
        %3208 = vmatpush1.msra.mxu0 0.0
        %3209 = vmatprep.subr.mxu0 0.0
        %3210 = vmatpush1.msra.mxu0 0.0
        %3211 = vmatprep.subr.mxu0 0.0
        %3212 = vmatpush1.msra.mxu0 0.0
        %3213 = vmatprep.subr.mxu0 0.0
        %3214 = vmatpush1.msra.mxu0 0.0
        %3215 = vmatprep.subr.mxu0 0.0
        %3216 = vmatpush1.msra.mxu0 0.0
        %3217 = vmatprep.subr.mxu0 0.0
        %3218 = vmatpush1.msra.mxu0 0.0
        %3219 = vmatprep.subr.mxu0 0.0
        %3220 = vmatpush1.msra.mxu0 0.0
        %3221 = vmatprep.mubr.f32.mxu0 0.0
        %3222 = vmatmul.mubr.f32.gmra.mrb[0].mxu0 %v3155
        %v3223 = vpop.f32.mrb[0].mxu0
        %v3224 = vadd.f32 %v3152, %v3223
        %v3225 = vpop.f32.mrb[0].mxu0
        %3226 = vdwg.mxu0
        %vm3227 = vcmask 0
        %3228 = vst.msk [vmem:[%s720] sm:$0x1] %vm3227, %v3224
        %s3229 = scalar_lea.vmem %s720, 1
        %vm3230 = vcmask 1025
        %3231 = vst.msk [vmem:[%s3229 - $0x1] sm:$0x2] %vm3230, %v3224
      $region96: #{vit_forward.1} parent=87 // pred_fallthru
        _
      %s3232 = smul.u32 2, %s34
      %p3233 = scmp.lt.s32.totalorder %s3232, 1
      %s3234 = scalar_select %p3233, %s3232, 1
      %s3235 = scalar_lea.vmem %s17, %s3234
      // Predicated region
      $region97: #{vit_forward.1} parent=87 // pred_check
        %p3236 = pneg %p472
      $region98: #{vit_forward.1} parent=87 // pred_check_branch
        %3238 = sbr.rel (%p3236) target = $region100
      $region99: #{vit_forward.1} parent=87 // pred_region
        %s3239 = smul.u32 2, %s34
      $region100: #{vit_forward.1} parent=87 // pred_fallthru
        _
      // Predicated region
      $region101: #{vit_forward.1} parent=87 // pred_check
        %p3240 = pneg %p472
      $region102: #{vit_forward.1} parent=87 // pred_check_branch
        %3242 = sbr.rel (%p3240) target = $region104
      $region103: #{vit_forward.1} parent=87 // pred_region
        %s3243 = smul.u32 2, %s34
        %p3244 = scmp.lt.s32.totalorder %s3243, 1
        %s3245 = scalar_select %p3244, %s3243, 1
        %s3246 = scalar_lea.vmem %s17, %s3245
      $region104: #{vit_forward.1} parent=87 // pred_fallthru
        _
    $region88: #{vit_forward.1} parent=5 // pred_fallthru
      _
    %p3247 = scmp.le.s32.totalorder 2, %s25
    // Predicated region
    $region105: #{vit_forward.1} parent=5 // pred_check
      %p3248 = pneg %p3247
    $region106: #{vit_forward.1} parent=5 // pred_check_branch
      %3250 = sbr.rel (%p3248) target = $region108
    $region107: #{vit_forward.1} parent=5 // pred_region
      %s3251 = ssub.s32 %s25, 2
    $region108: #{vit_forward.1} parent=5 // pred_fallthru
      _
  $region6: #{vit_forward.1} parent=0 // loop_footer
    %s29 = sadd.s32 1, %s25
  $region7: #{vit_forward.1} parent=0 // loop_footer_branch
    %24 = sbr.rel target = $region3
  $region8: #{vit_forward.1} parent=0 // loop_exit
    _

</llo_original>
